<compile_context>
chip_gen: v7x
topology: tpu7x:2x2x1
jax: 0.10.0
libtpu: 0.0.40
codegen_flags: <defaults>
</compile_context>

<pallas_src>
import math

import jax
import jax.numpy as jnp
from jax.experimental import pallas as pl
from jax.experimental.pallas import tpu as pltpu


# ----------------------------------------------------------------------------
# Fused decoder kernel: one grid step == one full TransformerDecoderLayer
# applied to the whole batch; x persists in VMEM scratch across layers.
# ----------------------------------------------------------------------------
def _make_decoder_kernel(num_layers, num_heads, head_dim, B, Sq, Skv, eps=1e-6):
    D = num_heads * head_dim
    scale = 1.0 / math.sqrt(head_dim)

    def layernorm2d(v, w, b):
        # v: (N, D); w, b: (1, D) -- stats in f32
        mu = jnp.mean(v, axis=-1, keepdims=True)
        var = jnp.mean(jnp.square(v - mu), axis=-1, keepdims=True)
        return (v - mu) * jax.lax.rsqrt(var + eps) * w + b

    def attention(q2, k2, v2, woT, bo, n_q, n_kv):
        # q2: (B*n_q, D), k2/v2: (B*n_kv, D); returns projected output (B*n_q, D).
        q3 = q2.reshape(B, n_q, D)
        k3 = k2.reshape(B, n_kv, D)
        v3 = v2.reshape(B, n_kv, D)
        out = jnp.broadcast_to(bo, (B * n_q, D))          # start from output bias
        for h in range(num_heads):                        # small static H, unrolled
            lo = h * head_dim
            hi = lo + head_dim
            qh = q3[:, :, lo:hi]                          # (B, n_q, hd)
            kh = k3[:, :, lo:hi]                          # (B, n_kv, hd)
            vh = v3[:, :, lo:hi]
            s = jnp.einsum("bqd,bkd->bqk", qh, kh,
                           preferred_element_type=jnp.float32) * scale
            s = s - jnp.max(s, axis=-1, keepdims=True)
            p = jnp.exp(s)
            p = p * pl.reciprocal(jnp.sum(p, axis=-1, keepdims=True), approx=False)
            oh = jnp.einsum("bqk,bkd->bqd", p, vh,
                            preferred_element_type=jnp.float32)   # (B, n_q, hd)
            # distribute the output projection over heads (no head concat needed)
            out = out + jnp.dot(oh.reshape(B * n_q, head_dim), woT[lo:hi, :],
                                preferred_element_type=jnp.float32)
        return out

    def kernel(q_ref, mem_ref,
               sa_wqkvT_ref, sa_bqkv_ref, sa_woT_ref, sa_bo_ref,
               ca_wqkvT_ref, ca_bqkv_ref, ca_woT_ref, ca_bo_ref,
               w1T_ref, b1_ref, w2T_ref, b2_ref,
               n1w_ref, n1b_ref, n2w_ref, n2b_ref, n3w_ref, n3b_ref,
               out_ref, x_scr):
        l = pl.program_id(0)

        @pl.when(l == 0)
        def _init():
            # x = queries.repeat(B, 1, 1), flattened to (B*Sq, D)
            x_scr[...] = jnp.tile(q_ref[0], (B, 1))

        x = x_scr[...]                                    # (B*Sq, D), f32
        mem2 = mem_ref[...].reshape(B * Skv, D)           # (B*Skv, D)

        # ---------------- self-attention (fused QKV, post-norm) ----------------
        qkv = jnp.dot(x, sa_wqkvT_ref[0],
                      preferred_element_type=jnp.float32) + sa_bqkv_ref[0]
        sa = attention(qkv[:, :D], qkv[:, D:2 * D], qkv[:, 2 * D:],
                       sa_woT_ref[0], sa_bo_ref[0], Sq, Sq)
        x = layernorm2d(x + sa, n1w_ref[0], n1b_ref[0])

        # ---------------- cross-attention (fused KV projection) ----------------
        ca_wqkvT = ca_wqkvT_ref[0]
        ca_bqkv = ca_bqkv_ref[0]
        q = jnp.dot(x, ca_wqkvT[:, :D],
                    preferred_element_type=jnp.float32) + ca_bqkv[:, :D]
        kv = jnp.dot(mem2, ca_wqkvT[:, D:],
                     preferred_element_type=jnp.float32) + ca_bqkv[:, D:]
        ca = attention(q, kv[:, :D], kv[:, D:],
                       ca_woT_ref[0], ca_bo_ref[0], Sq, Skv)
        x = layernorm2d(x + ca, n2w_ref[0], n2b_ref[0])

        # ---------------- feed-forward (ReLU) ----------------
        h = jnp.maximum(
            jnp.dot(x, w1T_ref[0], preferred_element_type=jnp.float32) + b1_ref[0],
            0.0)
        ff = jnp.dot(h, w2T_ref[0], preferred_element_type=jnp.float32) + b2_ref[0]
        x = layernorm2d(x + ff, n3w_ref[0], n3b_ref[0])

        x_scr[...] = x

        @pl.when(l == num_layers - 1)
        def _store():
            out_ref[...] = x.reshape(B, Sq, D).astype(out_ref.dtype)

    return kernel


_STACK_ORDER = ("sa_wqkv_T", "sa_bqkv", "sa_wo_T", "sa_bo",
                "ca_wqkv_T", "ca_bqkv", "ca_wo_T", "ca_bo",
                "w1_T", "b1", "w2_T", "b2",
                "n1w", "n1b", "n2w", "n2b", "n3w", "n3b")


def decoder_forward(inp, queries, layer_params, num_heads):
    """Equivalent of Decoder.forward: x = queries.repeat(B,1,1); for layer: x = layer(x, inp)."""
    assert inp.ndim == 3, f"Expected (batch, seq, hidden) got {inp.shape}"
    B, Skv, D = inp.shape
    _, Sq, _ = queries.shape
    L = len(layer_params)
    assert D % num_heads == 0
    head_dim = D // num_heads

    # Pre-transpose + stack per-layer weights in the wrapper (free layout plumbing).
    def stk(f):
        return jnp.stack([f(p) for p in layer_params])

    stacked = dict(
        sa_wqkv_T=stk(lambda p: p["sa_wqkv"].T),  # (L, D, 3D)
        sa_bqkv=stk(lambda p: p["sa_bqkv"]),      # (L, 1, 3D)
        sa_wo_T=stk(lambda p: p["sa_wo"].T),      # (L, D, D)
        sa_bo=stk(lambda p: p["sa_bo"]),          # (L, 1, D)
        ca_wqkv_T=stk(lambda p: p["ca_wqkv"].T),
        ca_bqkv=stk(lambda p: p["ca_bqkv"]),
        ca_wo_T=stk(lambda p: p["ca_wo"].T),
        ca_bo=stk(lambda p: p["ca_bo"]),
        w1_T=stk(lambda p: p["w1"].T),            # (L, D, M)
        b1=stk(lambda p: p["b1"]),                # (L, 1, M)
        w2_T=stk(lambda p: p["w2"].T),            # (L, M, D)
        b2=stk(lambda p: p["b2"]),                # (L, 1, D)
        n1w=stk(lambda p: p["n1w"]), n1b=stk(lambda p: p["n1b"]),
        n2w=stk(lambda p: p["n2w"]), n2b=stk(lambda p: p["n2b"]),
        n3w=stk(lambda p: p["n3w"]), n3b=stk(lambda p: p["n3b"]),
    )
    weight_arrays = [stacked[k] for k in _STACK_ORDER]

    kernel = _make_decoder_kernel(L, num_heads, head_dim, B, Sq, Skv)

    resident = lambda l: (0, 0, 0)      # constant block index -> fetched into VMEM once
    per_layer = lambda l: (l, 0, 0)     # layer-l weight slice, auto double-buffered

    in_specs = [
        pl.BlockSpec((1, Sq, D), resident),       # queries
        pl.BlockSpec((B, Skv, D), resident),      # encoder memory
    ]
    in_specs += [pl.BlockSpec((1,) + a.shape[1:], per_layer) for a in weight_arrays]

    return pl.pallas_call(
        kernel,
        out_shape=jax.ShapeDtypeStruct((B, Sq, D), inp.dtype),
        grid_spec=pltpu.PrefetchScalarGridSpec(
            num_scalar_prefetch=0,
            grid=(L,),
            in_specs=in_specs,
            out_specs=pl.BlockSpec((B, Sq, D), resident),
            scratch_shapes=[pltpu.VMEM((B * Sq, D), jnp.float32)],
        ),
        compiler_params=pltpu.CompilerParams(
            dimension_semantics=("arbitrary",),   # layers are sequential (x carried in VMEM)
        ),
    )(queries, inp, *weight_arrays)


# ----------------------------------------------------------------------------
# Deterministic parameter init (synthetic; shapes match the PyTorch module)
# ----------------------------------------------------------------------------
def init_decoder_params(key, cam_shape, num_frames, num_layers, num_heads,
                        hidden_dim, mlp_dim):
    Sq = num_frames * cam_shape[0] * cam_shape[1]
    D, M = hidden_dim, mlp_dim
    keys = jax.random.split(key, 1 + num_layers)
    queries = 0.02 * jax.random.normal(keys[0], (1, Sq, D), jnp.float32)

    layers = []
    for i in range(num_layers):
        lk = jax.random.split(keys[1 + i], 10)
        n = lambda k, shape: 0.05 * jax.random.normal(k, shape, jnp.float32)
        layers.append(dict(
            sa_wqkv=n(lk[0], (3 * D, D)), sa_bqkv=n(lk[1], (1, 3 * D)),
            sa_wo=n(lk[2], (D, D)),       sa_bo=n(lk[3], (1, D)),
            ca_wqkv=n(lk[4], (3 * D, D)), ca_bqkv=n(lk[5], (1, 3 * D)),
            ca_wo=n(lk[6], (D, D)),       ca_bo=n(lk[7], (1, D)),
            w1=n(lk[8], (M, D)),          b1=0.01 * jnp.ones((1, M), jnp.float32),
            w2=n(lk[9], (D, M)),          b2=0.01 * jnp.ones((1, D), jnp.float32),
            n1w=jnp.ones((1, D), jnp.float32), n1b=jnp.zeros((1, D), jnp.float32),
            n2w=jnp.ones((1, D), jnp.float32), n2b=jnp.zeros((1, D), jnp.float32),
            n3w=jnp.ones((1, D), jnp.float32), n3b=jnp.zeros((1, D), jnp.float32),
        ))
    return queries, layers


# ----------------------------------------------------------------------------
# Pure-JAX reference (mirrors nn.TransformerDecoderLayer, eval mode)
# ----------------------------------------------------------------------------
def _ref_mha(q_in, kv_in, wqkv, bqkv, wo, bo, num_heads):
    D = q_in.shape[-1]
    hd = D // num_heads
    q = q_in @ wqkv[:D].T + bqkv[0, :D]
    k = kv_in @ wqkv[D:2 * D].T + bqkv[0, D:2 * D]
    v = kv_in @ wqkv[2 * D:].T + bqkv[0, 2 * D:]
    split = lambda t: t.reshape(t.shape[0], t.shape[1], num_heads, hd).transpose(0, 2, 1, 3)
    qh, kh, vh = split(q), split(k), split(v)
    s = jnp.einsum("bhqd,bhkd->bhqk", qh, kh) / math.sqrt(hd)
    p = jax.nn.softmax(s, axis=-1)
    o = jnp.einsum("bhqk,bhkd->bhqd", p, vh).transpose(0, 2, 1, 3).reshape(q_in.shape)
    return o @ wo.T + bo[0]


def _ref_ln(x, w, b, eps=1e-6):
    mu = x.mean(-1, keepdims=True)
    var = ((x - mu) ** 2).mean(-1, keepdims=True)
    return (x - mu) / jnp.sqrt(var + eps) * w[0] + b[0]


def ref_forward(inp, queries, layers, num_heads):
    B = inp.shape[0]
    x = jnp.broadcast_to(queries, (B,) + queries.shape[1:])
    for p in layers:
        sa = _ref_mha(x, x, p["sa_wqkv"], p["sa_bqkv"], p["sa_wo"], p["sa_bo"], num_heads)
        x = _ref_ln(x + sa, p["n1w"], p["n1b"])
        ca = _ref_mha(x, inp, p["ca_wqkv"], p["ca_bqkv"], p["ca_wo"], p["ca_bo"], num_heads)
        x = _ref_ln(x + ca, p["n2w"], p["n2b"])
        h = jax.nn.relu(x @ p["w1"].T + p["b1"][0])
        ff = h @ p["w2"].T + p["b2"][0]
        x = _ref_ln(x + ff, p["n3w"], p["n3b"])
    return x


# ----------------------------------------------------------------------------
if __name__ == "__main__":
    cam_shape = (2, 2)
    num_frames = 2
    num_layers = 2
    num_heads = 4
    hidden_dim = 32
    mlp_dim = 64
    attention_dropout = 0.0  # dropout == identity in eval / inference
    B, S_in = 2, 8

    key = jax.random.PRNGKey(0)
    k_params, k_in = jax.random.split(key)
    queries, layers = init_decoder_params(
        k_params, cam_shape, num_frames, num_layers, num_heads, hidden_dim, mlp_dim)
    inp = jax.random.normal(k_in, (B, S_in, hidden_dim), jnp.float32)

    out = decoder_forward(inp, queries, layers, num_heads)
    out = jax.block_until_ready(out)

    Sq = num_frames * cam_shape[0] * cam_shape[1]
    assert out.shape == (B, Sq, hidden_dim), out.shape

    ref = ref_forward(inp, queries, layers, num_heads)
    assert jnp.allclose(out, ref, atol=1e-4, rtol=1e-4), float(jnp.max(jnp.abs(out - ref)))

    print("KERNEL_OK")
</pallas_src>

<mosaic_0001>
module attributes {stable_mosaic.version = 11 : i64} {
  func.func @kernel(%arg0: i32, %arg1: memref<1x8x32xf32, #tpu.memory_space<vmem>>, %arg2: memref<2x8x32xf32, #tpu.memory_space<vmem>>, %arg3: memref<1x32x96xf32, #tpu.memory_space<vmem>>, %arg4: memref<1x1x96xf32, #tpu.memory_space<vmem>>, %arg5: memref<1x32x32xf32, #tpu.memory_space<vmem>>, %arg6: memref<1x1x32xf32, #tpu.memory_space<vmem>>, %arg7: memref<1x32x96xf32, #tpu.memory_space<vmem>>, %arg8: memref<1x1x96xf32, #tpu.memory_space<vmem>>, %arg9: memref<1x32x32xf32, #tpu.memory_space<vmem>>, %arg10: memref<1x1x32xf32, #tpu.memory_space<vmem>>, %arg11: memref<1x32x64xf32, #tpu.memory_space<vmem>>, %arg12: memref<1x1x64xf32, #tpu.memory_space<vmem>>, %arg13: memref<1x64x32xf32, #tpu.memory_space<vmem>>, %arg14: memref<1x1x32xf32, #tpu.memory_space<vmem>>, %arg15: memref<1x1x32xf32, #tpu.memory_space<vmem>>, %arg16: memref<1x1x32xf32, #tpu.memory_space<vmem>>, %arg17: memref<1x1x32xf32, #tpu.memory_space<vmem>>, %arg18: memref<1x1x32xf32, #tpu.memory_space<vmem>>, %arg19: memref<1x1x32xf32, #tpu.memory_space<vmem>>, %arg20: memref<1x1x32xf32, #tpu.memory_space<vmem>>, %arg21: memref<2x8x32xf32, #tpu.memory_space<vmem>>, %arg22: memref<16x32xf32, #tpu.memory_space<vmem>>) attributes {dimension_semantics = [#tpu.dimension_semantics<arbitrary>], iteration_bounds = array<i64: 2>, scalar_prefetch = 0 : i64, scratch_operands = 1 : i64, tpu.core_type = #tpu.core_type<tc>, window_params = [{pipeline_mode = #tpu.pipeline_mode<synchronous>, transform_indices = @transform_0, window_bounds = array<i64: 1, 8, 32>}, {pipeline_mode = #tpu.pipeline_mode<synchronous>, transform_indices = @transform_1, window_bounds = array<i64: 2, 8, 32>}, {transform_indices = @transform_2, window_bounds = array<i64: 1, 32, 96>}, {transform_indices = @transform_3, window_bounds = array<i64: 1, 1, 96>}, {transform_indices = @transform_4, window_bounds = array<i64: 1, 32, 32>}, {transform_indices = @transform_5, window_bounds = array<i64: 1, 1, 32>}, {transform_indices = @transform_6, window_bounds = array<i64: 1, 32, 96>}, {transform_indices = @transform_7, window_bounds = array<i64: 1, 1, 96>}, {transform_indices = @transform_8, window_bounds = array<i64: 1, 32, 32>}, {transform_indices = @transform_9, window_bounds = array<i64: 1, 1, 32>}, {transform_indices = @transform_10, window_bounds = array<i64: 1, 32, 64>}, {transform_indices = @transform_11, window_bounds = array<i64: 1, 1, 64>}, {transform_indices = @transform_12, window_bounds = array<i64: 1, 64, 32>}, {transform_indices = @transform_13, window_bounds = array<i64: 1, 1, 32>}, {transform_indices = @transform_14, window_bounds = array<i64: 1, 1, 32>}, {transform_indices = @transform_15, window_bounds = array<i64: 1, 1, 32>}, {transform_indices = @transform_16, window_bounds = array<i64: 1, 1, 32>}, {transform_indices = @transform_17, window_bounds = array<i64: 1, 1, 32>}, {transform_indices = @transform_18, window_bounds = array<i64: 1, 1, 32>}, {transform_indices = @transform_19, window_bounds = array<i64: 1, 1, 32>}, {pipeline_mode = #tpu.pipeline_mode<synchronous>, transform_indices = @transform_20, window_bounds = array<i64: 2, 8, 32>}]} {
    %c0_i32 = arith.constant 0 : i32
    %0 = arith.cmpi eq, %arg0, %c0_i32 : i32
    %1 = arith.extui %0 : i1 to i32
    %c0_i32_0 = arith.constant 0 : i32
    %2 = arith.cmpi ne, %1, %c0_i32_0 : i32
    scf.if %2 {
      %c0_130 = arith.constant 0 : index
      %c0_131 = arith.constant 0 : index
      %c0_132 = arith.constant 0 : index
      %319 = vector.load %arg1[%c0_130, %c0_131, %c0_132] : memref<1x8x32xf32, #tpu.memory_space<vmem>>, vector<1x8x32xf32>
      %320 = vector.shape_cast %319 : vector<1x8x32xf32> to vector<8x32xf32>
      %321 = tpu.concatenate %320, %320 in 0 : vector<8x32xf32>, vector<8x32xf32> -> vector<16x32xf32>
      %c0_133 = arith.constant 0 : index
      %c0_134 = arith.constant 0 : index
      %322 = vector.load %arg22[%c0_133, %c0_134] : memref<16x32xf32, #tpu.memory_space<vmem>>, vector<16x32xf32>
      tpu.vector_store %arg22[%c0_133, %c0_134], %321 {strides = array<i32>} : memref<16x32xf32, #tpu.memory_space<vmem>>, vector<16x32xf32>,
    } else {
    }
    %c0 = arith.constant 0 : index
    %c0_1 = arith.constant 0 : index
    %3 = vector.load %arg22[%c0, %c0_1] : memref<16x32xf32, #tpu.memory_space<vmem>>, vector<16x32xf32>
    %c0_2 = arith.constant 0 : index
    %c0_3 = arith.constant 0 : index
    %c0_4 = arith.constant 0 : index
    %4 = vector.load %arg2[%c0_2, %c0_3, %c0_4] : memref<2x8x32xf32, #tpu.memory_space<vmem>>, vector<2x8x32xf32>
    %5 = vector.shape_cast %4 : vector<2x8x32xf32> to vector<16x32xf32>
    %c0_5 = arith.constant 0 : index
    %c0_6 = arith.constant 0 : index
    %c0_7 = arith.constant 0 : index
    %6 = vector.load %arg3[%c0_5, %c0_6, %c0_7] : memref<1x32x96xf32, #tpu.memory_space<vmem>>, vector<1x32x96xf32>
    %7 = vector.shape_cast %6 : vector<1x32x96xf32> to vector<32x96xf32>
    %cst = arith.constant dense<0.000000e+00> : vector<16x96xf32>
    %8 = tpu.matmul %3, %7, %cst {dimension_numbers = #tpu.dot_dimension_numbers<[1], [0], [0], [1], [0, 0, 1, 1], [], []>} : vector<16x32xf32>, vector<32x96xf32>, vector<16x96xf32> -> vector<16x96xf32>
    %c0_8 = arith.constant 0 : index
    %c0_9 = arith.constant 0 : index
    %c0_10 = arith.constant 0 : index
    %9 = vector.load %arg4[%c0_8, %c0_9, %c0_10] : memref<1x1x96xf32, #tpu.memory_space<vmem>>, vector<1x1x96xf32>
    %10 = vector.shape_cast %9 : vector<1x1x96xf32> to vector<1x96xf32>
    %11 = vector.broadcast %10 : vector<1x96xf32> to vector<16x96xf32>
    %12 = arith.addf %8, %11 : vector<16x96xf32>
    %13 = vector.extract_strided_slice %12 {offsets = [0, 0], sizes = [16, 32], strides = [1, 1]} : vector<16x96xf32> to vector<16x32xf32>
    %14 = vector.extract_strided_slice %12 {offsets = [0, 32], sizes = [16, 32], strides = [1, 1]} : vector<16x96xf32> to vector<16x32xf32>
    %15 = vector.extract_strided_slice %12 {offsets = [0, 64], sizes = [16, 32], strides = [1, 1]} : vector<16x96xf32> to vector<16x32xf32>
    %c0_11 = arith.constant 0 : index
    %c0_12 = arith.constant 0 : index
    %c0_13 = arith.constant 0 : index
    %16 = vector.load %arg5[%c0_11, %c0_12, %c0_13] : memref<1x32x32xf32, #tpu.memory_space<vmem>>, vector<1x32x32xf32>
    %17 = vector.shape_cast %16 : vector<1x32x32xf32> to vector<32x32xf32>
    %c0_14 = arith.constant 0 : index
    %c0_15 = arith.constant 0 : index
    %c0_16 = arith.constant 0 : index
    %18 = vector.load %arg6[%c0_14, %c0_15, %c0_16] : memref<1x1x32xf32, #tpu.memory_space<vmem>>, vector<1x1x32xf32>
    %19 = vector.shape_cast %18 : vector<1x1x32xf32> to vector<1x32xf32>
    %20 = vector.shape_cast %13 : vector<16x32xf32> to vector<2x8x32xf32>
    %21 = vector.shape_cast %14 : vector<16x32xf32> to vector<2x8x32xf32>
    %22 = vector.shape_cast %15 : vector<16x32xf32> to vector<2x8x32xf32>
    %23 = vector.shape_cast %19 : vector<1x32xf32> to vector<1x32xf32>
    %24 = vector.broadcast %23 : vector<1x32xf32> to vector<16x32xf32>
    %25 = vector.extract_strided_slice %20 {offsets = [0, 0, 0], sizes = [2, 8, 8], strides = [1, 1, 1]} : vector<2x8x32xf32> to vector<2x8x8xf32>
    %26 = vector.extract_strided_slice %21 {offsets = [0, 0, 0], sizes = [2, 8, 8], strides = [1, 1, 1]} : vector<2x8x32xf32> to vector<2x8x8xf32>
    %27 = vector.extract_strided_slice %22 {offsets = [0, 0, 0], sizes = [2, 8, 8], strides = [1, 1, 1]} : vector<2x8x32xf32> to vector<2x8x8xf32>
    "tpu.trace_start"() <{level = 10 : i32, message = "bqd,bkd->bqk"}> : () -> ()
    %cst_17 = arith.constant dense<0.000000e+00> : vector<2x8x8xf32>
    %28 = tpu.matmul %25, %26, %cst_17 {dimension_numbers = #tpu.dot_dimension_numbers<[2], [2], [1], [1], [0, 0, 0, 1, 1, 1], [0], [0]>} : vector<2x8x8xf32>, vector<2x8x8xf32>, vector<2x8x8xf32> -> vector<2x8x8xf32>
    "tpu.trace_stop"() : () -> ()
    %cst_18 = arith.constant 0.353553385 : f32
    %29 = vector.broadcast %cst_18 : f32 to vector<2x8x8xf32>
    %30 = arith.mulf %28, %29 : vector<2x8x8xf32>
    %cst_19 = arith.constant dense<0xFF800000> : vector<2x8xf32>
    %31 = vector.multi_reduction <maximumf>, %30, %cst_19 [2] : vector<2x8x8xf32> to vector<2x8xf32>
    %32 = vector.shape_cast %31 : vector<2x8xf32> to vector<2x8x1xf32>
    %33 = vector.broadcast %32 : vector<2x8x1xf32> to vector<2x8x8xf32>
    %34 = arith.subf %30, %33 : vector<2x8x8xf32>
    %35 = math.exp %34 : vector<2x8x8xf32>
    %cst_20 = arith.constant dense<0.000000e+00> : vector<2x8xf32>
    %36 = vector.multi_reduction <add>, %35, %cst_20 [2] : vector<2x8x8xf32> to vector<2x8xf32>
    %37 = vector.shape_cast %36 : vector<2x8xf32> to vector<2x8x1xf32>
    %38 = tpu.reciprocal %37 : vector<2x8x1xf32> -> vector<2x8x1xf32>
    %39 = vector.broadcast %38 : vector<2x8x1xf32> to vector<2x8x8xf32>
    %40 = arith.mulf %35, %39 : vector<2x8x8xf32>
    "tpu.trace_start"() <{level = 10 : i32, message = "bqk,bkd->bqd"}> : () -> ()
    %cst_21 = arith.constant dense<0.000000e+00> : vector<2x8x8xf32>
    %41 = tpu.matmul %40, %27, %cst_21 {dimension_numbers = #tpu.dot_dimension_numbers<[2], [1], [1], [2], [0, 0, 0, 1, 1, 2], [0], [0]>} : vector<2x8x8xf32>, vector<2x8x8xf32>, vector<2x8x8xf32> -> vector<2x8x8xf32>
    "tpu.trace_stop"() : () -> ()
    %42 = vector.shape_cast %41 : vector<2x8x8xf32> to vector<16x8xf32>
    %43 = vector.extract_strided_slice %17 {offsets = [0, 0], sizes = [8, 32], strides = [1, 1]} : vector<32x32xf32> to vector<8x32xf32>
    %cst_22 = arith.constant dense<0.000000e+00> : vector<16x32xf32>
    %44 = tpu.matmul %42, %43, %cst_22 {dimension_numbers = #tpu.dot_dimension_numbers<[1], [0], [0], [1], [0, 0, 1, 1], [], []>} : vector<16x8xf32>, vector<8x32xf32>, vector<16x32xf32> -> vector<16x32xf32>
    %45 = arith.addf %24, %44 : vector<16x32xf32>
    %46 = vector.extract_strided_slice %20 {offsets = [0, 0, 8], sizes = [2, 8, 8], strides = [1, 1, 1]} : vector<2x8x32xf32> to vector<2x8x8xf32>
    %47 = vector.extract_strided_slice %21 {offsets = [0, 0, 8], sizes = [2, 8, 8], strides = [1, 1, 1]} : vector<2x8x32xf32> to vector<2x8x8xf32>
    %48 = vector.extract_strided_slice %22 {offsets = [0, 0, 8], sizes = [2, 8, 8], strides = [1, 1, 1]} : vector<2x8x32xf32> to vector<2x8x8xf32>
    "tpu.trace_start"() <{level = 10 : i32, message = "bqd,bkd->bqk"}> : () -> ()
    %cst_23 = arith.constant dense<0.000000e+00> : vector<2x8x8xf32>
    %49 = tpu.matmul %46, %47, %cst_23 {dimension_numbers = #tpu.dot_dimension_numbers<[2], [2], [1], [1], [0, 0, 0, 1, 1, 1], [0], [0]>} : vector<2x8x8xf32>, vector<2x8x8xf32>, vector<2x8x8xf32> -> vector<2x8x8xf32>
    "tpu.trace_stop"() : () -> ()
    %cst_24 = arith.constant 0.353553385 : f32
    %50 = vector.broadcast %cst_24 : f32 to vector<2x8x8xf32>
    %51 = arith.mulf %49, %50 : vector<2x8x8xf32>
    %cst_25 = arith.constant dense<0xFF800000> : vector<2x8xf32>
    %52 = vector.multi_reduction <maximumf>, %51, %cst_25 [2] : vector<2x8x8xf32> to vector<2x8xf32>
    %53 = vector.shape_cast %52 : vector<2x8xf32> to vector<2x8x1xf32>
    %54 = vector.broadcast %53 : vector<2x8x1xf32> to vector<2x8x8xf32>
    %55 = arith.subf %51, %54 : vector<2x8x8xf32>
    %56 = math.exp %55 : vector<2x8x8xf32>
    %cst_26 = arith.constant dense<0.000000e+00> : vector<2x8xf32>
    %57 = vector.multi_reduction <add>, %56, %cst_26 [2] : vector<2x8x8xf32> to vector<2x8xf32>
    %58 = vector.shape_cast %57 : vector<2x8xf32> to vector<2x8x1xf32>
    %59 = tpu.reciprocal %58 : vector<2x8x1xf32> -> vector<2x8x1xf32>
    %60 = vector.broadcast %59 : vector<2x8x1xf32> to vector<2x8x8xf32>
    %61 = arith.mulf %56, %60 : vector<2x8x8xf32>
    "tpu.trace_start"() <{level = 10 : i32, message = "bqk,bkd->bqd"}> : () -> ()
    %cst_27 = arith.constant dense<0.000000e+00> : vector<2x8x8xf32>
    %62 = tpu.matmul %61, %48, %cst_27 {dimension_numbers = #tpu.dot_dimension_numbers<[2], [1], [1], [2], [0, 0, 0, 1, 1, 2], [0], [0]>} : vector<2x8x8xf32>, vector<2x8x8xf32>, vector<2x8x8xf32> -> vector<2x8x8xf32>
    "tpu.trace_stop"() : () -> ()
    %63 = vector.shape_cast %62 : vector<2x8x8xf32> to vector<16x8xf32>
    %64 = vector.extract_strided_slice %17 {offsets = [8, 0], sizes = [8, 32], strides = [1, 1]} : vector<32x32xf32> to vector<8x32xf32>
    %cst_28 = arith.constant dense<0.000000e+00> : vector<16x32xf32>
    %65 = tpu.matmul %63, %64, %cst_28 {dimension_numbers = #tpu.dot_dimension_numbers<[1], [0], [0], [1], [0, 0, 1, 1], [], []>} : vector<16x8xf32>, vector<8x32xf32>, vector<16x32xf32> -> vector<16x32xf32>
    %66 = arith.addf %45, %65 : vector<16x32xf32>
    %67 = vector.extract_strided_slice %20 {offsets = [0, 0, 16], sizes = [2, 8, 8], strides = [1, 1, 1]} : vector<2x8x32xf32> to vector<2x8x8xf32>
    %68 = vector.extract_strided_slice %21 {offsets = [0, 0, 16], sizes = [2, 8, 8], strides = [1, 1, 1]} : vector<2x8x32xf32> to vector<2x8x8xf32>
    %69 = vector.extract_strided_slice %22 {offsets = [0, 0, 16], sizes = [2, 8, 8], strides = [1, 1, 1]} : vector<2x8x32xf32> to vector<2x8x8xf32>
    "tpu.trace_start"() <{level = 10 : i32, message = "bqd,bkd->bqk"}> : () -> ()
    %cst_29 = arith.constant dense<0.000000e+00> : vector<2x8x8xf32>
    %70 = tpu.matmul %67, %68, %cst_29 {dimension_numbers = #tpu.dot_dimension_numbers<[2], [2], [1], [1], [0, 0, 0, 1, 1, 1], [0], [0]>} : vector<2x8x8xf32>, vector<2x8x8xf32>, vector<2x8x8xf32> -> vector<2x8x8xf32>
    "tpu.trace_stop"() : () -> ()
    %cst_30 = arith.constant 0.353553385 : f32
    %71 = vector.broadcast %cst_30 : f32 to vector<2x8x8xf32>
    %72 = arith.mulf %70, %71 : vector<2x8x8xf32>
    %cst_31 = arith.constant dense<0xFF800000> : vector<2x8xf32>
    %73 = vector.multi_reduction <maximumf>, %72, %cst_31 [2] : vector<2x8x8xf32> to vector<2x8xf32>
    %74 = vector.shape_cast %73 : vector<2x8xf32> to vector<2x8x1xf32>
    %75 = vector.broadcast %74 : vector<2x8x1xf32> to vector<2x8x8xf32>
    %76 = arith.subf %72, %75 : vector<2x8x8xf32>
    %77 = math.exp %76 : vector<2x8x8xf32>
    %cst_32 = arith.constant dense<0.000000e+00> : vector<2x8xf32>
    %78 = vector.multi_reduction <add>, %77, %cst_32 [2] : vector<2x8x8xf32> to vector<2x8xf32>
    %79 = vector.shape_cast %78 : vector<2x8xf32> to vector<2x8x1xf32>
    %80 = tpu.reciprocal %79 : vector<2x8x1xf32> -> vector<2x8x1xf32>
    %81 = vector.broadcast %80 : vector<2x8x1xf32> to vector<2x8x8xf32>
    %82 = arith.mulf %77, %81 : vector<2x8x8xf32>
    "tpu.trace_start"() <{level = 10 : i32, message = "bqk,bkd->bqd"}> : () -> ()
    %cst_33 = arith.constant dense<0.000000e+00> : vector<2x8x8xf32>
    %83 = tpu.matmul %82, %69, %cst_33 {dimension_numbers = #tpu.dot_dimension_numbers<[2], [1], [1], [2], [0, 0, 0, 1, 1, 2], [0], [0]>} : vector<2x8x8xf32>, vector<2x8x8xf32>, vector<2x8x8xf32> -> vector<2x8x8xf32>
    "tpu.trace_stop"() : () -> ()
    %84 = vector.shape_cast %83 : vector<2x8x8xf32> to vector<16x8xf32>
    %85 = vector.extract_strided_slice %17 {offsets = [16, 0], sizes = [8, 32], strides = [1, 1]} : vector<32x32xf32> to vector<8x32xf32>
    %cst_34 = arith.constant dense<0.000000e+00> : vector<16x32xf32>
    %86 = tpu.matmul %84, %85, %cst_34 {dimension_numbers = #tpu.dot_dimension_numbers<[1], [0], [0], [1], [0, 0, 1, 1], [], []>} : vector<16x8xf32>, vector<8x32xf32>, vector<16x32xf32> -> vector<16x32xf32>
    %87 = arith.addf %66, %86 : vector<16x32xf32>
    %88 = vector.extract_strided_slice %20 {offsets = [0, 0, 24], sizes = [2, 8, 8], strides = [1, 1, 1]} : vector<2x8x32xf32> to vector<2x8x8xf32>
    %89 = vector.extract_strided_slice %21 {offsets = [0, 0, 24], sizes = [2, 8, 8], strides = [1, 1, 1]} : vector<2x8x32xf32> to vector<2x8x8xf32>
    %90 = vector.extract_strided_slice %22 {offsets = [0, 0, 24], sizes = [2, 8, 8], strides = [1, 1, 1]} : vector<2x8x32xf32> to vector<2x8x8xf32>
    "tpu.trace_start"() <{level = 10 : i32, message = "bqd,bkd->bqk"}> : () -> ()
    %cst_35 = arith.constant dense<0.000000e+00> : vector<2x8x8xf32>
    %91 = tpu.matmul %88, %89, %cst_35 {dimension_numbers = #tpu.dot_dimension_numbers<[2], [2], [1], [1], [0, 0, 0, 1, 1, 1], [0], [0]>} : vector<2x8x8xf32>, vector<2x8x8xf32>, vector<2x8x8xf32> -> vector<2x8x8xf32>
    "tpu.trace_stop"() : () -> ()
    %cst_36 = arith.constant 0.353553385 : f32
    %92 = vector.broadcast %cst_36 : f32 to vector<2x8x8xf32>
    %93 = arith.mulf %91, %92 : vector<2x8x8xf32>
    %cst_37 = arith.constant dense<0xFF800000> : vector<2x8xf32>
    %94 = vector.multi_reduction <maximumf>, %93, %cst_37 [2] : vector<2x8x8xf32> to vector<2x8xf32>
    %95 = vector.shape_cast %94 : vector<2x8xf32> to vector<2x8x1xf32>
    %96 = vector.broadcast %95 : vector<2x8x1xf32> to vector<2x8x8xf32>
    %97 = arith.subf %93, %96 : vector<2x8x8xf32>
    %98 = math.exp %97 : vector<2x8x8xf32>
    %cst_38 = arith.constant dense<0.000000e+00> : vector<2x8xf32>
    %99 = vector.multi_reduction <add>, %98, %cst_38 [2] : vector<2x8x8xf32> to vector<2x8xf32>
    %100 = vector.shape_cast %99 : vector<2x8xf32> to vector<2x8x1xf32>
    %101 = tpu.reciprocal %100 : vector<2x8x1xf32> -> vector<2x8x1xf32>
    %102 = vector.broadcast %101 : vector<2x8x1xf32> to vector<2x8x8xf32>
    %103 = arith.mulf %98, %102 : vector<2x8x8xf32>
    "tpu.trace_start"() <{level = 10 : i32, message = "bqk,bkd->bqd"}> : () -> ()
    %cst_39 = arith.constant dense<0.000000e+00> : vector<2x8x8xf32>
    %104 = tpu.matmul %103, %90, %cst_39 {dimension_numbers = #tpu.dot_dimension_numbers<[2], [1], [1], [2], [0, 0, 0, 1, 1, 2], [0], [0]>} : vector<2x8x8xf32>, vector<2x8x8xf32>, vector<2x8x8xf32> -> vector<2x8x8xf32>
    "tpu.trace_stop"() : () -> ()
    %105 = vector.shape_cast %104 : vector<2x8x8xf32> to vector<16x8xf32>
    %106 = vector.extract_strided_slice %17 {offsets = [24, 0], sizes = [8, 32], strides = [1, 1]} : vector<32x32xf32> to vector<8x32xf32>
    %cst_40 = arith.constant dense<0.000000e+00> : vector<16x32xf32>
    %107 = tpu.matmul %105, %106, %cst_40 {dimension_numbers = #tpu.dot_dimension_numbers<[1], [0], [0], [1], [0, 0, 1, 1], [], []>} : vector<16x8xf32>, vector<8x32xf32>, vector<16x32xf32> -> vector<16x32xf32>
    %108 = arith.addf %87, %107 : vector<16x32xf32>
    %109 = arith.addf %3, %108 : vector<16x32xf32>
    %c0_41 = arith.constant 0 : index
    %c0_42 = arith.constant 0 : index
    %c0_43 = arith.constant 0 : index
    %110 = vector.load %arg15[%c0_41, %c0_42, %c0_43] : memref<1x1x32xf32, #tpu.memory_space<vmem>>, vector<1x1x32xf32>
    %111 = vector.shape_cast %110 : vector<1x1x32xf32> to vector<1x32xf32>
    %c0_44 = arith.constant 0 : index
    %c0_45 = arith.constant 0 : index
    %c0_46 = arith.constant 0 : index
    %112 = vector.load %arg16[%c0_44, %c0_45, %c0_46] : memref<1x1x32xf32, #tpu.memory_space<vmem>>, vector<1x1x32xf32>
    %113 = vector.shape_cast %112 : vector<1x1x32xf32> to vector<1x32xf32>
    %cst_47 = arith.constant dense<0.000000e+00> : vector<16xf32>
    %114 = vector.multi_reduction <add>, %109, %cst_47 [1] : vector<16x32xf32> to vector<16xf32>
    %115 = vector.shape_cast %114 : vector<16xf32> to vector<16x1xf32>
    %cst_48 = arith.constant 3.200000e+01 : f32
    %116 = vector.broadcast %cst_48 : f32 to vector<16x1xf32>
    %117 = arith.divf %115, %116 : vector<16x1xf32>
    %118 = vector.broadcast %117 : vector<16x1xf32> to vector<16x32xf32>
    %119 = arith.subf %109, %118 : vector<16x32xf32>
    %120 = arith.mulf %119, %119 : vector<16x32xf32>
    %cst_49 = arith.constant dense<0.000000e+00> : vector<16xf32>
    %121 = vector.multi_reduction <add>, %120, %cst_49 [1] : vector<16x32xf32> to vector<16xf32>
    %122 = vector.shape_cast %121 : vector<16xf32> to vector<16x1xf32>
    %cst_50 = arith.constant 3.200000e+01 : f32
    %123 = vector.broadcast %cst_50 : f32 to vector<16x1xf32>
    %124 = arith.divf %122, %123 : vector<16x1xf32>
    %125 = vector.broadcast %117 : vector<16x1xf32> to vector<16x32xf32>
    %126 = arith.subf %109, %125 : vector<16x32xf32>
    %cst_51 = arith.constant 9.99999997E-7 : f32
    %127 = vector.broadcast %cst_51 : f32 to vector<16x1xf32>
    %128 = arith.addf %124, %127 : vector<16x1xf32>
    %129 = math.rsqrt %128 : vector<16x1xf32>
    %130 = vector.broadcast %129 : vector<16x1xf32> to vector<16x32xf32>
    %131 = arith.mulf %126, %130 : vector<16x32xf32>
    %132 = vector.broadcast %111 : vector<1x32xf32> to vector<16x32xf32>
    %133 = arith.mulf %131, %132 : vector<16x32xf32>
    %134 = vector.broadcast %113 : vector<1x32xf32> to vector<16x32xf32>
    %135 = arith.addf %133, %134 : vector<16x32xf32>
    %c0_52 = arith.constant 0 : index
    %c0_53 = arith.constant 0 : index
    %c0_54 = arith.constant 0 : index
    %136 = vector.load %arg7[%c0_52, %c0_53, %c0_54] : memref<1x32x96xf32, #tpu.memory_space<vmem>>, vector<1x32x96xf32>
    %137 = vector.shape_cast %136 : vector<1x32x96xf32> to vector<32x96xf32>
    %c0_55 = arith.constant 0 : index
    %c0_56 = arith.constant 0 : index
    %c0_57 = arith.constant 0 : index
    %138 = vector.load %arg8[%c0_55, %c0_56, %c0_57] : memref<1x1x96xf32, #tpu.memory_space<vmem>>, vector<1x1x96xf32>
    %139 = vector.shape_cast %138 : vector<1x1x96xf32> to vector<1x96xf32>
    %140 = vector.extract_strided_slice %137 {offsets = [0, 0], sizes = [32, 32], strides = [1, 1]} : vector<32x96xf32> to vector<32x32xf32>
    %cst_58 = arith.constant dense<0.000000e+00> : vector<16x32xf32>
    %141 = tpu.matmul %135, %140, %cst_58 {dimension_numbers = #tpu.dot_dimension_numbers<[1], [0], [0], [1], [0, 0, 1, 1], [], []>} : vector<16x32xf32>, vector<32x32xf32>, vector<16x32xf32> -> vector<16x32xf32>
    %142 = vector.extract_strided_slice %139 {offsets = [0, 0], sizes = [1, 32], strides = [1, 1]} : vector<1x96xf32> to vector<1x32xf32>
    %143 = vector.broadcast %142 : vector<1x32xf32> to vector<16x32xf32>
    %144 = arith.addf %141, %143 : vector<16x32xf32>
    %145 = vector.extract_strided_slice %137 {offsets = [0, 32], sizes = [32, 64], strides = [1, 1]} : vector<32x96xf32> to vector<32x64xf32>
    %cst_59 = arith.constant dense<0.000000e+00> : vector<16x64xf32>
    %146 = tpu.matmul %5, %145, %cst_59 {dimension_numbers = #tpu.dot_dimension_numbers<[1], [0], [0], [1], [0, 0, 1, 1], [], []>} : vector<16x32xf32>, vector<32x64xf32>, vector<16x64xf32> -> vector<16x64xf32>
    %147 = vector.extract_strided_slice %139 {offsets = [0, 32], sizes = [1, 64], strides = [1, 1]} : vector<1x96xf32> to vector<1x64xf32>
    %148 = vector.broadcast %147 : vector<1x64xf32> to vector<16x64xf32>
    %149 = arith.addf %146, %148 : vector<16x64xf32>
    %150 = vector.extract_strided_slice %149 {offsets = [0, 0], sizes = [16, 32], strides = [1, 1]} : vector<16x64xf32> to vector<16x32xf32>
    %151 = vector.extract_strided_slice %149 {offsets = [0, 32], sizes = [16, 32], strides = [1, 1]} : vector<16x64xf32> to vector<16x32xf32>
    %c0_60 = arith.constant 0 : index
    %c0_61 = arith.constant 0 : index
    %c0_62 = arith.constant 0 : index
    %152 = vector.load %arg9[%c0_60, %c0_61, %c0_62] : memref<1x32x32xf32, #tpu.memory_space<vmem>>, vector<1x32x32xf32>
    %153 = vector.shape_cast %152 : vector<1x32x32xf32> to vector<32x32xf32>
    %c0_63 = arith.constant 0 : index
    %c0_64 = arith.constant 0 : index
    %c0_65 = arith.constant 0 : index
    %154 = vector.load %arg10[%c0_63, %c0_64, %c0_65] : memref<1x1x32xf32, #tpu.memory_space<vmem>>, vector<1x1x32xf32>
    %155 = vector.shape_cast %154 : vector<1x1x32xf32> to vector<1x32xf32>
    %156 = vector.shape_cast %144 : vector<16x32xf32> to vector<2x8x32xf32>
    %157 = vector.shape_cast %150 : vector<16x32xf32> to vector<2x8x32xf32>
    %158 = vector.shape_cast %151 : vector<16x32xf32> to vector<2x8x32xf32>
    %159 = vector.shape_cast %155 : vector<1x32xf32> to vector<1x32xf32>
    %160 = vector.broadcast %159 : vector<1x32xf32> to vector<16x32xf32>
    %161 = vector.extract_strided_slice %156 {offsets = [0, 0, 0], sizes = [2, 8, 8], strides = [1, 1, 1]} : vector<2x8x32xf32> to vector<2x8x8xf32>
    %162 = vector.extract_strided_slice %157 {offsets = [0, 0, 0], sizes = [2, 8, 8], strides = [1, 1, 1]} : vector<2x8x32xf32> to vector<2x8x8xf32>
    %163 = vector.extract_strided_slice %158 {offsets = [0, 0, 0], sizes = [2, 8, 8], strides = [1, 1, 1]} : vector<2x8x32xf32> to vector<2x8x8xf32>
    "tpu.trace_start"() <{level = 10 : i32, message = "bqd,bkd->bqk"}> : () -> ()
    %cst_66 = arith.constant dense<0.000000e+00> : vector<2x8x8xf32>
    %164 = tpu.matmul %161, %162, %cst_66 {dimension_numbers = #tpu.dot_dimension_numbers<[2], [2], [1], [1], [0, 0, 0, 1, 1, 1], [0], [0]>} : vector<2x8x8xf32>, vector<2x8x8xf32>, vector<2x8x8xf32> -> vector<2x8x8xf32>
    "tpu.trace_stop"() : () -> ()
    %cst_67 = arith.constant 0.353553385 : f32
    %165 = vector.broadcast %cst_67 : f32 to vector<2x8x8xf32>
    %166 = arith.mulf %164, %165 : vector<2x8x8xf32>
    %cst_68 = arith.constant dense<0xFF800000> : vector<2x8xf32>
    %167 = vector.multi_reduction <maximumf>, %166, %cst_68 [2] : vector<2x8x8xf32> to vector<2x8xf32>
    %168 = vector.shape_cast %167 : vector<2x8xf32> to vector<2x8x1xf32>
    %169 = vector.broadcast %168 : vector<2x8x1xf32> to vector<2x8x8xf32>
    %170 = arith.subf %166, %169 : vector<2x8x8xf32>
    %171 = math.exp %170 : vector<2x8x8xf32>
    %cst_69 = arith.constant dense<0.000000e+00> : vector<2x8xf32>
    %172 = vector.multi_reduction <add>, %171, %cst_69 [2] : vector<2x8x8xf32> to vector<2x8xf32>
    %173 = vector.shape_cast %172 : vector<2x8xf32> to vector<2x8x1xf32>
    %174 = tpu.reciprocal %173 : vector<2x8x1xf32> -> vector<2x8x1xf32>
    %175 = vector.broadcast %174 : vector<2x8x1xf32> to vector<2x8x8xf32>
    %176 = arith.mulf %171, %175 : vector<2x8x8xf32>
    "tpu.trace_start"() <{level = 10 : i32, message = "bqk,bkd->bqd"}> : () -> ()
    %cst_70 = arith.constant dense<0.000000e+00> : vector<2x8x8xf32>
    %177 = tpu.matmul %176, %163, %cst_70 {dimension_numbers = #tpu.dot_dimension_numbers<[2], [1], [1], [2], [0, 0, 0, 1, 1, 2], [0], [0]>} : vector<2x8x8xf32>, vector<2x8x8xf32>, vector<2x8x8xf32> -> vector<2x8x8xf32>
    "tpu.trace_stop"() : () -> ()
    %178 = vector.shape_cast %177 : vector<2x8x8xf32> to vector<16x8xf32>
    %179 = vector.extract_strided_slice %153 {offsets = [0, 0], sizes = [8, 32], strides = [1, 1]} : vector<32x32xf32> to vector<8x32xf32>
    %cst_71 = arith.constant dense<0.000000e+00> : vector<16x32xf32>
    %180 = tpu.matmul %178, %179, %cst_71 {dimension_numbers = #tpu.dot_dimension_numbers<[1], [0], [0], [1], [0, 0, 1, 1], [], []>} : vector<16x8xf32>, vector<8x32xf32>, vector<16x32xf32> -> vector<16x32xf32>
    %181 = arith.addf %160, %180 : vector<16x32xf32>
    %182 = vector.extract_strided_slice %156 {offsets = [0, 0, 8], sizes = [2, 8, 8], strides = [1, 1, 1]} : vector<2x8x32xf32> to vector<2x8x8xf32>
    %183 = vector.extract_strided_slice %157 {offsets = [0, 0, 8], sizes = [2, 8, 8], strides = [1, 1, 1]} : vector<2x8x32xf32> to vector<2x8x8xf32>
    %184 = vector.extract_strided_slice %158 {offsets = [0, 0, 8], sizes = [2, 8, 8], strides = [1, 1, 1]} : vector<2x8x32xf32> to vector<2x8x8xf32>
    "tpu.trace_start"() <{level = 10 : i32, message = "bqd,bkd->bqk"}> : () -> ()
    %cst_72 = arith.constant dense<0.000000e+00> : vector<2x8x8xf32>
    %185 = tpu.matmul %182, %183, %cst_72 {dimension_numbers = #tpu.dot_dimension_numbers<[2], [2], [1], [1], [0, 0, 0, 1, 1, 1], [0], [0]>} : vector<2x8x8xf32>, vector<2x8x8xf32>, vector<2x8x8xf32> -> vector<2x8x8xf32>
    "tpu.trace_stop"() : () -> ()
    %cst_73 = arith.constant 0.353553385 : f32
    %186 = vector.broadcast %cst_73 : f32 to vector<2x8x8xf32>
    %187 = arith.mulf %185, %186 : vector<2x8x8xf32>
    %cst_74 = arith.constant dense<0xFF800000> : vector<2x8xf32>
    %188 = vector.multi_reduction <maximumf>, %187, %cst_74 [2] : vector<2x8x8xf32> to vector<2x8xf32>
    %189 = vector.shape_cast %188 : vector<2x8xf32> to vector<2x8x1xf32>
    %190 = vector.broadcast %189 : vector<2x8x1xf32> to vector<2x8x8xf32>
    %191 = arith.subf %187, %190 : vector<2x8x8xf32>
    %192 = math.exp %191 : vector<2x8x8xf32>
    %cst_75 = arith.constant dense<0.000000e+00> : vector<2x8xf32>
    %193 = vector.multi_reduction <add>, %192, %cst_75 [2] : vector<2x8x8xf32> to vector<2x8xf32>
    %194 = vector.shape_cast %193 : vector<2x8xf32> to vector<2x8x1xf32>
    %195 = tpu.reciprocal %194 : vector<2x8x1xf32> -> vector<2x8x1xf32>
    %196 = vector.broadcast %195 : vector<2x8x1xf32> to vector<2x8x8xf32>
    %197 = arith.mulf %192, %196 : vector<2x8x8xf32>
    "tpu.trace_start"() <{level = 10 : i32, message = "bqk,bkd->bqd"}> : () -> ()
    %cst_76 = arith.constant dense<0.000000e+00> : vector<2x8x8xf32>
    %198 = tpu.matmul %197, %184, %cst_76 {dimension_numbers = #tpu.dot_dimension_numbers<[2], [1], [1], [2], [0, 0, 0, 1, 1, 2], [0], [0]>} : vector<2x8x8xf32>, vector<2x8x8xf32>, vector<2x8x8xf32> -> vector<2x8x8xf32>
    "tpu.trace_stop"() : () -> ()
    %199 = vector.shape_cast %198 : vector<2x8x8xf32> to vector<16x8xf32>
    %200 = vector.extract_strided_slice %153 {offsets = [8, 0], sizes = [8, 32], strides = [1, 1]} : vector<32x32xf32> to vector<8x32xf32>
    %cst_77 = arith.constant dense<0.000000e+00> : vector<16x32xf32>
    %201 = tpu.matmul %199, %200, %cst_77 {dimension_numbers = #tpu.dot_dimension_numbers<[1], [0], [0], [1], [0, 0, 1, 1], [], []>} : vector<16x8xf32>, vector<8x32xf32>, vector<16x32xf32> -> vector<16x32xf32>
    %202 = arith.addf %181, %201 : vector<16x32xf32>
    %203 = vector.extract_strided_slice %156 {offsets = [0, 0, 16], sizes = [2, 8, 8], strides = [1, 1, 1]} : vector<2x8x32xf32> to vector<2x8x8xf32>
    %204 = vector.extract_strided_slice %157 {offsets = [0, 0, 16], sizes = [2, 8, 8], strides = [1, 1, 1]} : vector<2x8x32xf32> to vector<2x8x8xf32>
    %205 = vector.extract_strided_slice %158 {offsets = [0, 0, 16], sizes = [2, 8, 8], strides = [1, 1, 1]} : vector<2x8x32xf32> to vector<2x8x8xf32>
    "tpu.trace_start"() <{level = 10 : i32, message = "bqd,bkd->bqk"}> : () -> ()
    %cst_78 = arith.constant dense<0.000000e+00> : vector<2x8x8xf32>
    %206 = tpu.matmul %203, %204, %cst_78 {dimension_numbers = #tpu.dot_dimension_numbers<[2], [2], [1], [1], [0, 0, 0, 1, 1, 1], [0], [0]>} : vector<2x8x8xf32>, vector<2x8x8xf32>, vector<2x8x8xf32> -> vector<2x8x8xf32>
    "tpu.trace_stop"() : () -> ()
    %cst_79 = arith.constant 0.353553385 : f32
    %207 = vector.broadcast %cst_79 : f32 to vector<2x8x8xf32>
    %208 = arith.mulf %206, %207 : vector<2x8x8xf32>
    %cst_80 = arith.constant dense<0xFF800000> : vector<2x8xf32>
    %209 = vector.multi_reduction <maximumf>, %208, %cst_80 [2] : vector<2x8x8xf32> to vector<2x8xf32>
    %210 = vector.shape_cast %209 : vector<2x8xf32> to vector<2x8x1xf32>
    %211 = vector.broadcast %210 : vector<2x8x1xf32> to vector<2x8x8xf32>
    %212 = arith.subf %208, %211 : vector<2x8x8xf32>
    %213 = math.exp %212 : vector<2x8x8xf32>
    %cst_81 = arith.constant dense<0.000000e+00> : vector<2x8xf32>
    %214 = vector.multi_reduction <add>, %213, %cst_81 [2] : vector<2x8x8xf32> to vector<2x8xf32>
    %215 = vector.shape_cast %214 : vector<2x8xf32> to vector<2x8x1xf32>
    %216 = tpu.reciprocal %215 : vector<2x8x1xf32> -> vector<2x8x1xf32>
    %217 = vector.broadcast %216 : vector<2x8x1xf32> to vector<2x8x8xf32>
    %218 = arith.mulf %213, %217 : vector<2x8x8xf32>
    "tpu.trace_start"() <{level = 10 : i32, message = "bqk,bkd->bqd"}> : () -> ()
    %cst_82 = arith.constant dense<0.000000e+00> : vector<2x8x8xf32>
    %219 = tpu.matmul %218, %205, %cst_82 {dimension_numbers = #tpu.dot_dimension_numbers<[2], [1], [1], [2], [0, 0, 0, 1, 1, 2], [0], [0]>} : vector<2x8x8xf32>, vector<2x8x8xf32>, vector<2x8x8xf32> -> vector<2x8x8xf32>
    "tpu.trace_stop"() : () -> ()
    %220 = vector.shape_cast %219 : vector<2x8x8xf32> to vector<16x8xf32>
    %221 = vector.extract_strided_slice %153 {offsets = [16, 0], sizes = [8, 32], strides = [1, 1]} : vector<32x32xf32> to vector<8x32xf32>
    %cst_83 = arith.constant dense<0.000000e+00> : vector<16x32xf32>
    %222 = tpu.matmul %220, %221, %cst_83 {dimension_numbers = #tpu.dot_dimension_numbers<[1], [0], [0], [1], [0, 0, 1, 1], [], []>} : vector<16x8xf32>, vector<8x32xf32>, vector<16x32xf32> -> vector<16x32xf32>
    %223 = arith.addf %202, %222 : vector<16x32xf32>
    %224 = vector.extract_strided_slice %156 {offsets = [0, 0, 24], sizes = [2, 8, 8], strides = [1, 1, 1]} : vector<2x8x32xf32> to vector<2x8x8xf32>
    %225 = vector.extract_strided_slice %157 {offsets = [0, 0, 24], sizes = [2, 8, 8], strides = [1, 1, 1]} : vector<2x8x32xf32> to vector<2x8x8xf32>
    %226 = vector.extract_strided_slice %158 {offsets = [0, 0, 24], sizes = [2, 8, 8], strides = [1, 1, 1]} : vector<2x8x32xf32> to vector<2x8x8xf32>
    "tpu.trace_start"() <{level = 10 : i32, message = "bqd,bkd->bqk"}> : () -> ()
    %cst_84 = arith.constant dense<0.000000e+00> : vector<2x8x8xf32>
    %227 = tpu.matmul %224, %225, %cst_84 {dimension_numbers = #tpu.dot_dimension_numbers<[2], [2], [1], [1], [0, 0, 0, 1, 1, 1], [0], [0]>} : vector<2x8x8xf32>, vector<2x8x8xf32>, vector<2x8x8xf32> -> vector<2x8x8xf32>
    "tpu.trace_stop"() : () -> ()
    %cst_85 = arith.constant 0.353553385 : f32
    %228 = vector.broadcast %cst_85 : f32 to vector<2x8x8xf32>
    %229 = arith.mulf %227, %228 : vector<2x8x8xf32>
    %cst_86 = arith.constant dense<0xFF800000> : vector<2x8xf32>
    %230 = vector.multi_reduction <maximumf>, %229, %cst_86 [2] : vector<2x8x8xf32> to vector<2x8xf32>
    %231 = vector.shape_cast %230 : vector<2x8xf32> to vector<2x8x1xf32>
    %232 = vector.broadcast %231 : vector<2x8x1xf32> to vector<2x8x8xf32>
    %233 = arith.subf %229, %232 : vector<2x8x8xf32>
    %234 = math.exp %233 : vector<2x8x8xf32>
    %cst_87 = arith.constant dense<0.000000e+00> : vector<2x8xf32>
    %235 = vector.multi_reduction <add>, %234, %cst_87 [2] : vector<2x8x8xf32> to vector<2x8xf32>
    %236 = vector.shape_cast %235 : vector<2x8xf32> to vector<2x8x1xf32>
    %237 = tpu.reciprocal %236 : vector<2x8x1xf32> -> vector<2x8x1xf32>
    %238 = vector.broadcast %237 : vector<2x8x1xf32> to vector<2x8x8xf32>
    %239 = arith.mulf %234, %238 : vector<2x8x8xf32>
    "tpu.trace_start"() <{level = 10 : i32, message = "bqk,bkd->bqd"}> : () -> ()
    %cst_88 = arith.constant dense<0.000000e+00> : vector<2x8x8xf32>
    %240 = tpu.matmul %239, %226, %cst_88 {dimension_numbers = #tpu.dot_dimension_numbers<[2], [1], [1], [2], [0, 0, 0, 1, 1, 2], [0], [0]>} : vector<2x8x8xf32>, vector<2x8x8xf32>, vector<2x8x8xf32> -> vector<2x8x8xf32>
    "tpu.trace_stop"() : () -> ()
    %241 = vector.shape_cast %240 : vector<2x8x8xf32> to vector<16x8xf32>
    %242 = vector.extract_strided_slice %153 {offsets = [24, 0], sizes = [8, 32], strides = [1, 1]} : vector<32x32xf32> to vector<8x32xf32>
    %cst_89 = arith.constant dense<0.000000e+00> : vector<16x32xf32>
    %243 = tpu.matmul %241, %242, %cst_89 {dimension_numbers = #tpu.dot_dimension_numbers<[1], [0], [0], [1], [0, 0, 1, 1], [], []>} : vector<16x8xf32>, vector<8x32xf32>, vector<16x32xf32> -> vector<16x32xf32>
    %244 = arith.addf %223, %243 : vector<16x32xf32>
    %245 = arith.addf %135, %244 : vector<16x32xf32>
    %c0_90 = arith.constant 0 : index
    %c0_91 = arith.constant 0 : index
    %c0_92 = arith.constant 0 : index
    %246 = vector.load %arg17[%c0_90, %c0_91, %c0_92] : memref<1x1x32xf32, #tpu.memory_space<vmem>>, vector<1x1x32xf32>
    %247 = vector.shape_cast %246 : vector<1x1x32xf32> to vector<1x32xf32>
    %c0_93 = arith.constant 0 : index
    %c0_94 = arith.constant 0 : index
    %c0_95 = arith.constant 0 : index
    %248 = vector.load %arg18[%c0_93, %c0_94, %c0_95] : memref<1x1x32xf32, #tpu.memory_space<vmem>>, vector<1x1x32xf32>
    %249 = vector.shape_cast %248 : vector<1x1x32xf32> to vector<1x32xf32>
    %cst_96 = arith.constant dense<0.000000e+00> : vector<16xf32>
    %250 = vector.multi_reduction <add>, %245, %cst_96 [1] : vector<16x32xf32> to vector<16xf32>
    %251 = vector.shape_cast %250 : vector<16xf32> to vector<16x1xf32>
    %cst_97 = arith.constant 3.200000e+01 : f32
    %252 = vector.broadcast %cst_97 : f32 to vector<16x1xf32>
    %253 = arith.divf %251, %252 : vector<16x1xf32>
    %254 = vector.broadcast %253 : vector<16x1xf32> to vector<16x32xf32>
    %255 = arith.subf %245, %254 : vector<16x32xf32>
    %256 = arith.mulf %255, %255 : vector<16x32xf32>
    %cst_98 = arith.constant dense<0.000000e+00> : vector<16xf32>
    %257 = vector.multi_reduction <add>, %256, %cst_98 [1] : vector<16x32xf32> to vector<16xf32>
    %258 = vector.shape_cast %257 : vector<16xf32> to vector<16x1xf32>
    %cst_99 = arith.constant 3.200000e+01 : f32
    %259 = vector.broadcast %cst_99 : f32 to vector<16x1xf32>
    %260 = arith.divf %258, %259 : vector<16x1xf32>
    %261 = vector.broadcast %253 : vector<16x1xf32> to vector<16x32xf32>
    %262 = arith.subf %245, %261 : vector<16x32xf32>
    %cst_100 = arith.constant 9.99999997E-7 : f32
    %263 = vector.broadcast %cst_100 : f32 to vector<16x1xf32>
    %264 = arith.addf %260, %263 : vector<16x1xf32>
    %265 = math.rsqrt %264 : vector<16x1xf32>
    %266 = vector.broadcast %265 : vector<16x1xf32> to vector<16x32xf32>
    %267 = arith.mulf %262, %266 : vector<16x32xf32>
    %268 = vector.broadcast %247 : vector<1x32xf32> to vector<16x32xf32>
    %269 = arith.mulf %267, %268 : vector<16x32xf32>
    %270 = vector.broadcast %249 : vector<1x32xf32> to vector<16x32xf32>
    %271 = arith.addf %269, %270 : vector<16x32xf32>
    %c0_101 = arith.constant 0 : index
    %c0_102 = arith.constant 0 : index
    %c0_103 = arith.constant 0 : index
    %272 = vector.load %arg11[%c0_101, %c0_102, %c0_103] : memref<1x32x64xf32, #tpu.memory_space<vmem>>, vector<1x32x64xf32>
    %273 = vector.shape_cast %272 : vector<1x32x64xf32> to vector<32x64xf32>
    %cst_104 = arith.constant dense<0.000000e+00> : vector<16x64xf32>
    %274 = tpu.matmul %271, %273, %cst_104 {dimension_numbers = #tpu.dot_dimension_numbers<[1], [0], [0], [1], [0, 0, 1, 1], [], []>} : vector<16x32xf32>, vector<32x64xf32>, vector<16x64xf32> -> vector<16x64xf32>
    %c0_105 = arith.constant 0 : index
    %c0_106 = arith.constant 0 : index
    %c0_107 = arith.constant 0 : index
    %275 = vector.load %arg12[%c0_105, %c0_106, %c0_107] : memref<1x1x64xf32, #tpu.memory_space<vmem>>, vector<1x1x64xf32>
    %276 = vector.shape_cast %275 : vector<1x1x64xf32> to vector<1x64xf32>
    %277 = vector.broadcast %276 : vector<1x64xf32> to vector<16x64xf32>
    %278 = arith.addf %274, %277 : vector<16x64xf32>
    %cst_108 = arith.constant 0.000000e+00 : f32
    %279 = vector.broadcast %cst_108 : f32 to vector<16x64xf32>
    %280 = arith.maximumf %278, %279 : vector<16x64xf32>
    %c0_109 = arith.constant 0 : index
    %c0_110 = arith.constant 0 : index
    %c0_111 = arith.constant 0 : index
    %281 = vector.load %arg13[%c0_109, %c0_110, %c0_111] : memref<1x64x32xf32, #tpu.memory_space<vmem>>, vector<1x64x32xf32>
    %282 = vector.shape_cast %281 : vector<1x64x32xf32> to vector<64x32xf32>
    %cst_112 = arith.constant dense<0.000000e+00> : vector<16x32xf32>
    %283 = tpu.matmul %280, %282, %cst_112 {dimension_numbers = #tpu.dot_dimension_numbers<[1], [0], [0], [1], [0, 0, 1, 1], [], []>} : vector<16x64xf32>, vector<64x32xf32>, vector<16x32xf32> -> vector<16x32xf32>
    %c0_113 = arith.constant 0 : index
    %c0_114 = arith.constant 0 : index
    %c0_115 = arith.constant 0 : index
    %284 = vector.load %arg14[%c0_113, %c0_114, %c0_115] : memref<1x1x32xf32, #tpu.memory_space<vmem>>, vector<1x1x32xf32>
    %285 = vector.shape_cast %284 : vector<1x1x32xf32> to vector<1x32xf32>
    %286 = vector.broadcast %285 : vector<1x32xf32> to vector<16x32xf32>
    %287 = arith.addf %283, %286 : vector<16x32xf32>
    %288 = arith.addf %271, %287 : vector<16x32xf32>
    %c0_116 = arith.constant 0 : index
    %c0_117 = arith.constant 0 : index
    %c0_118 = arith.constant 0 : index
    %289 = vector.load %arg19[%c0_116, %c0_117, %c0_118] : memref<1x1x32xf32, #tpu.memory_space<vmem>>, vector<1x1x32xf32>
    %290 = vector.shape_cast %289 : vector<1x1x32xf32> to vector<1x32xf32>
    %c0_119 = arith.constant 0 : index
    %c0_120 = arith.constant 0 : index
    %c0_121 = arith.constant 0 : index
    %291 = vector.load %arg20[%c0_119, %c0_120, %c0_121] : memref<1x1x32xf32, #tpu.memory_space<vmem>>, vector<1x1x32xf32>
    %292 = vector.shape_cast %291 : vector<1x1x32xf32> to vector<1x32xf32>
    %cst_122 = arith.constant dense<0.000000e+00> : vector<16xf32>
    %293 = vector.multi_reduction <add>, %288, %cst_122 [1] : vector<16x32xf32> to vector<16xf32>
    %294 = vector.shape_cast %293 : vector<16xf32> to vector<16x1xf32>
    %cst_123 = arith.constant 3.200000e+01 : f32
    %295 = vector.broadcast %cst_123 : f32 to vector<16x1xf32>
    %296 = arith.divf %294, %295 : vector<16x1xf32>
    %297 = vector.broadcast %296 : vector<16x1xf32> to vector<16x32xf32>
    %298 = arith.subf %288, %297 : vector<16x32xf32>
    %299 = arith.mulf %298, %298 : vector<16x32xf32>
    %cst_124 = arith.constant dense<0.000000e+00> : vector<16xf32>
    %300 = vector.multi_reduction <add>, %299, %cst_124 [1] : vector<16x32xf32> to vector<16xf32>
    %301 = vector.shape_cast %300 : vector<16xf32> to vector<16x1xf32>
    %cst_125 = arith.constant 3.200000e+01 : f32
    %302 = vector.broadcast %cst_125 : f32 to vector<16x1xf32>
    %303 = arith.divf %301, %302 : vector<16x1xf32>
    %304 = vector.broadcast %296 : vector<16x1xf32> to vector<16x32xf32>
    %305 = arith.subf %288, %304 : vector<16x32xf32>
    %cst_126 = arith.constant 9.99999997E-7 : f32
    %306 = vector.broadcast %cst_126 : f32 to vector<16x1xf32>
    %307 = arith.addf %303, %306 : vector<16x1xf32>
    %308 = math.rsqrt %307 : vector<16x1xf32>
    %309 = vector.broadcast %308 : vector<16x1xf32> to vector<16x32xf32>
    %310 = arith.mulf %305, %309 : vector<16x32xf32>
    %311 = vector.broadcast %290 : vector<1x32xf32> to vector<16x32xf32>
    %312 = arith.mulf %310, %311 : vector<16x32xf32>
    %313 = vector.broadcast %292 : vector<1x32xf32> to vector<16x32xf32>
    %314 = arith.addf %312, %313 : vector<16x32xf32>
    %c0_127 = arith.constant 0 : index
    %c0_128 = arith.constant 0 : index
    %315 = vector.load %arg22[%c0_127, %c0_128] : memref<16x32xf32, #tpu.memory_space<vmem>>, vector<16x32xf32>
    tpu.vector_store %arg22[%c0_127, %c0_128], %314 {strides = array<i32>} : memref<16x32xf32, #tpu.memory_space<vmem>>, vector<16x32xf32>,
    %c1_i32 = arith.constant 1 : i32
    %316 = arith.cmpi eq, %arg0, %c1_i32 : i32
    %317 = arith.extui %316 : i1 to i32
    %c0_i32_129 = arith.constant 0 : i32
    %318 = arith.cmpi ne, %317, %c0_i32_129 : i32
    scf.if %318 {
      %319 = vector.shape_cast %314 : vector<16x32xf32> to vector<2x8x32xf32>
      %c0_130 = arith.constant 0 : index
      %c0_131 = arith.constant 0 : index
      %c0_132 = arith.constant 0 : index
      %320 = vector.load %arg21[%c0_130, %c0_131, %c0_132] : memref<2x8x32xf32, #tpu.memory_space<vmem>>, vector<2x8x32xf32>
      tpu.vector_store %arg21[%c0_130, %c0_131, %c0_132], %319 {strides = array<i32>} : memref<2x8x32xf32, #tpu.memory_space<vmem>>, vector<2x8x32xf32>,
    } else {
    }
    return
  }
  func.func @transform_0(%arg0: i32) -> (i32, i32, i32) {
    %c0_i32 = arith.constant 0 : i32
    %c0_i32_0 = arith.constant 0 : i32
    %c0_i32_1 = arith.constant 0 : i32
    %c0_i32_2 = arith.constant 0 : i32
    return %c0_i32, %c0_i32_0, %c0_i32_1 : i32, i32, i32
  }
  func.func @transform_1(%arg0: i32) -> (i32, i32, i32) {
    %c0_i32 = arith.constant 0 : i32
    %c0_i32_0 = arith.constant 0 : i32
    %c0_i32_1 = arith.constant 0 : i32
    %c0_i32_2 = arith.constant 0 : i32
    return %c0_i32, %c0_i32_0, %c0_i32_1 : i32, i32, i32
  }
  func.func @transform_2(%arg0: i32) -> (i32, i32, i32) {
    %c0_i32 = arith.constant 0 : i32
    %c0_i32_0 = arith.constant 0 : i32
    %c0_i32_1 = arith.constant 0 : i32
    return %arg0, %c0_i32, %c0_i32_0 : i32, i32, i32
  }
  func.func @transform_3(%arg0: i32) -> (i32, i32, i32) {
    %c0_i32 = arith.constant 0 : i32
    %c0_i32_0 = arith.constant 0 : i32
    %c0_i32_1 = arith.constant 0 : i32
    return %arg0, %c0_i32, %c0_i32_0 : i32, i32, i32
  }
  func.func @transform_4(%arg0: i32) -> (i32, i32, i32) {
    %c0_i32 = arith.constant 0 : i32
    %c0_i32_0 = arith.constant 0 : i32
    %c0_i32_1 = arith.constant 0 : i32
    return %arg0, %c0_i32, %c0_i32_0 : i32, i32, i32
  }
  func.func @transform_5(%arg0: i32) -> (i32, i32, i32) {
    %c0_i32 = arith.constant 0 : i32
    %c0_i32_0 = arith.constant 0 : i32
    %c0_i32_1 = arith.constant 0 : i32
    return %arg0, %c0_i32, %c0_i32_0 : i32, i32, i32
  }
  func.func @transform_6(%arg0: i32) -> (i32, i32, i32) {
    %c0_i32 = arith.constant 0 : i32
    %c0_i32_0 = arith.constant 0 : i32
    %c0_i32_1 = arith.constant 0 : i32
    return %arg0, %c0_i32, %c0_i32_0 : i32, i32, i32
  }
  func.func @transform_7(%arg0: i32) -> (i32, i32, i32) {
    %c0_i32 = arith.constant 0 : i32
    %c0_i32_0 = arith.constant 0 : i32
    %c0_i32_1 = arith.constant 0 : i32
    return %arg0, %c0_i32, %c0_i32_0 : i32, i32, i32
  }
  func.func @transform_8(%arg0: i32) -> (i32, i32, i32) {
    %c0_i32 = arith.constant 0 : i32
    %c0_i32_0 = arith.constant 0 : i32
    %c0_i32_1 = arith.constant 0 : i32
    return %arg0, %c0_i32, %c0_i32_0 : i32, i32, i32
  }
  func.func @transform_9(%arg0: i32) -> (i32, i32, i32) {
    %c0_i32 = arith.constant 0 : i32
    %c0_i32_0 = arith.constant 0 : i32
    %c0_i32_1 = arith.constant 0 : i32
    return %arg0, %c0_i32, %c0_i32_0 : i32, i32, i32
  }
  func.func @transform_10(%arg0: i32) -> (i32, i32, i32) {
    %c0_i32 = arith.constant 0 : i32
    %c0_i32_0 = arith.constant 0 : i32
    %c0_i32_1 = arith.constant 0 : i32
    return %arg0, %c0_i32, %c0_i32_0 : i32, i32, i32
  }
  func.func @transform_11(%arg0: i32) -> (i32, i32, i32) {
    %c0_i32 = arith.constant 0 : i32
    %c0_i32_0 = arith.constant 0 : i32
    %c0_i32_1 = arith.constant 0 : i32
    return %arg0, %c0_i32, %c0_i32_0 : i32, i32, i32
  }
  func.func @transform_12(%arg0: i32) -> (i32, i32, i32) {
    %c0_i32 = arith.constant 0 : i32
    %c0_i32_0 = arith.constant 0 : i32
    %c0_i32_1 = arith.constant 0 : i32
    return %arg0, %c0_i32, %c0_i32_0 : i32, i32, i32
  }
  func.func @transform_13(%arg0: i32) -> (i32, i32, i32) {
    %c0_i32 = arith.constant 0 : i32
    %c0_i32_0 = arith.constant 0 : i32
    %c0_i32_1 = arith.constant 0 : i32
    return %arg0, %c0_i32, %c0_i32_0 : i32, i32, i32
  }
  func.func @transform_14(%arg0: i32) -> (i32, i32, i32) {
    %c0_i32 = arith.constant 0 : i32
    %c0_i32_0 = arith.constant 0 : i32
    %c0_i32_1 = arith.constant 0 : i32
    return %arg0, %c0_i32, %c0_i32_0 : i32, i32, i32
  }
  func.func @transform_15(%arg0: i32) -> (i32, i32, i32) {
    %c0_i32 = arith.constant 0 : i32
    %c0_i32_0 = arith.constant 0 : i32
    %c0_i32_1 = arith.constant 0 : i32
    return %arg0, %c0_i32, %c0_i32_0 : i32, i32, i32
  }
  func.func @transform_16(%arg0: i32) -> (i32, i32, i32) {
    %c0_i32 = arith.constant 0 : i32
    %c0_i32_0 = arith.constant 0 : i32
    %c0_i32_1 = arith.constant 0 : i32
    return %arg0, %c0_i32, %c0_i32_0 : i32, i32, i32
  }
  func.func @transform_17(%arg0: i32) -> (i32, i32, i32) {
    %c0_i32 = arith.constant 0 : i32
    %c0_i32_0 = arith.constant 0 : i32
    %c0_i32_1 = arith.constant 0 : i32
    return %arg0, %c0_i32, %c0_i32_0 : i32, i32, i32
  }
  func.func @transform_18(%arg0: i32) -> (i32, i32, i32) {
    %c0_i32 = arith.constant 0 : i32
    %c0_i32_0 = arith.constant 0 : i32
    %c0_i32_1 = arith.constant 0 : i32
    return %arg0, %c0_i32, %c0_i32_0 : i32, i32, i32
  }
  func.func @transform_19(%arg0: i32) -> (i32, i32, i32) {
    %c0_i32 = arith.constant 0 : i32
    %c0_i32_0 = arith.constant 0 : i32
    %c0_i32_1 = arith.constant 0 : i32
    return %arg0, %c0_i32, %c0_i32_0 : i32, i32, i32
  }
  func.func @transform_20(%arg0: i32) -> (i32, i32, i32) {
    %c0_i32 = arith.constant 0 : i32
    %c0_i32_0 = arith.constant 0 : i32
    %c0_i32_1 = arith.constant 0 : i32
    %c0_i32_2 = arith.constant 0 : i32
    return %c0_i32, %c0_i32_0, %c0_i32_1 : i32, i32, i32
  }
}

</mosaic_0001>

<llo_original>
// kernel: tpu_custom_call.1
$region0: #{tpu_custom_call.1}
  #allocation0 [shape = 'u32[]', space=smem, size = 0x4, offset = 0x4, fixed_abs, tag = 'smem constant byte address 0x4 - core index']
  #allocation1 [shape = 'u32[144,128]{1,0:T(1,128)}', space=vmem, size = 0x12000, scoped, tag = 'internal scratch']
  #allocation2 [shape = 'f32[16,32]{1,0:T(8,128)}', space=vmem, size = 0x2000, scoped, tag = 'scratch operand']
  %s0 = inlined_call_operand.hbm [shape: f32[1,8,32], index: 0, kind: input, shape index: {}]
  %s1 = inlined_call_operand.hbm [shape: f32[2,8,32], index: 1, kind: input, shape index: {}]
  %s2 = inlined_call_operand.vmem [shape: f32[2,32,96], index: 2, kind: input, shape index: {}]
  %s3 = inlined_call_operand.vmem [shape: f32[2,1,96], index: 3, kind: input, shape index: {}]
  %s4 = inlined_call_operand.vmem [shape: f32[2,32,32], index: 4, kind: input, shape index: {}]
  %s5 = inlined_call_operand.vmem [shape: f32[2,1,32], index: 5, kind: input, shape index: {}]
  %s6 = inlined_call_operand.vmem [shape: f32[2,32,96], index: 6, kind: input, shape index: {}]
  %s7 = inlined_call_operand.vmem [shape: f32[2,1,96], index: 7, kind: input, shape index: {}]
  %s8 = inlined_call_operand.hbm [shape: f32[2,32,32], index: 8, kind: input, shape index: {}]
  %s9 = inlined_call_operand.vmem [shape: f32[2,1,32], index: 9, kind: input, shape index: {}]
  %s10 = inlined_call_operand.hbm [shape: f32[2,32,64], index: 10, kind: input, shape index: {}]
  %s11 = inlined_call_operand.vmem [shape: f32[2,1,64], index: 11, kind: input, shape index: {}]
  %s12 = inlined_call_operand.vmem [shape: f32[2,64,32], index: 12, kind: input, shape index: {}]
  %s13 = inlined_call_operand.vmem [shape: f32[2,1,32], index: 13, kind: input, shape index: {}]
  %s14 = inlined_call_operand.vmem [shape: f32[2,1,32], index: 14, kind: input, shape index: {}]
  %s15 = inlined_call_operand.vmem [shape: f32[2,1,32], index: 15, kind: input, shape index: {}]
  %s16 = inlined_call_operand.vmem [shape: f32[2,1,32], index: 16, kind: input, shape index: {}]
  %s17 = inlined_call_operand.vmem [shape: f32[2,1,32], index: 17, kind: input, shape index: {}]
  %s18 = inlined_call_operand.vmem [shape: f32[2,1,32], index: 18, kind: input, shape index: {}]
  %s19 = inlined_call_operand.vmem [shape: f32[2,1,32], index: 19, kind: input, shape index: {}]
  %s20 = inlined_call_operand.hbm [shape: f32[2,8,32], index: 20, kind: output, shape index: {}]
  %s21 = sld [smem:[#allocation0]]
  $region137: #{tpu_custom_call.1} parent=0
    _
  %s23 = ssub.s32 1, %s21
  %s24 = scalar_select 0, %s23, %s21
  $region1: #{tpu_custom_call.1} parent=0
    #allocation3 [shape = 'u8[4096]{0}', space=vmem, size = 0x1000, scoped, tag = 'input window, operand 0, single buffered']
    #allocation4 [shape = 's32[2]{0}', space=sflag, size = 0x8, scoped, tag = 'scoped memory for tpu_custom_call.1']
    #allocation5 [shape = 's32[2]{0}', space=sflag, size = 0x8, scoped, tag = 'scoped memory for tpu_custom_call.1']
    #allocation6 [shape = 'u8[8192]{0}', space=vmem, size = 0x2000, scoped, tag = 'input window, operand 1, single buffered']
    #allocation7 [shape = 's32[1]{0}', space=sflag, size = 0x4, scoped, tag = 'scoped memory for tpu_custom_call.1']
    #allocation8 [shape = 'u8[32768]{0}', space=vmem, size = 0x8000, scoped, tag = 'input window, operand 8']
    #allocation9 [shape = 'u8[32768]{0}', space=vmem, size = 0x8000, scoped, tag = 'input window, operand 10']
    #allocation10 [shape = 'u8[8192]{0}', space=vmem, size = 0x2000, scoped, tag = 'output window, operand 0, single buffered']
    %25 = vsyncpa [#allocation4], 0
    %26 = vsyncpa [#allocation7], 0
    %27 = vsyncpa [#allocation5], 0
    loop: start=0, step=1, limit=4
    $region2: #{tpu_custom_call.1} parent=1 // loop_pre_header
      _
    $region3: #{tpu_custom_call.1} parent=1 // loop_header
      %s29 = sphi 0, %s33
      %p30 = scmp.ge.s32.totalorder %s29, 4
      %s37 = sphi 0, %s37
      %s39 = sphi 0, %s37
      %s40 = sphi 0, %s39
      %s54 = sphi 0, %s40
      %s58 = sphi 0, %s58
      %s60 = sphi 0, %s58
      %s61 = sphi 0, %s60
      %s75 = sphi 0, %s61
      %s81 = sphi 0, %s83
      %s84 = sphi 0, %s81
      %s85 = sphi 0, %s84
      %s101 = sphi 0, %s85
      %s107 = sphi 0, %s109
      %s110 = sphi 0, %s107
      %s111 = sphi 0, %s110
      %s127 = sphi 0, %s111
      %s133 = sphi 0, %s135
      %s136 = sphi 0, %s133
      %s137 = sphi 0, %s136
      %s153 = sphi 0, %s137
      %s159 = sphi 0, %s161
      %s162 = sphi 0, %s159
      %s163 = sphi 0, %s162
      %s179 = sphi 0, %s163
      %s185 = sphi 0, %s187
      %s188 = sphi 0, %s185
      %s189 = sphi 0, %s188
      %s205 = sphi 0, %s189
      %s211 = sphi 0, %s213
      %s214 = sphi 0, %s211
      %s215 = sphi 0, %s214
      %s231 = sphi 0, %s215
      %s237 = sphi 0, %s239
      %s240 = sphi 0, %s237
      %s241 = sphi 0, %s240
      %s257 = sphi 0, %s241
      %s263 = sphi 0, %s265
      %s266 = sphi 0, %s263
      %s267 = sphi 0, %s266
      %s283 = sphi 0, %s267
      %s289 = sphi 0, %s291
      %s292 = sphi 0, %s289
      %s293 = sphi 0, %s292
      %s309 = sphi 0, %s293
      %s315 = sphi 0, %s317
      %s318 = sphi 0, %s315
      %s319 = sphi 0, %s318
      %s335 = sphi 0, %s319
      %s341 = sphi 0, %s343
      %s344 = sphi 0, %s341
      %s345 = sphi 0, %s344
      %s361 = sphi 0, %s345
      %s367 = sphi 0, %s369
      %s370 = sphi 0, %s367
      %s371 = sphi 0, %s370
      %s387 = sphi 0, %s371
      %s393 = sphi 0, %s395
      %s396 = sphi 0, %s393
      %s397 = sphi 0, %s396
      %s413 = sphi 0, %s397
      %s419 = sphi 0, %s421
      %s422 = sphi 0, %s419
      %s423 = sphi 0, %s422
      %s439 = sphi 0, %s423
      %s445 = sphi 0, %s447
      %s448 = sphi 0, %s445
      %s449 = sphi 0, %s448
      %s465 = sphi 0, %s449
      %s471 = sphi 0, %s473
      %s474 = sphi 0, %s471
      %s475 = sphi 0, %s474
      %s491 = sphi 0, %s475
      %s497 = sphi 0, %s499
      %s500 = sphi 0, %s497
      %s501 = sphi 0, %s500
      %s517 = sphi 0, %s501
      %s523 = sphi 0, %s525
      %s526 = sphi 0, %s523
      %s527 = sphi 0, %s526
      %s543 = sphi 0, %s527
      %s547 = sphi 0, %s547
      %s549 = sphi 0, %s547
      %s550 = sphi 0, %s549
      %s564 = sphi 0, %s550
    $region4: #{tpu_custom_call.1} parent=1 // loop_header_branch
      %32 = sbr.rel (%p30) target = $region8
    $region5: #{tpu_custom_call.1} parent=1 // loop_body
      %s34 = ssub.s32 %s29, 1
      %s35 = ssub.s32 %s29, 2
      %s36 = sadd.s32 %s29, 1
      %s38 = sadd.s32 %s37, 1
      %p41 = scmp.eq.s32.totalorder %s29, 1
      %p42 = scmp.ne.s32.totalorder %s37, %s39
      %p43 = scmp.eq.s32.totalorder %s29, 0
      %p44 = por %p42, %p43
      %p45 = scmp.ne.s32.totalorder %s37, %s39
      %p46 = scmp.eq.s32.totalorder %s34, 1
      %p47 = por %p45, %p46
      %p48 = scmp.ne.s32.totalorder %s39, %s40
      %p49 = scmp.eq.s32.totalorder %s34, 0
      %p50 = por %p48, %p49
      %p51 = scmp.ne.s32.totalorder %s39, %s40
      %p52 = scmp.eq.s32.totalorder %s35, 1
      %p53 = por %p51, %p52
      %p55 = scmp.ne.s32.totalorder %s40, %s54
      %p56 = scmp.eq.s32.totalorder %s35, 0
      %p57 = por %p55, %p56
      %s59 = sadd.s32 %s58, 1
      %p62 = scmp.eq.s32.totalorder %s29, 1
      %p63 = scmp.ne.s32.totalorder %s58, %s60
      %p64 = scmp.eq.s32.totalorder %s29, 0
      %p65 = por %p63, %p64
      %p66 = scmp.ne.s32.totalorder %s58, %s60
      %p67 = scmp.eq.s32.totalorder %s34, 1
      %p68 = por %p66, %p67
      %p69 = scmp.ne.s32.totalorder %s60, %s61
      %p70 = scmp.eq.s32.totalorder %s34, 0
      %p71 = por %p69, %p70
      %p72 = scmp.ne.s32.totalorder %s60, %s61
      %p73 = scmp.eq.s32.totalorder %s35, 1
      %p74 = por %p72, %p73
      %p76 = scmp.ne.s32.totalorder %s61, %s75
      %p77 = scmp.eq.s32.totalorder %s35, 0
      %p78 = por %p76, %p77
      %s79 = ssub.s32 %s29, %s36
      %p80 = scmp.eq.s32.totalorder %s79, 0
      %s82 = sadd.s32 %s81, 1
      %s83 = scalar_select %p80, %s81, %s82
      %p86 = pneg %p80
      %p87 = scmp.eq.s32.totalorder %s29, 1
      %p88 = por %p86, %p87
      %p89 = scmp.ne.s32.totalorder %s81, %s84
      %p90 = scmp.eq.s32.totalorder %s29, 0
      %p91 = por %p89, %p90
      %p92 = scmp.ne.s32.totalorder %s81, %s84
      %p93 = scmp.eq.s32.totalorder %s34, 1
      %p94 = por %p92, %p93
      %p95 = scmp.ne.s32.totalorder %s84, %s85
      %p96 = scmp.eq.s32.totalorder %s34, 0
      %p97 = por %p95, %p96
      %p98 = scmp.ne.s32.totalorder %s84, %s85
      %p99 = scmp.eq.s32.totalorder %s35, 1
      %p100 = por %p98, %p99
      %p102 = scmp.ne.s32.totalorder %s85, %s101
      %p103 = scmp.eq.s32.totalorder %s35, 0
      %p104 = por %p102, %p103
      %s105 = ssub.s32 %s29, %s36
      %p106 = scmp.eq.s32.totalorder %s105, 0
      %s108 = sadd.s32 %s107, 1
      %s109 = scalar_select %p106, %s107, %s108
      %p112 = pneg %p106
      %p113 = scmp.eq.s32.totalorder %s29, 1
      %p114 = por %p112, %p113
      %p115 = scmp.ne.s32.totalorder %s107, %s110
      %p116 = scmp.eq.s32.totalorder %s29, 0
      %p117 = por %p115, %p116
      %p118 = scmp.ne.s32.totalorder %s107, %s110
      %p119 = scmp.eq.s32.totalorder %s34, 1
      %p120 = por %p118, %p119
      %p121 = scmp.ne.s32.totalorder %s110, %s111
      %p122 = scmp.eq.s32.totalorder %s34, 0
      %p123 = por %p121, %p122
      %p124 = scmp.ne.s32.totalorder %s110, %s111
      %p125 = scmp.eq.s32.totalorder %s35, 1
      %p126 = por %p124, %p125
      %p128 = scmp.ne.s32.totalorder %s111, %s127
      %p129 = scmp.eq.s32.totalorder %s35, 0
      %p130 = por %p128, %p129
      %s131 = ssub.s32 %s29, %s36
      %p132 = scmp.eq.s32.totalorder %s131, 0
      %s134 = sadd.s32 %s133, 1
      %s135 = scalar_select %p132, %s133, %s134
      %p138 = pneg %p132
      %p139 = scmp.eq.s32.totalorder %s29, 1
      %p140 = por %p138, %p139
      %p141 = scmp.ne.s32.totalorder %s133, %s136
      %p142 = scmp.eq.s32.totalorder %s29, 0
      %p143 = por %p141, %p142
      %p144 = scmp.ne.s32.totalorder %s133, %s136
      %p145 = scmp.eq.s32.totalorder %s34, 1
      %p146 = por %p144, %p145
      %p147 = scmp.ne.s32.totalorder %s136, %s137
      %p148 = scmp.eq.s32.totalorder %s34, 0
      %p149 = por %p147, %p148
      %p150 = scmp.ne.s32.totalorder %s136, %s137
      %p151 = scmp.eq.s32.totalorder %s35, 1
      %p152 = por %p150, %p151
      %p154 = scmp.ne.s32.totalorder %s137, %s153
      %p155 = scmp.eq.s32.totalorder %s35, 0
      %p156 = por %p154, %p155
      %s157 = ssub.s32 %s29, %s36
      %p158 = scmp.eq.s32.totalorder %s157, 0
      %s160 = sadd.s32 %s159, 1
      %s161 = scalar_select %p158, %s159, %s160
      %p164 = pneg %p158
      %p165 = scmp.eq.s32.totalorder %s29, 1
      %p166 = por %p164, %p165
      %p167 = scmp.ne.s32.totalorder %s159, %s162
      %p168 = scmp.eq.s32.totalorder %s29, 0
      %p169 = por %p167, %p168
      %p170 = scmp.ne.s32.totalorder %s159, %s162
      %p171 = scmp.eq.s32.totalorder %s34, 1
      %p172 = por %p170, %p171
      %p173 = scmp.ne.s32.totalorder %s162, %s163
      %p174 = scmp.eq.s32.totalorder %s34, 0
      %p175 = por %p173, %p174
      %p176 = scmp.ne.s32.totalorder %s162, %s163
      %p177 = scmp.eq.s32.totalorder %s35, 1
      %p178 = por %p176, %p177
      %p180 = scmp.ne.s32.totalorder %s163, %s179
      %p181 = scmp.eq.s32.totalorder %s35, 0
      %p182 = por %p180, %p181
      %s183 = ssub.s32 %s29, %s36
      %p184 = scmp.eq.s32.totalorder %s183, 0
      %s186 = sadd.s32 %s185, 1
      %s187 = scalar_select %p184, %s185, %s186
      %p190 = pneg %p184
      %p191 = scmp.eq.s32.totalorder %s29, 1
      %p192 = por %p190, %p191
      %p193 = scmp.ne.s32.totalorder %s185, %s188
      %p194 = scmp.eq.s32.totalorder %s29, 0
      %p195 = por %p193, %p194
      %p196 = scmp.ne.s32.totalorder %s185, %s188
      %p197 = scmp.eq.s32.totalorder %s34, 1
      %p198 = por %p196, %p197
      %p199 = scmp.ne.s32.totalorder %s188, %s189
      %p200 = scmp.eq.s32.totalorder %s34, 0
      %p201 = por %p199, %p200
      %p202 = scmp.ne.s32.totalorder %s188, %s189
      %p203 = scmp.eq.s32.totalorder %s35, 1
      %p204 = por %p202, %p203
      %p206 = scmp.ne.s32.totalorder %s189, %s205
      %p207 = scmp.eq.s32.totalorder %s35, 0
      %p208 = por %p206, %p207
      %s209 = ssub.s32 %s29, %s36
      %p210 = scmp.eq.s32.totalorder %s209, 0
      %s212 = sadd.s32 %s211, 1
      %s213 = scalar_select %p210, %s211, %s212
      %p216 = pneg %p210
      %p217 = scmp.eq.s32.totalorder %s29, 1
      %p218 = por %p216, %p217
      %p219 = scmp.ne.s32.totalorder %s211, %s214
      %p220 = scmp.eq.s32.totalorder %s29, 0
      %p221 = por %p219, %p220
      %p222 = scmp.ne.s32.totalorder %s211, %s214
      %p223 = scmp.eq.s32.totalorder %s34, 1
      %p224 = por %p222, %p223
      %p225 = scmp.ne.s32.totalorder %s214, %s215
      %p226 = scmp.eq.s32.totalorder %s34, 0
      %p227 = por %p225, %p226
      %p228 = scmp.ne.s32.totalorder %s214, %s215
      %p229 = scmp.eq.s32.totalorder %s35, 1
      %p230 = por %p228, %p229
      %p232 = scmp.ne.s32.totalorder %s215, %s231
      %p233 = scmp.eq.s32.totalorder %s35, 0
      %p234 = por %p232, %p233
      %s235 = ssub.s32 %s29, %s36
      %p236 = scmp.eq.s32.totalorder %s235, 0
      %s238 = sadd.s32 %s237, 1
      %s239 = scalar_select %p236, %s237, %s238
      %p242 = pneg %p236
      %p243 = scmp.eq.s32.totalorder %s29, 1
      %p244 = por %p242, %p243
      %p245 = scmp.ne.s32.totalorder %s237, %s240
      %p246 = scmp.eq.s32.totalorder %s29, 0
      %p247 = por %p245, %p246
      %p248 = scmp.ne.s32.totalorder %s237, %s240
      %p249 = scmp.eq.s32.totalorder %s34, 1
      %p250 = por %p248, %p249
      %p251 = scmp.ne.s32.totalorder %s240, %s241
      %p252 = scmp.eq.s32.totalorder %s34, 0
      %p253 = por %p251, %p252
      %p254 = scmp.ne.s32.totalorder %s240, %s241
      %p255 = scmp.eq.s32.totalorder %s35, 1
      %p256 = por %p254, %p255
      %p258 = scmp.ne.s32.totalorder %s241, %s257
      %p259 = scmp.eq.s32.totalorder %s35, 0
      %p260 = por %p258, %p259
      %s261 = ssub.s32 %s29, %s36
      %p262 = scmp.eq.s32.totalorder %s261, 0
      %s264 = sadd.s32 %s263, 1
      %s265 = scalar_select %p262, %s263, %s264
      %p268 = pneg %p262
      %p269 = scmp.eq.s32.totalorder %s29, 1
      %p270 = por %p268, %p269
      %p271 = scmp.ne.s32.totalorder %s263, %s266
      %p272 = scmp.eq.s32.totalorder %s29, 0
      %p273 = por %p271, %p272
      %p274 = scmp.ne.s32.totalorder %s263, %s266
      %p275 = scmp.eq.s32.totalorder %s34, 1
      %p276 = por %p274, %p275
      %p277 = scmp.ne.s32.totalorder %s266, %s267
      %p278 = scmp.eq.s32.totalorder %s34, 0
      %p279 = por %p277, %p278
      %p280 = scmp.ne.s32.totalorder %s266, %s267
      %p281 = scmp.eq.s32.totalorder %s35, 1
      %p282 = por %p280, %p281
      %p284 = scmp.ne.s32.totalorder %s267, %s283
      %p285 = scmp.eq.s32.totalorder %s35, 0
      %p286 = por %p284, %p285
      %s287 = ssub.s32 %s29, %s36
      %p288 = scmp.eq.s32.totalorder %s287, 0
      %s290 = sadd.s32 %s289, 1
      %s291 = scalar_select %p288, %s289, %s290
      %p294 = pneg %p288
      %p295 = scmp.eq.s32.totalorder %s29, 1
      %p296 = por %p294, %p295
      %p297 = scmp.ne.s32.totalorder %s289, %s292
      %p298 = scmp.eq.s32.totalorder %s29, 0
      %p299 = por %p297, %p298
      %p300 = scmp.ne.s32.totalorder %s289, %s292
      %p301 = scmp.eq.s32.totalorder %s34, 1
      %p302 = por %p300, %p301
      %p303 = scmp.ne.s32.totalorder %s292, %s293
      %p304 = scmp.eq.s32.totalorder %s34, 0
      %p305 = por %p303, %p304
      %p306 = scmp.ne.s32.totalorder %s292, %s293
      %p307 = scmp.eq.s32.totalorder %s35, 1
      %p308 = por %p306, %p307
      %p310 = scmp.ne.s32.totalorder %s293, %s309
      %p311 = scmp.eq.s32.totalorder %s35, 0
      %p312 = por %p310, %p311
      %s313 = ssub.s32 %s29, %s36
      %p314 = scmp.eq.s32.totalorder %s313, 0
      %s316 = sadd.s32 %s315, 1
      %s317 = scalar_select %p314, %s315, %s316
      %p320 = pneg %p314
      %p321 = scmp.eq.s32.totalorder %s29, 1
      %p322 = por %p320, %p321
      %p323 = scmp.ne.s32.totalorder %s315, %s318
      %p324 = scmp.eq.s32.totalorder %s29, 0
      %p325 = por %p323, %p324
      %p326 = scmp.ne.s32.totalorder %s315, %s318
      %p327 = scmp.eq.s32.totalorder %s34, 1
      %p328 = por %p326, %p327
      %p329 = scmp.ne.s32.totalorder %s318, %s319
      %p330 = scmp.eq.s32.totalorder %s34, 0
      %p331 = por %p329, %p330
      %p332 = scmp.ne.s32.totalorder %s318, %s319
      %p333 = scmp.eq.s32.totalorder %s35, 1
      %p334 = por %p332, %p333
      %p336 = scmp.ne.s32.totalorder %s319, %s335
      %p337 = scmp.eq.s32.totalorder %s35, 0
      %p338 = por %p336, %p337
      %s339 = ssub.s32 %s29, %s36
      %p340 = scmp.eq.s32.totalorder %s339, 0
      %s342 = sadd.s32 %s341, 1
      %s343 = scalar_select %p340, %s341, %s342
      %p346 = pneg %p340
      %p347 = scmp.eq.s32.totalorder %s29, 1
      %p348 = por %p346, %p347
      %p349 = scmp.ne.s32.totalorder %s341, %s344
      %p350 = scmp.eq.s32.totalorder %s29, 0
      %p351 = por %p349, %p350
      %p352 = scmp.ne.s32.totalorder %s341, %s344
      %p353 = scmp.eq.s32.totalorder %s34, 1
      %p354 = por %p352, %p353
      %p355 = scmp.ne.s32.totalorder %s344, %s345
      %p356 = scmp.eq.s32.totalorder %s34, 0
      %p357 = por %p355, %p356
      %p358 = scmp.ne.s32.totalorder %s344, %s345
      %p359 = scmp.eq.s32.totalorder %s35, 1
      %p360 = por %p358, %p359
      %p362 = scmp.ne.s32.totalorder %s345, %s361
      %p363 = scmp.eq.s32.totalorder %s35, 0
      %p364 = por %p362, %p363
      %s365 = ssub.s32 %s29, %s36
      %p366 = scmp.eq.s32.totalorder %s365, 0
      %s368 = sadd.s32 %s367, 1
      %s369 = scalar_select %p366, %s367, %s368
      %p372 = pneg %p366
      %p373 = scmp.eq.s32.totalorder %s29, 1
      %p374 = por %p372, %p373
      %p375 = scmp.ne.s32.totalorder %s367, %s370
      %p376 = scmp.eq.s32.totalorder %s29, 0
      %p377 = por %p375, %p376
      %p378 = scmp.ne.s32.totalorder %s367, %s370
      %p379 = scmp.eq.s32.totalorder %s34, 1
      %p380 = por %p378, %p379
      %p381 = scmp.ne.s32.totalorder %s370, %s371
      %p382 = scmp.eq.s32.totalorder %s34, 0
      %p383 = por %p381, %p382
      %p384 = scmp.ne.s32.totalorder %s370, %s371
      %p385 = scmp.eq.s32.totalorder %s35, 1
      %p386 = por %p384, %p385
      %p388 = scmp.ne.s32.totalorder %s371, %s387
      %p389 = scmp.eq.s32.totalorder %s35, 0
      %p390 = por %p388, %p389
      %s391 = ssub.s32 %s29, %s36
      %p392 = scmp.eq.s32.totalorder %s391, 0
      %s394 = sadd.s32 %s393, 1
      %s395 = scalar_select %p392, %s393, %s394
      %p398 = pneg %p392
      %p399 = scmp.eq.s32.totalorder %s29, 1
      %p400 = por %p398, %p399
      %p401 = scmp.ne.s32.totalorder %s393, %s396
      %p402 = scmp.eq.s32.totalorder %s29, 0
      %p403 = por %p401, %p402
      %p404 = scmp.ne.s32.totalorder %s393, %s396
      %p405 = scmp.eq.s32.totalorder %s34, 1
      %p406 = por %p404, %p405
      %p407 = scmp.ne.s32.totalorder %s396, %s397
      %p408 = scmp.eq.s32.totalorder %s34, 0
      %p409 = por %p407, %p408
      %p410 = scmp.ne.s32.totalorder %s396, %s397
      %p411 = scmp.eq.s32.totalorder %s35, 1
      %p412 = por %p410, %p411
      %p414 = scmp.ne.s32.totalorder %s397, %s413
      %p415 = scmp.eq.s32.totalorder %s35, 0
      %p416 = por %p414, %p415
      %s417 = ssub.s32 %s29, %s36
      %p418 = scmp.eq.s32.totalorder %s417, 0
      %s420 = sadd.s32 %s419, 1
      %s421 = scalar_select %p418, %s419, %s420
      %p424 = pneg %p418
      %p425 = scmp.eq.s32.totalorder %s29, 1
      %p426 = por %p424, %p425
      %p427 = scmp.ne.s32.totalorder %s419, %s422
      %p428 = scmp.eq.s32.totalorder %s29, 0
      %p429 = por %p427, %p428
      %p430 = scmp.ne.s32.totalorder %s419, %s422
      %p431 = scmp.eq.s32.totalorder %s34, 1
      %p432 = por %p430, %p431
      %p433 = scmp.ne.s32.totalorder %s422, %s423
      %p434 = scmp.eq.s32.totalorder %s34, 0
      %p435 = por %p433, %p434
      %p436 = scmp.ne.s32.totalorder %s422, %s423
      %p437 = scmp.eq.s32.totalorder %s35, 1
      %p438 = por %p436, %p437
      %p440 = scmp.ne.s32.totalorder %s423, %s439
      %p441 = scmp.eq.s32.totalorder %s35, 0
      %p442 = por %p440, %p441
      %s443 = ssub.s32 %s29, %s36
      %p444 = scmp.eq.s32.totalorder %s443, 0
      %s446 = sadd.s32 %s445, 1
      %s447 = scalar_select %p444, %s445, %s446
      %p450 = pneg %p444
      %p451 = scmp.eq.s32.totalorder %s29, 1
      %p452 = por %p450, %p451
      %p453 = scmp.ne.s32.totalorder %s445, %s448
      %p454 = scmp.eq.s32.totalorder %s29, 0
      %p455 = por %p453, %p454
      %p456 = scmp.ne.s32.totalorder %s445, %s448
      %p457 = scmp.eq.s32.totalorder %s34, 1
      %p458 = por %p456, %p457
      %p459 = scmp.ne.s32.totalorder %s448, %s449
      %p460 = scmp.eq.s32.totalorder %s34, 0
      %p461 = por %p459, %p460
      %p462 = scmp.ne.s32.totalorder %s448, %s449
      %p463 = scmp.eq.s32.totalorder %s35, 1
      %p464 = por %p462, %p463
      %p466 = scmp.ne.s32.totalorder %s449, %s465
      %p467 = scmp.eq.s32.totalorder %s35, 0
      %p468 = por %p466, %p467
      %s469 = ssub.s32 %s29, %s36
      %p470 = scmp.eq.s32.totalorder %s469, 0
      %s472 = sadd.s32 %s471, 1
      %s473 = scalar_select %p470, %s471, %s472
      %p476 = pneg %p470
      %p477 = scmp.eq.s32.totalorder %s29, 1
      %p478 = por %p476, %p477
      %p479 = scmp.ne.s32.totalorder %s471, %s474
      %p480 = scmp.eq.s32.totalorder %s29, 0
      %p481 = por %p479, %p480
      %p482 = scmp.ne.s32.totalorder %s471, %s474
      %p483 = scmp.eq.s32.totalorder %s34, 1
      %p484 = por %p482, %p483
      %p485 = scmp.ne.s32.totalorder %s474, %s475
      %p486 = scmp.eq.s32.totalorder %s34, 0
      %p487 = por %p485, %p486
      %p488 = scmp.ne.s32.totalorder %s474, %s475
      %p489 = scmp.eq.s32.totalorder %s35, 1
      %p490 = por %p488, %p489
      %p492 = scmp.ne.s32.totalorder %s475, %s491
      %p493 = scmp.eq.s32.totalorder %s35, 0
      %p494 = por %p492, %p493
      %s495 = ssub.s32 %s29, %s36
      %p496 = scmp.eq.s32.totalorder %s495, 0
      %s498 = sadd.s32 %s497, 1
      %s499 = scalar_select %p496, %s497, %s498
      %p502 = pneg %p496
      %p503 = scmp.eq.s32.totalorder %s29, 1
      %p504 = por %p502, %p503
      %p505 = scmp.ne.s32.totalorder %s497, %s500
      %p506 = scmp.eq.s32.totalorder %s29, 0
      %p507 = por %p505, %p506
      %p508 = scmp.ne.s32.totalorder %s497, %s500
      %p509 = scmp.eq.s32.totalorder %s34, 1
      %p510 = por %p508, %p509
      %p511 = scmp.ne.s32.totalorder %s500, %s501
      %p512 = scmp.eq.s32.totalorder %s34, 0
      %p513 = por %p511, %p512
      %p514 = scmp.ne.s32.totalorder %s500, %s501
      %p515 = scmp.eq.s32.totalorder %s35, 1
      %p516 = por %p514, %p515
      %p518 = scmp.ne.s32.totalorder %s501, %s517
      %p519 = scmp.eq.s32.totalorder %s35, 0
      %p520 = por %p518, %p519
      %s521 = ssub.s32 %s29, %s36
      %p522 = scmp.eq.s32.totalorder %s521, 0
      %s524 = sadd.s32 %s523, 1
      %s525 = scalar_select %p522, %s523, %s524
      %p528 = pneg %p522
      %p529 = scmp.eq.s32.totalorder %s29, 1
      %p530 = por %p528, %p529
      %p531 = scmp.ne.s32.totalorder %s523, %s526
      %p532 = scmp.eq.s32.totalorder %s29, 0
      %p533 = por %p531, %p532
      %p534 = scmp.ne.s32.totalorder %s523, %s526
      %p535 = scmp.eq.s32.totalorder %s34, 1
      %p536 = por %p534, %p535
      %p537 = scmp.ne.s32.totalorder %s526, %s527
      %p538 = scmp.eq.s32.totalorder %s34, 0
      %p539 = por %p537, %p538
      %p540 = scmp.ne.s32.totalorder %s526, %s527
      %p541 = scmp.eq.s32.totalorder %s35, 1
      %p542 = por %p540, %p541
      %p544 = scmp.ne.s32.totalorder %s527, %s543
      %p545 = scmp.eq.s32.totalorder %s35, 0
      %p546 = por %p544, %p545
      %s548 = sadd.s32 %s547, 1
      %p551 = scmp.eq.s32.totalorder %s29, 1
      %p552 = scmp.ne.s32.totalorder %s547, %s549
      %p553 = scmp.eq.s32.totalorder %s29, 0
      %p554 = por %p552, %p553
      %p555 = scmp.ne.s32.totalorder %s547, %s549
      %p556 = scmp.eq.s32.totalorder %s34, 1
      %p557 = por %p555, %p556
      %p558 = scmp.ne.s32.totalorder %s549, %s550
      %p559 = scmp.eq.s32.totalorder %s34, 0
      %p560 = por %p558, %p559
      %p561 = scmp.ne.s32.totalorder %s549, %s550
      %p562 = scmp.eq.s32.totalorder %s35, 1
      %p563 = por %p561, %p562
      %p565 = scmp.ne.s32.totalorder %s550, %s564
      %p566 = scmp.eq.s32.totalorder %s35, 0
      %p567 = por %p565, %p566
      %p568 = scmp.le.s32.totalorder 1, %s29
      %p569 = scmp.lt.s32.totalorder %s29, 3
      %p570 = pnand %p568, %p569
      %p571 = pneg %p570
      // Predicated region
      $region9: #{tpu_custom_call.1} parent=5 // pred_check
        _
      $region10: #{tpu_custom_call.1} parent=5 // pred_check_branch
        %573 = sbr.rel (%p570) target = $region12
      $region11: #{tpu_custom_call.1} parent=5 // pred_region
        %s574 = ssub.s32 %s29, 1
        // Predicated region
        $region13: #{tpu_custom_call.1} parent=11 // pred_check
          %p575 = pneg %p50
        $region14: #{tpu_custom_call.1} parent=11 // pred_check_branch
          %577 = sbr.rel (%p575) target = $region16
        $region15: #{tpu_custom_call.1} parent=11 // pred_region
          %s579 = ssub.s32 128, 128
          %580 = vsyncadd [#allocation4], %s579
          %s582 = sshll.u32 [#allocation3], 4
          %s583 = int_to_ptr.vmem [resolvable:$true] %s582
          %585 = dma.hbm_to_vmem [thread:$0]  %s0, 128, %s583, [#allocation4]
        $region16: #{tpu_custom_call.1} parent=11 // pred_fallthru
          _
        // Predicated region
        $region17: #{tpu_custom_call.1} parent=11 // pred_check
          %p586 = pneg %p71
        $region18: #{tpu_custom_call.1} parent=11 // pred_check_branch
          %588 = sbr.rel (%p586) target = $region20
        $region19: #{tpu_custom_call.1} parent=11 // pred_region
          %s590 = ssub.s32 256, 256
          %591 = vsyncadd [#allocation7], %s590
          %s592 = sshll.u32 [#allocation6], 4
          %s593 = int_to_ptr.vmem [resolvable:$true] %s592
          %598 = dma.hbm_to_vmem [thread:$0]  %s1, 256, %s593, [#allocation7], 128, 128, 8
        $region20: #{tpu_custom_call.1} parent=11 // pred_fallthru
          _
      $region12: #{tpu_custom_call.1} parent=5 // pred_fallthru
        _
      %p599 = scmp.lt.s32.totalorder %s29, 2
      // Predicated region
      $region21: #{tpu_custom_call.1} parent=5 // pred_check
        %p600 = pneg %p599
      $region22: #{tpu_custom_call.1} parent=5 // pred_check_branch
        %602 = sbr.rel (%p600) target = $region24
      $region23: #{tpu_custom_call.1} parent=5 // pred_region
        // Predicated region
        $region25: #{tpu_custom_call.1} parent=23 // pred_check
          %p603 = pneg %p91
        $region26: #{tpu_custom_call.1} parent=23 // pred_check_branch
          %605 = sbr.rel (%p603) target = $region28
        $region27: #{tpu_custom_call.1} parent=23 // pred_region
          %p606 = scmp.lt.s32.totalorder %s29, 1
          %s607 = scalar_select %p606, %s29, 1
          %s608 = smul.addr %s607, 4
          %s609 = smul.addr %s608, 8
          %s610 = scalar_lea.vmem %s2, %s609
        $region28: #{tpu_custom_call.1} parent=23 // pred_fallthru
          _
        // Predicated region
        $region29: #{tpu_custom_call.1} parent=23 // pred_check
          %p611 = pneg %p117
        $region30: #{tpu_custom_call.1} parent=23 // pred_check_branch
          %613 = sbr.rel (%p611) target = $region32
        $region31: #{tpu_custom_call.1} parent=23 // pred_region
          %p614 = scmp.lt.s32.totalorder %s29, 1
          %s615 = scalar_select %p614, %s29, 1
          %s616 = scalar_lea.vmem %s3, %s615
        $region32: #{tpu_custom_call.1} parent=23 // pred_fallthru
          _
        // Predicated region
        $region33: #{tpu_custom_call.1} parent=23 // pred_check
          %p617 = pneg %p143
        $region34: #{tpu_custom_call.1} parent=23 // pred_check_branch
          %619 = sbr.rel (%p617) target = $region36
        $region35: #{tpu_custom_call.1} parent=23 // pred_region
          %p620 = scmp.lt.s32.totalorder %s29, 1
          %s621 = scalar_select %p620, %s29, 1
          %s622 = smul.addr %s621, 4
          %s623 = smul.addr %s622, 8
          %s624 = scalar_lea.vmem %s4, %s623
        $region36: #{tpu_custom_call.1} parent=23 // pred_fallthru
          _
        // Predicated region
        $region37: #{tpu_custom_call.1} parent=23 // pred_check
          %p625 = pneg %p169
        $region38: #{tpu_custom_call.1} parent=23 // pred_check_branch
          %627 = sbr.rel (%p625) target = $region40
        $region39: #{tpu_custom_call.1} parent=23 // pred_region
          %p628 = scmp.lt.s32.totalorder %s29, 1
          %s629 = scalar_select %p628, %s29, 1
          %s630 = scalar_lea.vmem %s5, %s629
        $region40: #{tpu_custom_call.1} parent=23 // pred_fallthru
          _
        // Predicated region
        $region41: #{tpu_custom_call.1} parent=23 // pred_check
          %p631 = pneg %p195
        $region42: #{tpu_custom_call.1} parent=23 // pred_check_branch
          %633 = sbr.rel (%p631) target = $region44
        $region43: #{tpu_custom_call.1} parent=23 // pred_region
          %p634 = scmp.lt.s32.totalorder %s29, 1
          %s635 = scalar_select %p634, %s29, 1
          %s636 = smul.addr %s635, 4
          %s637 = smul.addr %s636, 8
          %s638 = scalar_lea.vmem %s6, %s637
        $region44: #{tpu_custom_call.1} parent=23 // pred_fallthru
          _
        // Predicated region
        $region45: #{tpu_custom_call.1} parent=23 // pred_check
          %p639 = pneg %p221
        $region46: #{tpu_custom_call.1} parent=23 // pred_check_branch
          %641 = sbr.rel (%p639) target = $region48
        $region47: #{tpu_custom_call.1} parent=23 // pred_region
          %p642 = scmp.lt.s32.totalorder %s29, 1
          %s643 = scalar_select %p642, %s29, 1
          %s644 = scalar_lea.vmem %s7, %s643
        $region48: #{tpu_custom_call.1} parent=23 // pred_fallthru
          _
        // Predicated region
        $region49: #{tpu_custom_call.1} parent=23 // pred_check
          %p645 = pneg %p247
        $region50: #{tpu_custom_call.1} parent=23 // pred_check_branch
          %647 = sbr.rel (%p645) target = $region52
        $region51: #{tpu_custom_call.1} parent=23 // pred_region
          %s648 = sand.u32 %s29, 1
          %s649 = scalar_lea.sflag [#allocation4], %s648
          %s650 = sand.u32 %s237, 1
          %s651 = smul.addr %s650, 32
          %s652 = scalar_lea.vmem [#allocation8], %s651
          %s654 = ssub.s32 512, 512
          %655 = vsyncadd %s649, %s654
          %s656 = smul.addr %s29, 4
          %s657 = smul.addr %s656, 128
          %s658 = scalar_lea.hbm %s8, %s657
          %s659 = sshll.u32 %s652, 4
          %s660 = int_to_ptr.vmem [resolvable:$true] %s659
          %665 = dma.hbm_to_vmem [thread:$0]  %s658, 512, %s660, %s649, 128, 128, 8
        $region52: #{tpu_custom_call.1} parent=23 // pred_fallthru
          _
        // Predicated region
        $region53: #{tpu_custom_call.1} parent=23 // pred_check
          %p666 = pneg %p273
        $region54: #{tpu_custom_call.1} parent=23 // pred_check_branch
          %668 = sbr.rel (%p666) target = $region56
        $region55: #{tpu_custom_call.1} parent=23 // pred_region
          %p669 = scmp.lt.s32.totalorder %s29, 1
          %s670 = scalar_select %p669, %s29, 1
          %s671 = scalar_lea.vmem %s9, %s670
        $region56: #{tpu_custom_call.1} parent=23 // pred_fallthru
          _
        // Predicated region
        $region57: #{tpu_custom_call.1} parent=23 // pred_check
          %p672 = pneg %p299
        $region58: #{tpu_custom_call.1} parent=23 // pred_check_branch
          %674 = sbr.rel (%p672) target = $region60
        $region59: #{tpu_custom_call.1} parent=23 // pred_region
          %s675 = sand.u32 %s29, 1
          %s676 = scalar_lea.sflag [#allocation4], %s675
          %s677 = sand.u32 %s289, 1
          %s678 = smul.addr %s677, 32
          %s679 = scalar_lea.vmem [#allocation9], %s678
          %s681 = ssub.s32 512, 512
          %682 = vsyncadd %s676, %s681
          %s683 = smul.addr %s29, 4
          %s684 = smul.addr %s683, 128
          %s685 = scalar_lea.hbm %s10, %s684
          %s686 = sshll.u32 %s679, 4
          %s687 = int_to_ptr.vmem [resolvable:$true] %s686
          %692 = dma.hbm_to_vmem [thread:$0]  %s685, 512, %s687, %s676, 128, 128, 8
        $region60: #{tpu_custom_call.1} parent=23 // pred_fallthru
          _
        // Predicated region
        $region61: #{tpu_custom_call.1} parent=23 // pred_check
          %p693 = pneg %p325
        $region62: #{tpu_custom_call.1} parent=23 // pred_check_branch
          %695 = sbr.rel (%p693) target = $region64
        $region63: #{tpu_custom_call.1} parent=23 // pred_region
          %p696 = scmp.lt.s32.totalorder %s29, 1
          %s697 = scalar_select %p696, %s29, 1
          %s698 = scalar_lea.vmem %s11, %s697
        $region64: #{tpu_custom_call.1} parent=23 // pred_fallthru
          _
        // Predicated region
        $region65: #{tpu_custom_call.1} parent=23 // pred_check
          %p699 = pneg %p351
        $region66: #{tpu_custom_call.1} parent=23 // pred_check_branch
          %701 = sbr.rel (%p699) target = $region68
        $region67: #{tpu_custom_call.1} parent=23 // pred_region
          %p702 = scmp.lt.s32.totalorder %s29, 1
          %s703 = scalar_select %p702, %s29, 1
          %s704 = smul.addr %s703, 8
          %s705 = smul.addr %s704, 8
          %s706 = scalar_lea.vmem %s12, %s705
        $region68: #{tpu_custom_call.1} parent=23 // pred_fallthru
          _
        // Predicated region
        $region69: #{tpu_custom_call.1} parent=23 // pred_check
          %p707 = pneg %p377
        $region70: #{tpu_custom_call.1} parent=23 // pred_check_branch
          %709 = sbr.rel (%p707) target = $region72
        $region71: #{tpu_custom_call.1} parent=23 // pred_region
          %p710 = scmp.lt.s32.totalorder %s29, 1
          %s711 = scalar_select %p710, %s29, 1
          %s712 = scalar_lea.vmem %s13, %s711
        $region72: #{tpu_custom_call.1} parent=23 // pred_fallthru
          _
        // Predicated region
        $region73: #{tpu_custom_call.1} parent=23 // pred_check
          %p713 = pneg %p403
        $region74: #{tpu_custom_call.1} parent=23 // pred_check_branch
          %715 = sbr.rel (%p713) target = $region76
        $region75: #{tpu_custom_call.1} parent=23 // pred_region
          %p716 = scmp.lt.s32.totalorder %s29, 1
          %s717 = scalar_select %p716, %s29, 1
          %s718 = scalar_lea.vmem %s14, %s717
        $region76: #{tpu_custom_call.1} parent=23 // pred_fallthru
          _
        // Predicated region
        $region77: #{tpu_custom_call.1} parent=23 // pred_check
          %p719 = pneg %p429
        $region78: #{tpu_custom_call.1} parent=23 // pred_check_branch
          %721 = sbr.rel (%p719) target = $region80
        $region79: #{tpu_custom_call.1} parent=23 // pred_region
          %p722 = scmp.lt.s32.totalorder %s29, 1
          %s723 = scalar_select %p722, %s29, 1
          %s724 = scalar_lea.vmem %s15, %s723
        $region80: #{tpu_custom_call.1} parent=23 // pred_fallthru
          _
        // Predicated region
        $region81: #{tpu_custom_call.1} parent=23 // pred_check
          %p725 = pneg %p455
        $region82: #{tpu_custom_call.1} parent=23 // pred_check_branch
          %727 = sbr.rel (%p725) target = $region84
        $region83: #{tpu_custom_call.1} parent=23 // pred_region
          %p728 = scmp.lt.s32.totalorder %s29, 1
          %s729 = scalar_select %p728, %s29, 1
          %s730 = scalar_lea.vmem %s16, %s729
        $region84: #{tpu_custom_call.1} parent=23 // pred_fallthru
          _
        // Predicated region
        $region85: #{tpu_custom_call.1} parent=23 // pred_check
          %p731 = pneg %p481
        $region86: #{tpu_custom_call.1} parent=23 // pred_check_branch
          %733 = sbr.rel (%p731) target = $region88
        $region87: #{tpu_custom_call.1} parent=23 // pred_region
          %p734 = scmp.lt.s32.totalorder %s29, 1
          %s735 = scalar_select %p734, %s29, 1
          %s736 = scalar_lea.vmem %s17, %s735
        $region88: #{tpu_custom_call.1} parent=23 // pred_fallthru
          _
        // Predicated region
        $region89: #{tpu_custom_call.1} parent=23 // pred_check
          %p737 = pneg %p507
        $region90: #{tpu_custom_call.1} parent=23 // pred_check_branch
          %739 = sbr.rel (%p737) target = $region92
        $region91: #{tpu_custom_call.1} parent=23 // pred_region
          %p740 = scmp.lt.s32.totalorder %s29, 1
          %s741 = scalar_select %p740, %s29, 1
          %s742 = scalar_lea.vmem %s18, %s741
        $region92: #{tpu_custom_call.1} parent=23 // pred_fallthru
          _
        // Predicated region
        $region93: #{tpu_custom_call.1} parent=23 // pred_check
          %p743 = pneg %p533
        $region94: #{tpu_custom_call.1} parent=23 // pred_check_branch
          %745 = sbr.rel (%p743) target = $region96
        $region95: #{tpu_custom_call.1} parent=23 // pred_region
          %p746 = scmp.lt.s32.totalorder %s29, 1
          %s747 = scalar_select %p746, %s29, 1
          %s748 = scalar_lea.vmem %s19, %s747
        $region96: #{tpu_custom_call.1} parent=23 // pred_fallthru
          _
      $region24: #{tpu_custom_call.1} parent=5 // pred_fallthru
        _
      %p749 = scmp.le.s32.totalorder 1, %s29
      %p750 = scmp.lt.s32.totalorder %s29, 3
      %p751 = pnand %p749, %p750
      %p752 = pneg %p751
      // Predicated region
      $region97: #{tpu_custom_call.1} parent=5 // pred_check
        _
      $region98: #{tpu_custom_call.1} parent=5 // pred_check_branch
        %754 = sbr.rel (%p751) target = $region100
      $region99: #{tpu_custom_call.1} parent=5 // pred_region
        %s755 = ssub.s32 %s29, 1
        // Predicated region
        $region101: #{tpu_custom_call.1} parent=99 // pred_check
          %p756 = pneg %p50
        $region102: #{tpu_custom_call.1} parent=99 // pred_check_branch
          %758 = sbr.rel (%p756) target = $region104
        $region103: #{tpu_custom_call.1} parent=99 // pred_region
          %759 = dma.done [#allocation4], 128
        $region104: #{tpu_custom_call.1} parent=99 // pred_fallthru
          _
        // Predicated region
        $region105: #{tpu_custom_call.1} parent=99 // pred_check
          %p760 = pneg %p71
        $region106: #{tpu_custom_call.1} parent=99 // pred_check_branch
          %762 = sbr.rel (%p760) target = $region108
        $region107: #{tpu_custom_call.1} parent=99 // pred_region
          %763 = dma.done [#allocation7], 256
        $region108: #{tpu_custom_call.1} parent=99 // pred_fallthru
          _
        %s764 = sand.u32 %s34, 1
        %s765 = scalar_lea.sflag [#allocation4], %s764
        %s766 = sand.u32 %s240, 1
        %s767 = smul.addr %s766, 32
        %s768 = scalar_lea.vmem [#allocation8], %s767
        // Predicated region
        $region109: #{tpu_custom_call.1} parent=99 // pred_check
          %p769 = pneg %p253
        $region110: #{tpu_custom_call.1} parent=99 // pred_check_branch
          %771 = sbr.rel (%p769) target = $region112
        $region111: #{tpu_custom_call.1} parent=99 // pred_region
          %772 = dma.done %s765, 512
        $region112: #{tpu_custom_call.1} parent=99 // pred_fallthru
          _
        %s773 = sand.u32 %s34, 1
        %s774 = scalar_lea.sflag [#allocation4], %s773
        %s775 = sand.u32 %s292, 1
        %s776 = smul.addr %s775, 32
        %s777 = scalar_lea.vmem [#allocation9], %s776
        // Predicated region
        $region113: #{tpu_custom_call.1} parent=99 // pred_check
          %p778 = pneg %p305
        $region114: #{tpu_custom_call.1} parent=99 // pred_check_branch
          %780 = sbr.rel (%p778) target = $region116
        $region115: #{tpu_custom_call.1} parent=99 // pred_region
          %781 = dma.done %s774, 512
        $region116: #{tpu_custom_call.1} parent=99 // pred_fallthru
          _
        %p782 = pneg %p50
        %p783 = pneg %p47
        %p784 = pneg %p71
        %p785 = pneg %p68
        %p786 = scmp.lt.s32.totalorder %s34, 1
        %s787 = scalar_select %p786, %s34, 1
        %s788 = smul.addr %s787, 4
        %s789 = smul.addr %s788, 8
        %s790 = scalar_lea.vmem %s2, %s789
        %p791 = pneg %p97
        %p792 = pneg %p94
        %p793 = scmp.lt.s32.totalorder %s34, 1
        %s794 = scalar_select %p793, %s34, 1
        %s795 = scalar_lea.vmem %s3, %s794
        %p796 = pneg %p123
        %p797 = pneg %p120
        %p798 = scmp.lt.s32.totalorder %s34, 1
        %s799 = scalar_select %p798, %s34, 1
        %s800 = smul.addr %s799, 4
        %s801 = smul.addr %s800, 8
        %s802 = scalar_lea.vmem %s4, %s801
        %p803 = pneg %p149
        %p804 = pneg %p146
        %p805 = scmp.lt.s32.totalorder %s34, 1
        %s806 = scalar_select %p805, %s34, 1
        %s807 = scalar_lea.vmem %s5, %s806
        %p808 = pneg %p175
        %p809 = pneg %p172
        %p810 = scmp.lt.s32.totalorder %s34, 1
        %s811 = scalar_select %p810, %s34, 1
        %s812 = smul.addr %s811, 4
        %s813 = smul.addr %s812, 8
        %s814 = scalar_lea.vmem %s6, %s813
        %p815 = pneg %p201
        %p816 = pneg %p198
        %p817 = scmp.lt.s32.totalorder %s34, 1
        %s818 = scalar_select %p817, %s34, 1
        %s819 = scalar_lea.vmem %s7, %s818
        %p820 = pneg %p227
        %p821 = pneg %p224
        %s822 = sand.u32 %s34, 1
        %s823 = scalar_lea.sflag [#allocation4], %s822
        %s824 = sand.u32 %s240, 1
        %s825 = smul.addr %s824, 32
        %s826 = scalar_lea.vmem [#allocation8], %s825
        %p827 = pneg %p253
        %p828 = pneg %p250
        %p829 = scmp.lt.s32.totalorder %s34, 1
        %s830 = scalar_select %p829, %s34, 1
        %s831 = scalar_lea.vmem %s9, %s830
        %p832 = pneg %p279
        %p833 = pneg %p276
        %s834 = sand.u32 %s34, 1
        %s835 = scalar_lea.sflag [#allocation4], %s834
        %s836 = sand.u32 %s292, 1
        %s837 = smul.addr %s836, 32
        %s838 = scalar_lea.vmem [#allocation9], %s837
        %p839 = pneg %p305
        %p840 = pneg %p302
        %p841 = scmp.lt.s32.totalorder %s34, 1
        %s842 = scalar_select %p841, %s34, 1
        %s843 = scalar_lea.vmem %s11, %s842
        %p844 = pneg %p331
        %p845 = pneg %p328
        %p846 = scmp.lt.s32.totalorder %s34, 1
        %s847 = scalar_select %p846, %s34, 1
        %s848 = smul.addr %s847, 8
        %s849 = smul.addr %s848, 8
        %s850 = scalar_lea.vmem %s12, %s849
        %p851 = pneg %p357
        %p852 = pneg %p354
        %p853 = scmp.lt.s32.totalorder %s34, 1
        %s854 = scalar_select %p853, %s34, 1
        %s855 = scalar_lea.vmem %s13, %s854
        %p856 = pneg %p383
        %p857 = pneg %p380
        %p858 = scmp.lt.s32.totalorder %s34, 1
        %s859 = scalar_select %p858, %s34, 1
        %s860 = scalar_lea.vmem %s14, %s859
        %p861 = pneg %p409
        %p862 = pneg %p406
        %p863 = scmp.lt.s32.totalorder %s34, 1
        %s864 = scalar_select %p863, %s34, 1
        %s865 = scalar_lea.vmem %s15, %s864
        %p866 = pneg %p435
        %p867 = pneg %p432
        %p868 = scmp.lt.s32.totalorder %s34, 1
        %s869 = scalar_select %p868, %s34, 1
        %s870 = scalar_lea.vmem %s16, %s869
        %p871 = pneg %p461
        %p872 = pneg %p458
        %p873 = scmp.lt.s32.totalorder %s34, 1
        %s874 = scalar_select %p873, %s34, 1
        %s875 = scalar_lea.vmem %s17, %s874
        %p876 = pneg %p487
        %p877 = pneg %p484
        %p878 = scmp.lt.s32.totalorder %s34, 1
        %s879 = scalar_select %p878, %s34, 1
        %s880 = scalar_lea.vmem %s18, %s879
        %p881 = pneg %p513
        %p882 = pneg %p510
        %p883 = scmp.lt.s32.totalorder %s34, 1
        %s884 = scalar_select %p883, %s34, 1
        %s885 = scalar_lea.vmem %s19, %s884
        %p886 = pneg %p539
        %p887 = pneg %p536
        %p888 = pneg %p560
        %p889 = pneg %p557
        %p890 = scmp.lt.s32.totalorder %s34, 1
        %s891 = scalar_select %p890, %s34, 1
        %s892 = smul.addr %s891, 4
        %s893 = smul.addr %s892, 8
        %s894 = scalar_lea.vmem %s2, %s893
        %p895 = scmp.lt.s32.totalorder %s34, 1
        %s896 = scalar_select %p895, %s34, 1
        %s897 = scalar_lea.vmem %s3, %s896
        %p898 = scmp.lt.s32.totalorder %s34, 1
        %s899 = scalar_select %p898, %s34, 1
        %s900 = smul.addr %s899, 4
        %s901 = smul.addr %s900, 8
        %s902 = scalar_lea.vmem %s4, %s901
        %p903 = scmp.lt.s32.totalorder %s34, 1
        %s904 = scalar_select %p903, %s34, 1
        %s905 = scalar_lea.vmem %s5, %s904
        %p906 = scmp.lt.s32.totalorder %s34, 1
        %s907 = scalar_select %p906, %s34, 1
        %s908 = smul.addr %s907, 4
        %s909 = smul.addr %s908, 8
        %s910 = scalar_lea.vmem %s6, %s909
        %p911 = scmp.lt.s32.totalorder %s34, 1
        %s912 = scalar_select %p911, %s34, 1
        %s913 = scalar_lea.vmem %s7, %s912
        %p914 = scmp.lt.s32.totalorder %s34, 1
        %s915 = scalar_select %p914, %s34, 1
        %s916 = scalar_lea.vmem %s9, %s915
        %p917 = scmp.lt.s32.totalorder %s34, 1
        %s918 = scalar_select %p917, %s34, 1
        %s919 = scalar_lea.vmem %s11, %s918
        %p920 = scmp.lt.s32.totalorder %s34, 1
        %s921 = scalar_select %p920, %s34, 1
        %s922 = smul.addr %s921, 8
        %s923 = smul.addr %s922, 8
        %s924 = scalar_lea.vmem %s12, %s923
        %p925 = scmp.lt.s32.totalorder %s34, 1
        %s926 = scalar_select %p925, %s34, 1
        %s927 = scalar_lea.vmem %s13, %s926
        %p928 = scmp.lt.s32.totalorder %s34, 1
        %s929 = scalar_select %p928, %s34, 1
        %s930 = scalar_lea.vmem %s14, %s929
        %p931 = scmp.lt.s32.totalorder %s34, 1
        %s932 = scalar_select %p931, %s34, 1
        %s933 = scalar_lea.vmem %s15, %s932
        %p934 = scmp.lt.s32.totalorder %s34, 1
        %s935 = scalar_select %p934, %s34, 1
        %s936 = scalar_lea.vmem %s16, %s935
        %p937 = scmp.lt.s32.totalorder %s34, 1
        %s938 = scalar_select %p937, %s34, 1
        %s939 = scalar_lea.vmem %s17, %s938
        %p940 = scmp.lt.s32.totalorder %s34, 1
        %s941 = scalar_select %p940, %s34, 1
        %s942 = scalar_lea.vmem %s18, %s941
        %p943 = scmp.lt.s32.totalorder %s34, 1
        %s944 = scalar_select %p943, %s34, 1
        %s945 = scalar_lea.vmem %s19, %s944
        %p946 = scmp.eq.s32.totalorder %s34, 0
        // Predicated region
        $region117: #{tpu_custom_call.1} parent=99 // pred_check
          %p947 = pneg %p946
        $region118: #{tpu_custom_call.1} parent=99 // pred_check_branch
          %949 = sbr.rel (%p947) target = $region120
        $region119: #{tpu_custom_call.1} parent=99 // pred_region
          %v950 = vld [vmem:[#allocation3] sm:$0xff]
          %vm951 = vcmask 261120
          %952 = vst.msk [vmem:[#allocation2] sm:$0xff] %vm951, %v950
          %953 = vst.msk [vmem:[#allocation2 + $0x8] sm:$0xff] %vm951, %v950
        $region120: #{tpu_custom_call.1} parent=99 // pred_fallthru
          _
        %v954 = vld [vmem:[#allocation2] sm:$0xff]
        %v955 = vld [vmem:[#allocation2 + $0x8] sm:$0xff]
        %v956 = vld [vmem:[#allocation6] sm:$0xff]
        %v957 = vld [vmem:[#allocation6 + $0x8] sm:$0xff]
        %v958 = vld [vmem:[%s894] sm:$0xff]
        %v959 = vld [vmem:[%s894 + $0x8] sm:$0xff]
        %v960 = vld [vmem:[%s894 + $0x10] sm:$0xff]
        %v961 = vld [vmem:[%s894 + $0x18] sm:$0xff]
        %v962 = vld [vmem:[%s897] sm:$0x1]
        %v964 = vlaneseq
        %v965 = vshrl.u32 %v964, 7
        %v966 = vsub.s32 0, %v965
        %v967 = vrot.slane %v962, %v966
        %vm969 = vcmask 261120
        %v971 = vsel %vm969, %v954, 0
        %v974 = vsel %vm969, %v955, 0
        %976 = vmatprep.subr.mxu0 0.0
        %977 = vmatpush1.msra.mxu0 %v958
        %978 = vmatprep.subr.mxu0 0.0
        %979 = vmatpush1.msra.mxu0 %v959
        %980 = vmatprep.subr.mxu0 0.0
        %981 = vmatpush1.msra.mxu0 %v960
        %982 = vmatprep.subr.mxu0 0.0
        %983 = vmatpush1.msra.mxu0 %v961
        %984 = vmatprep.subr.mxu0 0.0
        %985 = vmatpush1.msra.mxu0 0.0
        %986 = vmatprep.subr.mxu0 0.0
        %987 = vmatpush1.msra.mxu0 0.0
        %988 = vmatprep.subr.mxu0 0.0
        %989 = vmatpush1.msra.mxu0 0.0
        %990 = vmatprep.subr.mxu0 0.0
        %991 = vmatpush1.msra.mxu0 0.0
        %992 = vmatprep.subr.mxu0 0.0
        %993 = vmatpush1.msra.mxu0 0.0
        %994 = vmatprep.subr.mxu0 0.0
        %995 = vmatpush1.msra.mxu0 0.0
        %996 = vmatprep.subr.mxu0 0.0
        %997 = vmatpush1.msra.mxu0 0.0
        %998 = vmatprep.subr.mxu0 0.0
        %999 = vmatpush1.msra.mxu0 0.0
        %1000 = vmatprep.subr.mxu0 0.0
        %1001 = vmatpush1.msra.mxu0 0.0
        %1002 = vmatprep.subr.mxu0 0.0
        %1003 = vmatpush1.msra.mxu0 0.0
        %1004 = vmatprep.subr.mxu0 0.0
        %1005 = vmatpush1.msra.mxu0 0.0
        %1006 = vmatprep.subr.mxu0 0.0
        %1007 = vmatpush1.msra.mxu0 0.0
        %1008 = vmatprep.subr.mxu0 0.0
        %1009 = vmatpush1.msra.mxu0 0.0
        %1010 = vmatprep.subr.mxu0 0.0
        %1011 = vmatpush1.msra.mxu0 0.0
        %1012 = vmatprep.subr.mxu0 0.0
        %1013 = vmatpush1.msra.mxu0 0.0
        %1014 = vmatprep.subr.mxu0 0.0
        %1015 = vmatpush1.msra.mxu0 0.0
        %1016 = vmatprep.subr.mxu0 0.0
        %1017 = vmatpush1.msra.mxu0 0.0
        %1018 = vmatprep.subr.mxu0 0.0
        %1019 = vmatpush1.msra.mxu0 0.0
        %1020 = vmatprep.subr.mxu0 0.0
        %1021 = vmatpush1.msra.mxu0 0.0
        %1022 = vmatprep.subr.mxu0 0.0
        %1023 = vmatpush1.msra.mxu0 0.0
        %1024 = vmatprep.subr.mxu0 0.0
        %1025 = vmatpush1.msra.mxu0 0.0
        %1026 = vmatprep.subr.mxu0 0.0
        %1027 = vmatpush1.msra.mxu0 0.0
        %1028 = vmatprep.subr.mxu0 0.0
        %1029 = vmatpush1.msra.mxu0 0.0
        %1030 = vmatprep.subr.mxu0 0.0
        %1031 = vmatpush1.msra.mxu0 0.0
        %1032 = vmatprep.subr.mxu0 0.0
        %1033 = vmatpush1.msra.mxu0 0.0
        %1034 = vmatprep.subr.mxu0 0.0
        %1035 = vmatpush1.msra.mxu0 0.0
        %1036 = vmatprep.subr.mxu0 0.0
        %1037 = vmatpush1.msra.mxu0 0.0
        %1038 = vmatprep.subr.mxu0 0.0
        %1039 = vmatpush1.msra.mxu0 0.0
        %1040 = vmatprep.mubr.f32.mxu0 0.0
        %1041 = vmatmul.mubr.f32.gmra.mrb[0].mxu0 %v971
        %v1042 = vpop.f32.mrb[0].mxu0
        %v1043 = vadd.f32 %v967, %v1042
        %v1044 = vpop.f32.mrb[0].mxu0
        %1045 = vmatprep.mubr.f32.mxu0 0.0
        %1046 = vmatmul.mubr.f32.gmra.mrb[0].mxu0 %v974
        %v1047 = vpop.f32.mrb[0].mxu0
        %v1048 = vadd.f32 %v967, %v1047
        %v1049 = vpop.f32.mrb[0].mxu0
        %1050 = vdwg.mxu0
        %v1051 = vld [vmem:[%s902] sm:$0xff]
        %v1052 = vld [vmem:[%s902 + $0x8] sm:$0xff]
        %v1053 = vld [vmem:[%s902 + $0x10] sm:$0xff]
        %v1054 = vld [vmem:[%s902 + $0x18] sm:$0xff]
        %v1055 = vld [vmem:[%s905] sm:$0x1]
        %v1057 = vlaneseq
        %v1058 = vshrl.u32 %v1057, 7
        %v1059 = vsub.s32 0, %v1058
        %v1060 = vrot.slane %v1055, %v1059
        %1063 = vrot.lane.b32.xlu0 %v1043, 96
        %v1064 = vpop.permute.xlu0 %1063
        %vm1065 = vcmask 64512
        %v1066 = vsel %vm1065, %v1043, 0
        %v1068 = vsel %vm1065, %v1064, 0
        %1070 = vmatprep.subr.mxu0 0.0
        %1071 = vmatpush1.xpose.msra.mxu0 %v1068
        %1072 = vmatprep.subr.mxu0 0.0
        %1073 = vmatpush1.xpose.msra.mxu0 0.0
        %1074 = vmatprep.subr.mxu0 0.0
        %1075 = vmatpush1.xpose.msra.mxu0 0.0
        %1076 = vmatprep.subr.mxu0 0.0
        %1077 = vmatpush1.xpose.msra.mxu0 0.0
        %1078 = vmatprep.subr.mxu0 0.0
        %1079 = vmatpush1.xpose.msra.mxu0 0.0
        %1080 = vmatprep.subr.mxu0 0.0
        %1081 = vmatpush1.xpose.msra.mxu0 0.0
        %1082 = vmatprep.subr.mxu0 0.0
        %1083 = vmatpush1.xpose.msra.mxu0 0.0
        %1084 = vmatprep.subr.mxu0 0.0
        %1085 = vmatpush1.xpose.msra.mxu0 0.0
        %1086 = vmatprep.subr.mxu0 0.0
        %1087 = vmatpush1.xpose.msra.mxu0 0.0
        %1088 = vmatprep.subr.mxu0 0.0
        %1089 = vmatpush1.xpose.msra.mxu0 0.0
        %1090 = vmatprep.subr.mxu0 0.0
        %1091 = vmatpush1.xpose.msra.mxu0 0.0
        %1092 = vmatprep.subr.mxu0 0.0
        %1093 = vmatpush1.xpose.msra.mxu0 0.0
        %1094 = vmatprep.subr.mxu0 0.0
        %1095 = vmatpush1.xpose.msra.mxu0 0.0
        %1096 = vmatprep.subr.mxu0 0.0
        %1097 = vmatpush1.xpose.msra.mxu0 0.0
        %1098 = vmatprep.subr.mxu0 0.0
        %1099 = vmatpush1.xpose.msra.mxu0 0.0
        %1100 = vmatprep.subr.mxu0 0.0
        %1101 = vmatpush1.xpose.msra.mxu0 0.0
        %1102 = vmatprep.subr.mxu0 0.0
        %1103 = vmatpush1.xpose.msra.mxu0 0.0
        %1104 = vmatprep.subr.mxu0 0.0
        %1105 = vmatpush1.xpose.msra.mxu0 0.0
        %1106 = vmatprep.subr.mxu0 0.0
        %1107 = vmatpush1.xpose.msra.mxu0 0.0
        %1108 = vmatprep.subr.mxu0 0.0
        %1109 = vmatpush1.xpose.msra.mxu0 0.0
        %1110 = vmatprep.subr.mxu0 0.0
        %1111 = vmatpush1.xpose.msra.mxu0 0.0
        %1112 = vmatprep.subr.mxu0 0.0
        %1113 = vmatpush1.xpose.msra.mxu0 0.0
        %1114 = vmatprep.subr.mxu0 0.0
        %1115 = vmatpush1.xpose.msra.mxu0 0.0
        %1116 = vmatprep.subr.mxu0 0.0
        %1117 = vmatpush1.xpose.msra.mxu0 0.0
        %1118 = vmatprep.subr.mxu0 0.0
        %1119 = vmatpush1.xpose.msra.mxu0 0.0
        %1120 = vmatprep.subr.mxu0 0.0
        %1121 = vmatpush1.xpose.msra.mxu0 0.0
        %1122 = vmatprep.subr.mxu0 0.0
        %1123 = vmatpush1.xpose.msra.mxu0 0.0
        %1124 = vmatprep.subr.mxu0 0.0
        %1125 = vmatpush1.xpose.msra.mxu0 0.0
        %1126 = vmatprep.subr.mxu0 0.0
        %1127 = vmatpush1.xpose.msra.mxu0 0.0
        %1128 = vmatprep.subr.mxu0 0.0
        %1129 = vmatpush1.xpose.msra.mxu0 0.0
        %1130 = vmatprep.subr.mxu0 0.0
        %1131 = vmatpush1.xpose.msra.mxu0 0.0
        %1132 = vmatprep.subr.mxu0 0.0
        %1133 = vmatpush1.xpose.msra.mxu0 0.0
        %1134 = vmatprep.mubr.f32.mxu0 0.0
        %1135 = vmatmul.mubr.f32.gmra.mrb[0].mxu0 %v1066
        %v1136 = vpop.f32.mrb[0].mxu0
        %v1137 = vadd.f32 0.0, %v1136
        %v1138 = vpop.f32.mrb[0].mxu0
        %1139 = vdwg.mxu0
        %1141 = vrot.lane.b32.xlu0 %v1048, 96
        %v1142 = vpop.permute.xlu0 %1141
        %v1143 = vsel %vm1065, %v1048, 0
        %v1145 = vsel %vm1065, %v1142, 0
        %1147 = vmatprep.subr.mxu0 0.0
        %1148 = vmatpush1.xpose.msra.mxu0 %v1145
        %1149 = vmatprep.subr.mxu0 0.0
        %1150 = vmatpush1.xpose.msra.mxu0 0.0
        %1151 = vmatprep.subr.mxu0 0.0
        %1152 = vmatpush1.xpose.msra.mxu0 0.0
        %1153 = vmatprep.subr.mxu0 0.0
        %1154 = vmatpush1.xpose.msra.mxu0 0.0
        %1155 = vmatprep.subr.mxu0 0.0
        %1156 = vmatpush1.xpose.msra.mxu0 0.0
        %1157 = vmatprep.subr.mxu0 0.0
        %1158 = vmatpush1.xpose.msra.mxu0 0.0
        %1159 = vmatprep.subr.mxu0 0.0
        %1160 = vmatpush1.xpose.msra.mxu0 0.0
        %1161 = vmatprep.subr.mxu0 0.0
        %1162 = vmatpush1.xpose.msra.mxu0 0.0
        %1163 = vmatprep.subr.mxu0 0.0
        %1164 = vmatpush1.xpose.msra.mxu0 0.0
        %1165 = vmatprep.subr.mxu0 0.0
        %1166 = vmatpush1.xpose.msra.mxu0 0.0
        %1167 = vmatprep.subr.mxu0 0.0
        %1168 = vmatpush1.xpose.msra.mxu0 0.0
        %1169 = vmatprep.subr.mxu0 0.0
        %1170 = vmatpush1.xpose.msra.mxu0 0.0
        %1171 = vmatprep.subr.mxu0 0.0
        %1172 = vmatpush1.xpose.msra.mxu0 0.0
        %1173 = vmatprep.subr.mxu0 0.0
        %1174 = vmatpush1.xpose.msra.mxu0 0.0
        %1175 = vmatprep.subr.mxu0 0.0
        %1176 = vmatpush1.xpose.msra.mxu0 0.0
        %1177 = vmatprep.subr.mxu0 0.0
        %1178 = vmatpush1.xpose.msra.mxu0 0.0
        %1179 = vmatprep.subr.mxu0 0.0
        %1180 = vmatpush1.xpose.msra.mxu0 0.0
        %1181 = vmatprep.subr.mxu0 0.0
        %1182 = vmatpush1.xpose.msra.mxu0 0.0
        %1183 = vmatprep.subr.mxu0 0.0
        %1184 = vmatpush1.xpose.msra.mxu0 0.0
        %1185 = vmatprep.subr.mxu0 0.0
        %1186 = vmatpush1.xpose.msra.mxu0 0.0
        %1187 = vmatprep.subr.mxu0 0.0
        %1188 = vmatpush1.xpose.msra.mxu0 0.0
        %1189 = vmatprep.subr.mxu0 0.0
        %1190 = vmatpush1.xpose.msra.mxu0 0.0
        %1191 = vmatprep.subr.mxu0 0.0
        %1192 = vmatpush1.xpose.msra.mxu0 0.0
        %1193 = vmatprep.subr.mxu0 0.0
        %1194 = vmatpush1.xpose.msra.mxu0 0.0
        %1195 = vmatprep.subr.mxu0 0.0
        %1196 = vmatpush1.xpose.msra.mxu0 0.0
        %1197 = vmatprep.subr.mxu0 0.0
        %1198 = vmatpush1.xpose.msra.mxu0 0.0
        %1199 = vmatprep.subr.mxu0 0.0
        %1200 = vmatpush1.xpose.msra.mxu0 0.0
        %1201 = vmatprep.subr.mxu0 0.0
        %1202 = vmatpush1.xpose.msra.mxu0 0.0
        %1203 = vmatprep.subr.mxu0 0.0
        %1204 = vmatpush1.xpose.msra.mxu0 0.0
        %1205 = vmatprep.subr.mxu0 0.0
        %1206 = vmatpush1.xpose.msra.mxu0 0.0
        %1207 = vmatprep.subr.mxu0 0.0
        %1208 = vmatpush1.xpose.msra.mxu0 0.0
        %1209 = vmatprep.subr.mxu0 0.0
        %1210 = vmatpush1.xpose.msra.mxu0 0.0
        %1211 = vmatprep.mubr.f32.mxu0 0.0
        %1212 = vmatmul.mubr.f32.gmra.mrb[0].mxu0 %v1143
        %v1213 = vpop.f32.mrb[0].mxu0
        %v1214 = vadd.f32 0.0, %v1213
        %v1215 = vpop.f32.mrb[0].mxu0
        %1216 = vdwg.mxu0
        %v1217 = vmul.f32 %v1137, 0.35355338
        %v1218 = vmul.f32 %v1214, 0.35355338
        %v1219 = vsel %vm1065, %v1217, -inf
        %1220 = vmax.xlane.f32.xlu0 %v1219
        %v1221 = vpop.xlane.xlu0 %1220
        %v1222 = vsel %vm1065, %v1218, -inf
        %1223 = vmax.xlane.f32.xlu0 %v1222
        %v1224 = vpop.xlane.xlu0 %1223
        %v1225 = vsub.f32 %v1217, %v1221
        %v1226 = vsub.f32 %v1218, %v1224
        %v1227 = vmul.f32 %v1225, 1.442695
        %v1228 = vpow.pop %v1227
        %v1229 = vmul.f32 %v1226, 1.442695
        %v1230 = vpow.pop %v1229
        %v1231 = vsel %vm1065, %v1228, 0.0
        %1232 = vadd.xlane.f32.xlu0 %v1231
        %v1233 = vpop.xlane.xlu0 %1232
        %v1234 = vsel %vm1065, %v1230, 0.0
        %1235 = vadd.xlane.f32.xlu0 %v1234
        %v1236 = vpop.xlane.xlu0 %1235
        %v1237 = vrcp.pop %v1233
        %v1238 = vrcp.pop %v1236
        %v1239 = vmul.f32 %v1228, %v1237
        %v1240 = vmul.f32 %v1230, %v1238
        %1241 = vrot.lane.b32.xlu0 %v1043, 64
        %v1242 = vpop.permute.xlu0 %1241
        %v1245 = vsel %vm1065, %v1239, 0
        %1247 = vmatprep.subr.mxu0 0.0
        %1248 = vmatpush1.msra.mxu0 %v1242
        %1249 = vmatprep.subr.mxu0 0.0
        %1250 = vmatpush1.msra.mxu0 0.0
        %1251 = vmatprep.subr.mxu0 0.0
        %1252 = vmatpush1.msra.mxu0 0.0
        %1253 = vmatprep.subr.mxu0 0.0
        %1254 = vmatpush1.msra.mxu0 0.0
        %1255 = vmatprep.subr.mxu0 0.0
        %1256 = vmatpush1.msra.mxu0 0.0
        %1257 = vmatprep.subr.mxu0 0.0
        %1258 = vmatpush1.msra.mxu0 0.0
        %1259 = vmatprep.subr.mxu0 0.0
        %1260 = vmatpush1.msra.mxu0 0.0
        %1261 = vmatprep.subr.mxu0 0.0
        %1262 = vmatpush1.msra.mxu0 0.0
        %1263 = vmatprep.subr.mxu0 0.0
        %1264 = vmatpush1.msra.mxu0 0.0
        %1265 = vmatprep.subr.mxu0 0.0
        %1266 = vmatpush1.msra.mxu0 0.0
        %1267 = vmatprep.subr.mxu0 0.0
        %1268 = vmatpush1.msra.mxu0 0.0
        %1269 = vmatprep.subr.mxu0 0.0
        %1270 = vmatpush1.msra.mxu0 0.0
        %1271 = vmatprep.subr.mxu0 0.0
        %1272 = vmatpush1.msra.mxu0 0.0
        %1273 = vmatprep.subr.mxu0 0.0
        %1274 = vmatpush1.msra.mxu0 0.0
        %1275 = vmatprep.subr.mxu0 0.0
        %1276 = vmatpush1.msra.mxu0 0.0
        %1277 = vmatprep.subr.mxu0 0.0
        %1278 = vmatpush1.msra.mxu0 0.0
        %1279 = vmatprep.subr.mxu0 0.0
        %1280 = vmatpush1.msra.mxu0 0.0
        %1281 = vmatprep.subr.mxu0 0.0
        %1282 = vmatpush1.msra.mxu0 0.0
        %1283 = vmatprep.subr.mxu0 0.0
        %1284 = vmatpush1.msra.mxu0 0.0
        %1285 = vmatprep.subr.mxu0 0.0
        %1286 = vmatpush1.msra.mxu0 0.0
        %1287 = vmatprep.subr.mxu0 0.0
        %1288 = vmatpush1.msra.mxu0 0.0
        %1289 = vmatprep.subr.mxu0 0.0
        %1290 = vmatpush1.msra.mxu0 0.0
        %1291 = vmatprep.subr.mxu0 0.0
        %1292 = vmatpush1.msra.mxu0 0.0
        %1293 = vmatprep.subr.mxu0 0.0
        %1294 = vmatpush1.msra.mxu0 0.0
        %1295 = vmatprep.subr.mxu0 0.0
        %1296 = vmatpush1.msra.mxu0 0.0
        %1297 = vmatprep.subr.mxu0 0.0
        %1298 = vmatpush1.msra.mxu0 0.0
        %1299 = vmatprep.subr.mxu0 0.0
        %1300 = vmatpush1.msra.mxu0 0.0
        %1301 = vmatprep.subr.mxu0 0.0
        %1302 = vmatpush1.msra.mxu0 0.0
        %1303 = vmatprep.subr.mxu0 0.0
        %1304 = vmatpush1.msra.mxu0 0.0
        %1305 = vmatprep.subr.mxu0 0.0
        %1306 = vmatpush1.msra.mxu0 0.0
        %1307 = vmatprep.subr.mxu0 0.0
        %1308 = vmatpush1.msra.mxu0 0.0
        %1309 = vmatprep.subr.mxu0 0.0
        %1310 = vmatpush1.msra.mxu0 0.0
        %1311 = vmatprep.mubr.f32.mxu0 0.0
        %1312 = vmatmul.mubr.f32.gmra.mrb[0].mxu0 %v1245
        %v1313 = vpop.f32.mrb[0].mxu0
        %v1314 = vadd.f32 0.0, %v1313
        %v1315 = vpop.f32.mrb[0].mxu0
        %1316 = vdwg.mxu0
        %1317 = vrot.lane.b32.xlu0 %v1048, 64
        %v1318 = vpop.permute.xlu0 %1317
        %v1321 = vsel %vm1065, %v1240, 0
        %1323 = vmatprep.subr.mxu0 0.0
        %1324 = vmatpush1.msra.mxu0 %v1318
        %1325 = vmatprep.subr.mxu0 0.0
        %1326 = vmatpush1.msra.mxu0 0.0
        %1327 = vmatprep.subr.mxu0 0.0
        %1328 = vmatpush1.msra.mxu0 0.0
        %1329 = vmatprep.subr.mxu0 0.0
        %1330 = vmatpush1.msra.mxu0 0.0
        %1331 = vmatprep.subr.mxu0 0.0
        %1332 = vmatpush1.msra.mxu0 0.0
        %1333 = vmatprep.subr.mxu0 0.0
        %1334 = vmatpush1.msra.mxu0 0.0
        %1335 = vmatprep.subr.mxu0 0.0
        %1336 = vmatpush1.msra.mxu0 0.0
        %1337 = vmatprep.subr.mxu0 0.0
        %1338 = vmatpush1.msra.mxu0 0.0
        %1339 = vmatprep.subr.mxu0 0.0
        %1340 = vmatpush1.msra.mxu0 0.0
        %1341 = vmatprep.subr.mxu0 0.0
        %1342 = vmatpush1.msra.mxu0 0.0
        %1343 = vmatprep.subr.mxu0 0.0
        %1344 = vmatpush1.msra.mxu0 0.0
        %1345 = vmatprep.subr.mxu0 0.0
        %1346 = vmatpush1.msra.mxu0 0.0
        %1347 = vmatprep.subr.mxu0 0.0
        %1348 = vmatpush1.msra.mxu0 0.0
        %1349 = vmatprep.subr.mxu0 0.0
        %1350 = vmatpush1.msra.mxu0 0.0
        %1351 = vmatprep.subr.mxu0 0.0
        %1352 = vmatpush1.msra.mxu0 0.0
        %1353 = vmatprep.subr.mxu0 0.0
        %1354 = vmatpush1.msra.mxu0 0.0
        %1355 = vmatprep.subr.mxu0 0.0
        %1356 = vmatpush1.msra.mxu0 0.0
        %1357 = vmatprep.subr.mxu0 0.0
        %1358 = vmatpush1.msra.mxu0 0.0
        %1359 = vmatprep.subr.mxu0 0.0
        %1360 = vmatpush1.msra.mxu0 0.0
        %1361 = vmatprep.subr.mxu0 0.0
        %1362 = vmatpush1.msra.mxu0 0.0
        %1363 = vmatprep.subr.mxu0 0.0
        %1364 = vmatpush1.msra.mxu0 0.0
        %1365 = vmatprep.subr.mxu0 0.0
        %1366 = vmatpush1.msra.mxu0 0.0
        %1367 = vmatprep.subr.mxu0 0.0
        %1368 = vmatpush1.msra.mxu0 0.0
        %1369 = vmatprep.subr.mxu0 0.0
        %1370 = vmatpush1.msra.mxu0 0.0
        %1371 = vmatprep.subr.mxu0 0.0
        %1372 = vmatpush1.msra.mxu0 0.0
        %1373 = vmatprep.subr.mxu0 0.0
        %1374 = vmatpush1.msra.mxu0 0.0
        %1375 = vmatprep.subr.mxu0 0.0
        %1376 = vmatpush1.msra.mxu0 0.0
        %1377 = vmatprep.subr.mxu0 0.0
        %1378 = vmatpush1.msra.mxu0 0.0
        %1379 = vmatprep.subr.mxu0 0.0
        %1380 = vmatpush1.msra.mxu0 0.0
        %1381 = vmatprep.subr.mxu0 0.0
        %1382 = vmatpush1.msra.mxu0 0.0
        %1383 = vmatprep.subr.mxu0 0.0
        %1384 = vmatpush1.msra.mxu0 0.0
        %1385 = vmatprep.subr.mxu0 0.0
        %1386 = vmatpush1.msra.mxu0 0.0
        %1387 = vmatprep.mubr.f32.mxu0 0.0
        %1388 = vmatmul.mubr.f32.gmra.mrb[0].mxu0 %v1321
        %v1389 = vpop.f32.mrb[0].mxu0
        %v1390 = vadd.f32 0.0, %v1389
        %v1391 = vpop.f32.mrb[0].mxu0
        %1392 = vdwg.mxu0
        %v1394 = vsel %vm1065, %v1314, 0
        %v1397 = vsel %vm1065, %v1390, 0
        %1399 = vmatprep.subr.mxu0 0.0
        %1400 = vmatpush1.msra.mxu0 %v1051
        %1401 = vmatprep.subr.mxu0 0.0
        %1402 = vmatpush1.msra.mxu0 0.0
        %1403 = vmatprep.subr.mxu0 0.0
        %1404 = vmatpush1.msra.mxu0 0.0
        %1405 = vmatprep.subr.mxu0 0.0
        %1406 = vmatpush1.msra.mxu0 0.0
        %1407 = vmatprep.subr.mxu0 0.0
        %1408 = vmatpush1.msra.mxu0 0.0
        %1409 = vmatprep.subr.mxu0 0.0
        %1410 = vmatpush1.msra.mxu0 0.0
        %1411 = vmatprep.subr.mxu0 0.0
        %1412 = vmatpush1.msra.mxu0 0.0
        %1413 = vmatprep.subr.mxu0 0.0
        %1414 = vmatpush1.msra.mxu0 0.0
        %1415 = vmatprep.subr.mxu0 0.0
        %1416 = vmatpush1.msra.mxu0 0.0
        %1417 = vmatprep.subr.mxu0 0.0
        %1418 = vmatpush1.msra.mxu0 0.0
        %1419 = vmatprep.subr.mxu0 0.0
        %1420 = vmatpush1.msra.mxu0 0.0
        %1421 = vmatprep.subr.mxu0 0.0
        %1422 = vmatpush1.msra.mxu0 0.0
        %1423 = vmatprep.subr.mxu0 0.0
        %1424 = vmatpush1.msra.mxu0 0.0
        %1425 = vmatprep.subr.mxu0 0.0
        %1426 = vmatpush1.msra.mxu0 0.0
        %1427 = vmatprep.subr.mxu0 0.0
        %1428 = vmatpush1.msra.mxu0 0.0
        %1429 = vmatprep.subr.mxu0 0.0
        %1430 = vmatpush1.msra.mxu0 0.0
        %1431 = vmatprep.subr.mxu0 0.0
        %1432 = vmatpush1.msra.mxu0 0.0
        %1433 = vmatprep.subr.mxu0 0.0
        %1434 = vmatpush1.msra.mxu0 0.0
        %1435 = vmatprep.subr.mxu0 0.0
        %1436 = vmatpush1.msra.mxu0 0.0
        %1437 = vmatprep.subr.mxu0 0.0
        %1438 = vmatpush1.msra.mxu0 0.0
        %1439 = vmatprep.subr.mxu0 0.0
        %1440 = vmatpush1.msra.mxu0 0.0
        %1441 = vmatprep.subr.mxu0 0.0
        %1442 = vmatpush1.msra.mxu0 0.0
        %1443 = vmatprep.subr.mxu0 0.0
        %1444 = vmatpush1.msra.mxu0 0.0
        %1445 = vmatprep.subr.mxu0 0.0
        %1446 = vmatpush1.msra.mxu0 0.0
        %1447 = vmatprep.subr.mxu0 0.0
        %1448 = vmatpush1.msra.mxu0 0.0
        %1449 = vmatprep.subr.mxu0 0.0
        %1450 = vmatpush1.msra.mxu0 0.0
        %1451 = vmatprep.subr.mxu0 0.0
        %1452 = vmatpush1.msra.mxu0 0.0
        %1453 = vmatprep.subr.mxu0 0.0
        %1454 = vmatpush1.msra.mxu0 0.0
        %1455 = vmatprep.subr.mxu0 0.0
        %1456 = vmatpush1.msra.mxu0 0.0
        %1457 = vmatprep.subr.mxu0 0.0
        %1458 = vmatpush1.msra.mxu0 0.0
        %1459 = vmatprep.subr.mxu0 0.0
        %1460 = vmatpush1.msra.mxu0 0.0
        %1461 = vmatprep.subr.mxu0 0.0
        %1462 = vmatpush1.msra.mxu0 0.0
        %1463 = vmatprep.mubr.f32.mxu0 0.0
        %1464 = vmatmul.mubr.f32.gmra.mrb[0].mxu0 %v1394
        %v1465 = vpop.f32.mrb[0].mxu0
        %v1466 = vadd.f32 0.0, %v1465
        %v1467 = vpop.f32.mrb[0].mxu0
        %1468 = vmatprep.mubr.f32.mxu0 0.0
        %1469 = vmatmul.mubr.f32.gmra.mrb[0].mxu0 %v1397
        %v1470 = vpop.f32.mrb[0].mxu0
        %v1471 = vadd.f32 0.0, %v1470
        %v1472 = vpop.f32.mrb[0].mxu0
        %1473 = vdwg.mxu0
        %v1474 = vadd.f32 %v1060, %v1466
        %v1475 = vadd.f32 %v1060, %v1471
        %1476 = vrot.lane.b32.xlu0 %v1043, 120
        %v1477 = vpop.permute.xlu0 %1476
        %1478 = vrot.lane.b32.xlu0 %v1043, 88
        %v1479 = vpop.permute.xlu0 %1478
        %v1480 = vsel %vm1065, %v1477, 0
        %v1482 = vsel %vm1065, %v1479, 0
        %1484 = vmatprep.subr.mxu0 0.0
        %1485 = vmatpush1.xpose.msra.mxu0 %v1482
        %1486 = vmatprep.subr.mxu0 0.0
        %1487 = vmatpush1.xpose.msra.mxu0 0.0
        %1488 = vmatprep.subr.mxu0 0.0
        %1489 = vmatpush1.xpose.msra.mxu0 0.0
        %1490 = vmatprep.subr.mxu0 0.0
        %1491 = vmatpush1.xpose.msra.mxu0 0.0
        %1492 = vmatprep.subr.mxu0 0.0
        %1493 = vmatpush1.xpose.msra.mxu0 0.0
        %1494 = vmatprep.subr.mxu0 0.0
        %1495 = vmatpush1.xpose.msra.mxu0 0.0
        %1496 = vmatprep.subr.mxu0 0.0
        %1497 = vmatpush1.xpose.msra.mxu0 0.0
        %1498 = vmatprep.subr.mxu0 0.0
        %1499 = vmatpush1.xpose.msra.mxu0 0.0
        %1500 = vmatprep.subr.mxu0 0.0
        %1501 = vmatpush1.xpose.msra.mxu0 0.0
        %1502 = vmatprep.subr.mxu0 0.0
        %1503 = vmatpush1.xpose.msra.mxu0 0.0
        %1504 = vmatprep.subr.mxu0 0.0
        %1505 = vmatpush1.xpose.msra.mxu0 0.0
        %1506 = vmatprep.subr.mxu0 0.0
        %1507 = vmatpush1.xpose.msra.mxu0 0.0
        %1508 = vmatprep.subr.mxu0 0.0
        %1509 = vmatpush1.xpose.msra.mxu0 0.0
        %1510 = vmatprep.subr.mxu0 0.0
        %1511 = vmatpush1.xpose.msra.mxu0 0.0
        %1512 = vmatprep.subr.mxu0 0.0
        %1513 = vmatpush1.xpose.msra.mxu0 0.0
        %1514 = vmatprep.subr.mxu0 0.0
        %1515 = vmatpush1.xpose.msra.mxu0 0.0
        %1516 = vmatprep.subr.mxu0 0.0
        %1517 = vmatpush1.xpose.msra.mxu0 0.0
        %1518 = vmatprep.subr.mxu0 0.0
        %1519 = vmatpush1.xpose.msra.mxu0 0.0
        %1520 = vmatprep.subr.mxu0 0.0
        %1521 = vmatpush1.xpose.msra.mxu0 0.0
        %1522 = vmatprep.subr.mxu0 0.0
        %1523 = vmatpush1.xpose.msra.mxu0 0.0
        %1524 = vmatprep.subr.mxu0 0.0
        %1525 = vmatpush1.xpose.msra.mxu0 0.0
        %1526 = vmatprep.subr.mxu0 0.0
        %1527 = vmatpush1.xpose.msra.mxu0 0.0
        %1528 = vmatprep.subr.mxu0 0.0
        %1529 = vmatpush1.xpose.msra.mxu0 0.0
        %1530 = vmatprep.subr.mxu0 0.0
        %1531 = vmatpush1.xpose.msra.mxu0 0.0
        %1532 = vmatprep.subr.mxu0 0.0
        %1533 = vmatpush1.xpose.msra.mxu0 0.0
        %1534 = vmatprep.subr.mxu0 0.0
        %1535 = vmatpush1.xpose.msra.mxu0 0.0
        %1536 = vmatprep.subr.mxu0 0.0
        %1537 = vmatpush1.xpose.msra.mxu0 0.0
        %1538 = vmatprep.subr.mxu0 0.0
        %1539 = vmatpush1.xpose.msra.mxu0 0.0
        %1540 = vmatprep.subr.mxu0 0.0
        %1541 = vmatpush1.xpose.msra.mxu0 0.0
        %1542 = vmatprep.subr.mxu0 0.0
        %1543 = vmatpush1.xpose.msra.mxu0 0.0
        %1544 = vmatprep.subr.mxu0 0.0
        %1545 = vmatpush1.xpose.msra.mxu0 0.0
        %1546 = vmatprep.subr.mxu0 0.0
        %1547 = vmatpush1.xpose.msra.mxu0 0.0
        %1548 = vmatprep.mubr.f32.mxu0 0.0
        %1549 = vmatmul.mubr.f32.gmra.mrb[0].mxu0 %v1480
        %v1550 = vpop.f32.mrb[0].mxu0
        %v1551 = vadd.f32 0.0, %v1550
        %v1552 = vpop.f32.mrb[0].mxu0
        %1553 = vdwg.mxu0
        %1554 = vrot.lane.b32.xlu0 %v1048, 120
        %v1555 = vpop.permute.xlu0 %1554
        %1556 = vrot.lane.b32.xlu0 %v1048, 88
        %v1557 = vpop.permute.xlu0 %1556
        %v1558 = vsel %vm1065, %v1555, 0
        %v1560 = vsel %vm1065, %v1557, 0
        %1562 = vmatprep.subr.mxu0 0.0
        %1563 = vmatpush1.xpose.msra.mxu0 %v1560
        %1564 = vmatprep.subr.mxu0 0.0
        %1565 = vmatpush1.xpose.msra.mxu0 0.0
        %1566 = vmatprep.subr.mxu0 0.0
        %1567 = vmatpush1.xpose.msra.mxu0 0.0
        %1568 = vmatprep.subr.mxu0 0.0
        %1569 = vmatpush1.xpose.msra.mxu0 0.0
        %1570 = vmatprep.subr.mxu0 0.0
        %1571 = vmatpush1.xpose.msra.mxu0 0.0
        %1572 = vmatprep.subr.mxu0 0.0
        %1573 = vmatpush1.xpose.msra.mxu0 0.0
        %1574 = vmatprep.subr.mxu0 0.0
        %1575 = vmatpush1.xpose.msra.mxu0 0.0
        %1576 = vmatprep.subr.mxu0 0.0
        %1577 = vmatpush1.xpose.msra.mxu0 0.0
        %1578 = vmatprep.subr.mxu0 0.0
        %1579 = vmatpush1.xpose.msra.mxu0 0.0
        %1580 = vmatprep.subr.mxu0 0.0
        %1581 = vmatpush1.xpose.msra.mxu0 0.0
        %1582 = vmatprep.subr.mxu0 0.0
        %1583 = vmatpush1.xpose.msra.mxu0 0.0
        %1584 = vmatprep.subr.mxu0 0.0
        %1585 = vmatpush1.xpose.msra.mxu0 0.0
        %1586 = vmatprep.subr.mxu0 0.0
        %1587 = vmatpush1.xpose.msra.mxu0 0.0
        %1588 = vmatprep.subr.mxu0 0.0
        %1589 = vmatpush1.xpose.msra.mxu0 0.0
        %1590 = vmatprep.subr.mxu0 0.0
        %1591 = vmatpush1.xpose.msra.mxu0 0.0
        %1592 = vmatprep.subr.mxu0 0.0
        %1593 = vmatpush1.xpose.msra.mxu0 0.0
        %1594 = vmatprep.subr.mxu0 0.0
        %1595 = vmatpush1.xpose.msra.mxu0 0.0
        %1596 = vmatprep.subr.mxu0 0.0
        %1597 = vmatpush1.xpose.msra.mxu0 0.0
        %1598 = vmatprep.subr.mxu0 0.0
        %1599 = vmatpush1.xpose.msra.mxu0 0.0
        %1600 = vmatprep.subr.mxu0 0.0
        %1601 = vmatpush1.xpose.msra.mxu0 0.0
        %1602 = vmatprep.subr.mxu0 0.0
        %1603 = vmatpush1.xpose.msra.mxu0 0.0
        %1604 = vmatprep.subr.mxu0 0.0
        %1605 = vmatpush1.xpose.msra.mxu0 0.0
        %1606 = vmatprep.subr.mxu0 0.0
        %1607 = vmatpush1.xpose.msra.mxu0 0.0
        %1608 = vmatprep.subr.mxu0 0.0
        %1609 = vmatpush1.xpose.msra.mxu0 0.0
        %1610 = vmatprep.subr.mxu0 0.0
        %1611 = vmatpush1.xpose.msra.mxu0 0.0
        %1612 = vmatprep.subr.mxu0 0.0
        %1613 = vmatpush1.xpose.msra.mxu0 0.0
        %1614 = vmatprep.subr.mxu0 0.0
        %1615 = vmatpush1.xpose.msra.mxu0 0.0
        %1616 = vmatprep.subr.mxu0 0.0
        %1617 = vmatpush1.xpose.msra.mxu0 0.0
        %1618 = vmatprep.subr.mxu0 0.0
        %1619 = vmatpush1.xpose.msra.mxu0 0.0
        %1620 = vmatprep.subr.mxu0 0.0
        %1621 = vmatpush1.xpose.msra.mxu0 0.0
        %1622 = vmatprep.subr.mxu0 0.0
        %1623 = vmatpush1.xpose.msra.mxu0 0.0
        %1624 = vmatprep.subr.mxu0 0.0
        %1625 = vmatpush1.xpose.msra.mxu0 0.0
        %1626 = vmatprep.mubr.f32.mxu0 0.0
        %1627 = vmatmul.mubr.f32.gmra.mrb[0].mxu0 %v1558
        %v1628 = vpop.f32.mrb[0].mxu0
        %v1629 = vadd.f32 0.0, %v1628
        %v1630 = vpop.f32.mrb[0].mxu0
        %1631 = vdwg.mxu0
        %v1632 = vmul.f32 %v1551, 0.35355338
        %v1633 = vmul.f32 %v1629, 0.35355338
        %v1634 = vsel %vm1065, %v1632, -inf
        %1635 = vmax.xlane.f32.xlu0 %v1634
        %v1636 = vpop.xlane.xlu0 %1635
        %v1637 = vsel %vm1065, %v1633, -inf
        %1638 = vmax.xlane.f32.xlu0 %v1637
        %v1639 = vpop.xlane.xlu0 %1638
        %v1640 = vsub.f32 %v1632, %v1636
        %v1641 = vsub.f32 %v1633, %v1639
        %v1642 = vmul.f32 %v1640, 1.442695
        %v1643 = vpow.pop %v1642
        %v1644 = vmul.f32 %v1641, 1.442695
        %v1645 = vpow.pop %v1644
        %v1646 = vsel %vm1065, %v1643, 0.0
        %1647 = vadd.xlane.f32.xlu0 %v1646
        %v1648 = vpop.xlane.xlu0 %1647
        %v1649 = vsel %vm1065, %v1645, 0.0
        %1650 = vadd.xlane.f32.xlu0 %v1649
        %v1651 = vpop.xlane.xlu0 %1650
        %v1652 = vrcp.pop %v1648
        %v1653 = vrcp.pop %v1651
        %v1654 = vmul.f32 %v1643, %v1652
        %v1655 = vmul.f32 %v1645, %v1653
        %1656 = vrot.lane.b32.xlu0 %v1043, 56
        %v1657 = vpop.permute.xlu0 %1656
        %v1660 = vsel %vm1065, %v1654, 0
        %1662 = vmatprep.subr.mxu0 0.0
        %1663 = vmatpush1.msra.mxu0 %v1657
        %1664 = vmatprep.subr.mxu0 0.0
        %1665 = vmatpush1.msra.mxu0 0.0
        %1666 = vmatprep.subr.mxu0 0.0
        %1667 = vmatpush1.msra.mxu0 0.0
        %1668 = vmatprep.subr.mxu0 0.0
        %1669 = vmatpush1.msra.mxu0 0.0
        %1670 = vmatprep.subr.mxu0 0.0
        %1671 = vmatpush1.msra.mxu0 0.0
        %1672 = vmatprep.subr.mxu0 0.0
        %1673 = vmatpush1.msra.mxu0 0.0
        %1674 = vmatprep.subr.mxu0 0.0
        %1675 = vmatpush1.msra.mxu0 0.0
        %1676 = vmatprep.subr.mxu0 0.0
        %1677 = vmatpush1.msra.mxu0 0.0
        %1678 = vmatprep.subr.mxu0 0.0
        %1679 = vmatpush1.msra.mxu0 0.0
        %1680 = vmatprep.subr.mxu0 0.0
        %1681 = vmatpush1.msra.mxu0 0.0
        %1682 = vmatprep.subr.mxu0 0.0
        %1683 = vmatpush1.msra.mxu0 0.0
        %1684 = vmatprep.subr.mxu0 0.0
        %1685 = vmatpush1.msra.mxu0 0.0
        %1686 = vmatprep.subr.mxu0 0.0
        %1687 = vmatpush1.msra.mxu0 0.0
        %1688 = vmatprep.subr.mxu0 0.0
        %1689 = vmatpush1.msra.mxu0 0.0
        %1690 = vmatprep.subr.mxu0 0.0
        %1691 = vmatpush1.msra.mxu0 0.0
        %1692 = vmatprep.subr.mxu0 0.0
        %1693 = vmatpush1.msra.mxu0 0.0
        %1694 = vmatprep.subr.mxu0 0.0
        %1695 = vmatpush1.msra.mxu0 0.0
        %1696 = vmatprep.subr.mxu0 0.0
        %1697 = vmatpush1.msra.mxu0 0.0
        %1698 = vmatprep.subr.mxu0 0.0
        %1699 = vmatpush1.msra.mxu0 0.0
        %1700 = vmatprep.subr.mxu0 0.0
        %1701 = vmatpush1.msra.mxu0 0.0
        %1702 = vmatprep.subr.mxu0 0.0
        %1703 = vmatpush1.msra.mxu0 0.0
        %1704 = vmatprep.subr.mxu0 0.0
        %1705 = vmatpush1.msra.mxu0 0.0
        %1706 = vmatprep.subr.mxu0 0.0
        %1707 = vmatpush1.msra.mxu0 0.0
        %1708 = vmatprep.subr.mxu0 0.0
        %1709 = vmatpush1.msra.mxu0 0.0
        %1710 = vmatprep.subr.mxu0 0.0
        %1711 = vmatpush1.msra.mxu0 0.0
        %1712 = vmatprep.subr.mxu0 0.0
        %1713 = vmatpush1.msra.mxu0 0.0
        %1714 = vmatprep.subr.mxu0 0.0
        %1715 = vmatpush1.msra.mxu0 0.0
        %1716 = vmatprep.subr.mxu0 0.0
        %1717 = vmatpush1.msra.mxu0 0.0
        %1718 = vmatprep.subr.mxu0 0.0
        %1719 = vmatpush1.msra.mxu0 0.0
        %1720 = vmatprep.subr.mxu0 0.0
        %1721 = vmatpush1.msra.mxu0 0.0
        %1722 = vmatprep.subr.mxu0 0.0
        %1723 = vmatpush1.msra.mxu0 0.0
        %1724 = vmatprep.subr.mxu0 0.0
        %1725 = vmatpush1.msra.mxu0 0.0
        %1726 = vmatprep.mubr.f32.mxu0 0.0
        %1727 = vmatmul.mubr.f32.gmra.mrb[0].mxu0 %v1660
        %v1728 = vpop.f32.mrb[0].mxu0
        %v1729 = vadd.f32 0.0, %v1728
        %v1730 = vpop.f32.mrb[0].mxu0
        %1731 = vdwg.mxu0
        %1732 = vrot.lane.b32.xlu0 %v1048, 56
        %v1733 = vpop.permute.xlu0 %1732
        %v1736 = vsel %vm1065, %v1655, 0
        %1738 = vmatprep.subr.mxu0 0.0
        %1739 = vmatpush1.msra.mxu0 %v1733
        %1740 = vmatprep.subr.mxu0 0.0
        %1741 = vmatpush1.msra.mxu0 0.0
        %1742 = vmatprep.subr.mxu0 0.0
        %1743 = vmatpush1.msra.mxu0 0.0
        %1744 = vmatprep.subr.mxu0 0.0
        %1745 = vmatpush1.msra.mxu0 0.0
        %1746 = vmatprep.subr.mxu0 0.0
        %1747 = vmatpush1.msra.mxu0 0.0
        %1748 = vmatprep.subr.mxu0 0.0
        %1749 = vmatpush1.msra.mxu0 0.0
        %1750 = vmatprep.subr.mxu0 0.0
        %1751 = vmatpush1.msra.mxu0 0.0
        %1752 = vmatprep.subr.mxu0 0.0
        %1753 = vmatpush1.msra.mxu0 0.0
        %1754 = vmatprep.subr.mxu0 0.0
        %1755 = vmatpush1.msra.mxu0 0.0
        %1756 = vmatprep.subr.mxu0 0.0
        %1757 = vmatpush1.msra.mxu0 0.0
        %1758 = vmatprep.subr.mxu0 0.0
        %1759 = vmatpush1.msra.mxu0 0.0
        %1760 = vmatprep.subr.mxu0 0.0
        %1761 = vmatpush1.msra.mxu0 0.0
        %1762 = vmatprep.subr.mxu0 0.0
        %1763 = vmatpush1.msra.mxu0 0.0
        %1764 = vmatprep.subr.mxu0 0.0
        %1765 = vmatpush1.msra.mxu0 0.0
        %1766 = vmatprep.subr.mxu0 0.0
        %1767 = vmatpush1.msra.mxu0 0.0
        %1768 = vmatprep.subr.mxu0 0.0
        %1769 = vmatpush1.msra.mxu0 0.0
        %1770 = vmatprep.subr.mxu0 0.0
        %1771 = vmatpush1.msra.mxu0 0.0
        %1772 = vmatprep.subr.mxu0 0.0
        %1773 = vmatpush1.msra.mxu0 0.0
        %1774 = vmatprep.subr.mxu0 0.0
        %1775 = vmatpush1.msra.mxu0 0.0
        %1776 = vmatprep.subr.mxu0 0.0
        %1777 = vmatpush1.msra.mxu0 0.0
        %1778 = vmatprep.subr.mxu0 0.0
        %1779 = vmatpush1.msra.mxu0 0.0
        %1780 = vmatprep.subr.mxu0 0.0
        %1781 = vmatpush1.msra.mxu0 0.0
        %1782 = vmatprep.subr.mxu0 0.0
        %1783 = vmatpush1.msra.mxu0 0.0
        %1784 = vmatprep.subr.mxu0 0.0
        %1785 = vmatpush1.msra.mxu0 0.0
        %1786 = vmatprep.subr.mxu0 0.0
        %1787 = vmatpush1.msra.mxu0 0.0
        %1788 = vmatprep.subr.mxu0 0.0
        %1789 = vmatpush1.msra.mxu0 0.0
        %1790 = vmatprep.subr.mxu0 0.0
        %1791 = vmatpush1.msra.mxu0 0.0
        %1792 = vmatprep.subr.mxu0 0.0
        %1793 = vmatpush1.msra.mxu0 0.0
        %1794 = vmatprep.subr.mxu0 0.0
        %1795 = vmatpush1.msra.mxu0 0.0
        %1796 = vmatprep.subr.mxu0 0.0
        %1797 = vmatpush1.msra.mxu0 0.0
        %1798 = vmatprep.subr.mxu0 0.0
        %1799 = vmatpush1.msra.mxu0 0.0
        %1800 = vmatprep.subr.mxu0 0.0
        %1801 = vmatpush1.msra.mxu0 0.0
        %1802 = vmatprep.mubr.f32.mxu0 0.0
        %1803 = vmatmul.mubr.f32.gmra.mrb[0].mxu0 %v1736
        %v1804 = vpop.f32.mrb[0].mxu0
        %v1805 = vadd.f32 0.0, %v1804
        %v1806 = vpop.f32.mrb[0].mxu0
        %1807 = vdwg.mxu0
        %v1809 = vsel %vm1065, %v1729, 0
        %v1812 = vsel %vm1065, %v1805, 0
        %1814 = vmatprep.subr.mxu0 0.0
        %1815 = vmatpush1.msra.mxu0 %v1052
        %1816 = vmatprep.subr.mxu0 0.0
        %1817 = vmatpush1.msra.mxu0 0.0
        %1818 = vmatprep.subr.mxu0 0.0
        %1819 = vmatpush1.msra.mxu0 0.0
        %1820 = vmatprep.subr.mxu0 0.0
        %1821 = vmatpush1.msra.mxu0 0.0
        %1822 = vmatprep.subr.mxu0 0.0
        %1823 = vmatpush1.msra.mxu0 0.0
        %1824 = vmatprep.subr.mxu0 0.0
        %1825 = vmatpush1.msra.mxu0 0.0
        %1826 = vmatprep.subr.mxu0 0.0
        %1827 = vmatpush1.msra.mxu0 0.0
        %1828 = vmatprep.subr.mxu0 0.0
        %1829 = vmatpush1.msra.mxu0 0.0
        %1830 = vmatprep.subr.mxu0 0.0
        %1831 = vmatpush1.msra.mxu0 0.0
        %1832 = vmatprep.subr.mxu0 0.0
        %1833 = vmatpush1.msra.mxu0 0.0
        %1834 = vmatprep.subr.mxu0 0.0
        %1835 = vmatpush1.msra.mxu0 0.0
        %1836 = vmatprep.subr.mxu0 0.0
        %1837 = vmatpush1.msra.mxu0 0.0
        %1838 = vmatprep.subr.mxu0 0.0
        %1839 = vmatpush1.msra.mxu0 0.0
        %1840 = vmatprep.subr.mxu0 0.0
        %1841 = vmatpush1.msra.mxu0 0.0
        %1842 = vmatprep.subr.mxu0 0.0
        %1843 = vmatpush1.msra.mxu0 0.0
        %1844 = vmatprep.subr.mxu0 0.0
        %1845 = vmatpush1.msra.mxu0 0.0
        %1846 = vmatprep.subr.mxu0 0.0
        %1847 = vmatpush1.msra.mxu0 0.0
        %1848 = vmatprep.subr.mxu0 0.0
        %1849 = vmatpush1.msra.mxu0 0.0
        %1850 = vmatprep.subr.mxu0 0.0
        %1851 = vmatpush1.msra.mxu0 0.0
        %1852 = vmatprep.subr.mxu0 0.0
        %1853 = vmatpush1.msra.mxu0 0.0
        %1854 = vmatprep.subr.mxu0 0.0
        %1855 = vmatpush1.msra.mxu0 0.0
        %1856 = vmatprep.subr.mxu0 0.0
        %1857 = vmatpush1.msra.mxu0 0.0
        %1858 = vmatprep.subr.mxu0 0.0
        %1859 = vmatpush1.msra.mxu0 0.0
        %1860 = vmatprep.subr.mxu0 0.0
        %1861 = vmatpush1.msra.mxu0 0.0
        %1862 = vmatprep.subr.mxu0 0.0
        %1863 = vmatpush1.msra.mxu0 0.0
        %1864 = vmatprep.subr.mxu0 0.0
        %1865 = vmatpush1.msra.mxu0 0.0
        %1866 = vmatprep.subr.mxu0 0.0
        %1867 = vmatpush1.msra.mxu0 0.0
        %1868 = vmatprep.subr.mxu0 0.0
        %1869 = vmatpush1.msra.mxu0 0.0
        %1870 = vmatprep.subr.mxu0 0.0
        %1871 = vmatpush1.msra.mxu0 0.0
        %1872 = vmatprep.subr.mxu0 0.0
        %1873 = vmatpush1.msra.mxu0 0.0
        %1874 = vmatprep.subr.mxu0 0.0
        %1875 = vmatpush1.msra.mxu0 0.0
        %1876 = vmatprep.subr.mxu0 0.0
        %1877 = vmatpush1.msra.mxu0 0.0
        %1878 = vmatprep.mubr.f32.mxu0 0.0
        %1879 = vmatmul.mubr.f32.gmra.mrb[0].mxu0 %v1809
        %v1880 = vpop.f32.mrb[0].mxu0
        %v1881 = vadd.f32 0.0, %v1880
        %v1882 = vpop.f32.mrb[0].mxu0
        %1883 = vmatprep.mubr.f32.mxu0 0.0
        %1884 = vmatmul.mubr.f32.gmra.mrb[0].mxu0 %v1812
        %v1885 = vpop.f32.mrb[0].mxu0
        %v1886 = vadd.f32 0.0, %v1885
        %v1887 = vpop.f32.mrb[0].mxu0
        %1888 = vdwg.mxu0
        %v1889 = vadd.f32 %v1474, %v1881
        %v1890 = vadd.f32 %v1475, %v1886
        %1891 = vrot.lane.b32.xlu0 %v1043, 112
        %v1892 = vpop.permute.xlu0 %1891
        %1893 = vrot.lane.b32.xlu0 %v1043, 80
        %v1894 = vpop.permute.xlu0 %1893
        %v1895 = vsel %vm1065, %v1892, 0
        %v1897 = vsel %vm1065, %v1894, 0
        %1899 = vmatprep.subr.mxu0 0.0
        %1900 = vmatpush1.xpose.msra.mxu0 %v1897
        %1901 = vmatprep.subr.mxu0 0.0
        %1902 = vmatpush1.xpose.msra.mxu0 0.0
        %1903 = vmatprep.subr.mxu0 0.0
        %1904 = vmatpush1.xpose.msra.mxu0 0.0
        %1905 = vmatprep.subr.mxu0 0.0
        %1906 = vmatpush1.xpose.msra.mxu0 0.0
        %1907 = vmatprep.subr.mxu0 0.0
        %1908 = vmatpush1.xpose.msra.mxu0 0.0
        %1909 = vmatprep.subr.mxu0 0.0
        %1910 = vmatpush1.xpose.msra.mxu0 0.0
        %1911 = vmatprep.subr.mxu0 0.0
        %1912 = vmatpush1.xpose.msra.mxu0 0.0
        %1913 = vmatprep.subr.mxu0 0.0
        %1914 = vmatpush1.xpose.msra.mxu0 0.0
        %1915 = vmatprep.subr.mxu0 0.0
        %1916 = vmatpush1.xpose.msra.mxu0 0.0
        %1917 = vmatprep.subr.mxu0 0.0
        %1918 = vmatpush1.xpose.msra.mxu0 0.0
        %1919 = vmatprep.subr.mxu0 0.0
        %1920 = vmatpush1.xpose.msra.mxu0 0.0
        %1921 = vmatprep.subr.mxu0 0.0
        %1922 = vmatpush1.xpose.msra.mxu0 0.0
        %1923 = vmatprep.subr.mxu0 0.0
        %1924 = vmatpush1.xpose.msra.mxu0 0.0
        %1925 = vmatprep.subr.mxu0 0.0
        %1926 = vmatpush1.xpose.msra.mxu0 0.0
        %1927 = vmatprep.subr.mxu0 0.0
        %1928 = vmatpush1.xpose.msra.mxu0 0.0
        %1929 = vmatprep.subr.mxu0 0.0
        %1930 = vmatpush1.xpose.msra.mxu0 0.0
        %1931 = vmatprep.subr.mxu0 0.0
        %1932 = vmatpush1.xpose.msra.mxu0 0.0
        %1933 = vmatprep.subr.mxu0 0.0
        %1934 = vmatpush1.xpose.msra.mxu0 0.0
        %1935 = vmatprep.subr.mxu0 0.0
        %1936 = vmatpush1.xpose.msra.mxu0 0.0
        %1937 = vmatprep.subr.mxu0 0.0
        %1938 = vmatpush1.xpose.msra.mxu0 0.0
        %1939 = vmatprep.subr.mxu0 0.0
        %1940 = vmatpush1.xpose.msra.mxu0 0.0
        %1941 = vmatprep.subr.mxu0 0.0
        %1942 = vmatpush1.xpose.msra.mxu0 0.0
        %1943 = vmatprep.subr.mxu0 0.0
        %1944 = vmatpush1.xpose.msra.mxu0 0.0
        %1945 = vmatprep.subr.mxu0 0.0
        %1946 = vmatpush1.xpose.msra.mxu0 0.0
        %1947 = vmatprep.subr.mxu0 0.0
        %1948 = vmatpush1.xpose.msra.mxu0 0.0
        %1949 = vmatprep.subr.mxu0 0.0
        %1950 = vmatpush1.xpose.msra.mxu0 0.0
        %1951 = vmatprep.subr.mxu0 0.0
        %1952 = vmatpush1.xpose.msra.mxu0 0.0
        %1953 = vmatprep.subr.mxu0 0.0
        %1954 = vmatpush1.xpose.msra.mxu0 0.0
        %1955 = vmatprep.subr.mxu0 0.0
        %1956 = vmatpush1.xpose.msra.mxu0 0.0
        %1957 = vmatprep.subr.mxu0 0.0
        %1958 = vmatpush1.xpose.msra.mxu0 0.0
        %1959 = vmatprep.subr.mxu0 0.0
        %1960 = vmatpush1.xpose.msra.mxu0 0.0
        %1961 = vmatprep.subr.mxu0 0.0
        %1962 = vmatpush1.xpose.msra.mxu0 0.0
        %1963 = vmatprep.mubr.f32.mxu0 0.0
        %1964 = vmatmul.mubr.f32.gmra.mrb[0].mxu0 %v1895
        %v1965 = vpop.f32.mrb[0].mxu0
        %v1966 = vadd.f32 0.0, %v1965
        %v1967 = vpop.f32.mrb[0].mxu0
        %1968 = vdwg.mxu0
        %1969 = vrot.lane.b32.xlu0 %v1048, 112
        %v1970 = vpop.permute.xlu0 %1969
        %1971 = vrot.lane.b32.xlu0 %v1048, 80
        %v1972 = vpop.permute.xlu0 %1971
        %v1973 = vsel %vm1065, %v1970, 0
        %v1975 = vsel %vm1065, %v1972, 0
        %1977 = vmatprep.subr.mxu0 0.0
        %1978 = vmatpush1.xpose.msra.mxu0 %v1975
        %1979 = vmatprep.subr.mxu0 0.0
        %1980 = vmatpush1.xpose.msra.mxu0 0.0
        %1981 = vmatprep.subr.mxu0 0.0
        %1982 = vmatpush1.xpose.msra.mxu0 0.0
        %1983 = vmatprep.subr.mxu0 0.0
        %1984 = vmatpush1.xpose.msra.mxu0 0.0
        %1985 = vmatprep.subr.mxu0 0.0
        %1986 = vmatpush1.xpose.msra.mxu0 0.0
        %1987 = vmatprep.subr.mxu0 0.0
        %1988 = vmatpush1.xpose.msra.mxu0 0.0
        %1989 = vmatprep.subr.mxu0 0.0
        %1990 = vmatpush1.xpose.msra.mxu0 0.0
        %1991 = vmatprep.subr.mxu0 0.0
        %1992 = vmatpush1.xpose.msra.mxu0 0.0
        %1993 = vmatprep.subr.mxu0 0.0
        %1994 = vmatpush1.xpose.msra.mxu0 0.0
        %1995 = vmatprep.subr.mxu0 0.0
        %1996 = vmatpush1.xpose.msra.mxu0 0.0
        %1997 = vmatprep.subr.mxu0 0.0
        %1998 = vmatpush1.xpose.msra.mxu0 0.0
        %1999 = vmatprep.subr.mxu0 0.0
        %2000 = vmatpush1.xpose.msra.mxu0 0.0
        %2001 = vmatprep.subr.mxu0 0.0
        %2002 = vmatpush1.xpose.msra.mxu0 0.0
        %2003 = vmatprep.subr.mxu0 0.0
        %2004 = vmatpush1.xpose.msra.mxu0 0.0
        %2005 = vmatprep.subr.mxu0 0.0
        %2006 = vmatpush1.xpose.msra.mxu0 0.0
        %2007 = vmatprep.subr.mxu0 0.0
        %2008 = vmatpush1.xpose.msra.mxu0 0.0
        %2009 = vmatprep.subr.mxu0 0.0
        %2010 = vmatpush1.xpose.msra.mxu0 0.0
        %2011 = vmatprep.subr.mxu0 0.0
        %2012 = vmatpush1.xpose.msra.mxu0 0.0
        %2013 = vmatprep.subr.mxu0 0.0
        %2014 = vmatpush1.xpose.msra.mxu0 0.0
        %2015 = vmatprep.subr.mxu0 0.0
        %2016 = vmatpush1.xpose.msra.mxu0 0.0
        %2017 = vmatprep.subr.mxu0 0.0
        %2018 = vmatpush1.xpose.msra.mxu0 0.0
        %2019 = vmatprep.subr.mxu0 0.0
        %2020 = vmatpush1.xpose.msra.mxu0 0.0
        %2021 = vmatprep.subr.mxu0 0.0
        %2022 = vmatpush1.xpose.msra.mxu0 0.0
        %2023 = vmatprep.subr.mxu0 0.0
        %2024 = vmatpush1.xpose.msra.mxu0 0.0
        %2025 = vmatprep.subr.mxu0 0.0
        %2026 = vmatpush1.xpose.msra.mxu0 0.0
        %2027 = vmatprep.subr.mxu0 0.0
        %2028 = vmatpush1.xpose.msra.mxu0 0.0
        %2029 = vmatprep.subr.mxu0 0.0
        %2030 = vmatpush1.xpose.msra.mxu0 0.0
        %2031 = vmatprep.subr.mxu0 0.0
        %2032 = vmatpush1.xpose.msra.mxu0 0.0
        %2033 = vmatprep.subr.mxu0 0.0
        %2034 = vmatpush1.xpose.msra.mxu0 0.0
        %2035 = vmatprep.subr.mxu0 0.0
        %2036 = vmatpush1.xpose.msra.mxu0 0.0
        %2037 = vmatprep.subr.mxu0 0.0
        %2038 = vmatpush1.xpose.msra.mxu0 0.0
        %2039 = vmatprep.subr.mxu0 0.0
        %2040 = vmatpush1.xpose.msra.mxu0 0.0
        %2041 = vmatprep.mubr.f32.mxu0 0.0
        %2042 = vmatmul.mubr.f32.gmra.mrb[0].mxu0 %v1973
        %v2043 = vpop.f32.mrb[0].mxu0
        %v2044 = vadd.f32 0.0, %v2043
        %v2045 = vpop.f32.mrb[0].mxu0
        %2046 = vdwg.mxu0
        %v2047 = vmul.f32 %v1966, 0.35355338
        %v2048 = vmul.f32 %v2044, 0.35355338
        %v2049 = vsel %vm1065, %v2047, -inf
        %2050 = vmax.xlane.f32.xlu0 %v2049
        %v2051 = vpop.xlane.xlu0 %2050
        %v2052 = vsel %vm1065, %v2048, -inf
        %2053 = vmax.xlane.f32.xlu0 %v2052
        %v2054 = vpop.xlane.xlu0 %2053
        %v2055 = vsub.f32 %v2047, %v2051
        %v2056 = vsub.f32 %v2048, %v2054
        %v2057 = vmul.f32 %v2055, 1.442695
        %v2058 = vpow.pop %v2057
        %v2059 = vmul.f32 %v2056, 1.442695
        %v2060 = vpow.pop %v2059
        %v2061 = vsel %vm1065, %v2058, 0.0
        %2062 = vadd.xlane.f32.xlu0 %v2061
        %v2063 = vpop.xlane.xlu0 %2062
        %v2064 = vsel %vm1065, %v2060, 0.0
        %2065 = vadd.xlane.f32.xlu0 %v2064
        %v2066 = vpop.xlane.xlu0 %2065
        %v2067 = vrcp.pop %v2063
        %v2068 = vrcp.pop %v2066
        %v2069 = vmul.f32 %v2058, %v2067
        %v2070 = vmul.f32 %v2060, %v2068
        %2071 = vrot.lane.b32.xlu0 %v1043, 48
        %v2072 = vpop.permute.xlu0 %2071
        %v2075 = vsel %vm1065, %v2069, 0
        %2077 = vmatprep.subr.mxu0 0.0
        %2078 = vmatpush1.msra.mxu0 %v2072
        %2079 = vmatprep.subr.mxu0 0.0
        %2080 = vmatpush1.msra.mxu0 0.0
        %2081 = vmatprep.subr.mxu0 0.0
        %2082 = vmatpush1.msra.mxu0 0.0
        %2083 = vmatprep.subr.mxu0 0.0
        %2084 = vmatpush1.msra.mxu0 0.0
        %2085 = vmatprep.subr.mxu0 0.0
        %2086 = vmatpush1.msra.mxu0 0.0
        %2087 = vmatprep.subr.mxu0 0.0
        %2088 = vmatpush1.msra.mxu0 0.0
        %2089 = vmatprep.subr.mxu0 0.0
        %2090 = vmatpush1.msra.mxu0 0.0
        %2091 = vmatprep.subr.mxu0 0.0
        %2092 = vmatpush1.msra.mxu0 0.0
        %2093 = vmatprep.subr.mxu0 0.0
        %2094 = vmatpush1.msra.mxu0 0.0
        %2095 = vmatprep.subr.mxu0 0.0
        %2096 = vmatpush1.msra.mxu0 0.0
        %2097 = vmatprep.subr.mxu0 0.0
        %2098 = vmatpush1.msra.mxu0 0.0
        %2099 = vmatprep.subr.mxu0 0.0
        %2100 = vmatpush1.msra.mxu0 0.0
        %2101 = vmatprep.subr.mxu0 0.0
        %2102 = vmatpush1.msra.mxu0 0.0
        %2103 = vmatprep.subr.mxu0 0.0
        %2104 = vmatpush1.msra.mxu0 0.0
        %2105 = vmatprep.subr.mxu0 0.0
        %2106 = vmatpush1.msra.mxu0 0.0
        %2107 = vmatprep.subr.mxu0 0.0
        %2108 = vmatpush1.msra.mxu0 0.0
        %2109 = vmatprep.subr.mxu0 0.0
        %2110 = vmatpush1.msra.mxu0 0.0
        %2111 = vmatprep.subr.mxu0 0.0
        %2112 = vmatpush1.msra.mxu0 0.0
        %2113 = vmatprep.subr.mxu0 0.0
        %2114 = vmatpush1.msra.mxu0 0.0
        %2115 = vmatprep.subr.mxu0 0.0
        %2116 = vmatpush1.msra.mxu0 0.0
        %2117 = vmatprep.subr.mxu0 0.0
        %2118 = vmatpush1.msra.mxu0 0.0
        %2119 = vmatprep.subr.mxu0 0.0
        %2120 = vmatpush1.msra.mxu0 0.0
        %2121 = vmatprep.subr.mxu0 0.0
        %2122 = vmatpush1.msra.mxu0 0.0
        %2123 = vmatprep.subr.mxu0 0.0
        %2124 = vmatpush1.msra.mxu0 0.0
        %2125 = vmatprep.subr.mxu0 0.0
        %2126 = vmatpush1.msra.mxu0 0.0
        %2127 = vmatprep.subr.mxu0 0.0
        %2128 = vmatpush1.msra.mxu0 0.0
        %2129 = vmatprep.subr.mxu0 0.0
        %2130 = vmatpush1.msra.mxu0 0.0
        %2131 = vmatprep.subr.mxu0 0.0
        %2132 = vmatpush1.msra.mxu0 0.0
        %2133 = vmatprep.subr.mxu0 0.0
        %2134 = vmatpush1.msra.mxu0 0.0
        %2135 = vmatprep.subr.mxu0 0.0
        %2136 = vmatpush1.msra.mxu0 0.0
        %2137 = vmatprep.subr.mxu0 0.0
        %2138 = vmatpush1.msra.mxu0 0.0
        %2139 = vmatprep.subr.mxu0 0.0
        %2140 = vmatpush1.msra.mxu0 0.0
        %2141 = vmatprep.mubr.f32.mxu0 0.0
        %2142 = vmatmul.mubr.f32.gmra.mrb[0].mxu0 %v2075
        %v2143 = vpop.f32.mrb[0].mxu0
        %v2144 = vadd.f32 0.0, %v2143
        %v2145 = vpop.f32.mrb[0].mxu0
        %2146 = vdwg.mxu0
        %2147 = vrot.lane.b32.xlu0 %v1048, 48
        %v2148 = vpop.permute.xlu0 %2147
        %v2151 = vsel %vm1065, %v2070, 0
        %2153 = vmatprep.subr.mxu0 0.0
        %2154 = vmatpush1.msra.mxu0 %v2148
        %2155 = vmatprep.subr.mxu0 0.0
        %2156 = vmatpush1.msra.mxu0 0.0
        %2157 = vmatprep.subr.mxu0 0.0
        %2158 = vmatpush1.msra.mxu0 0.0
        %2159 = vmatprep.subr.mxu0 0.0
        %2160 = vmatpush1.msra.mxu0 0.0
        %2161 = vmatprep.subr.mxu0 0.0
        %2162 = vmatpush1.msra.mxu0 0.0
        %2163 = vmatprep.subr.mxu0 0.0
        %2164 = vmatpush1.msra.mxu0 0.0
        %2165 = vmatprep.subr.mxu0 0.0
        %2166 = vmatpush1.msra.mxu0 0.0
        %2167 = vmatprep.subr.mxu0 0.0
        %2168 = vmatpush1.msra.mxu0 0.0
        %2169 = vmatprep.subr.mxu0 0.0
        %2170 = vmatpush1.msra.mxu0 0.0
        %2171 = vmatprep.subr.mxu0 0.0
        %2172 = vmatpush1.msra.mxu0 0.0
        %2173 = vmatprep.subr.mxu0 0.0
        %2174 = vmatpush1.msra.mxu0 0.0
        %2175 = vmatprep.subr.mxu0 0.0
        %2176 = vmatpush1.msra.mxu0 0.0
        %2177 = vmatprep.subr.mxu0 0.0
        %2178 = vmatpush1.msra.mxu0 0.0
        %2179 = vmatprep.subr.mxu0 0.0
        %2180 = vmatpush1.msra.mxu0 0.0
        %2181 = vmatprep.subr.mxu0 0.0
        %2182 = vmatpush1.msra.mxu0 0.0
        %2183 = vmatprep.subr.mxu0 0.0
        %2184 = vmatpush1.msra.mxu0 0.0
        %2185 = vmatprep.subr.mxu0 0.0
        %2186 = vmatpush1.msra.mxu0 0.0
        %2187 = vmatprep.subr.mxu0 0.0
        %2188 = vmatpush1.msra.mxu0 0.0
        %2189 = vmatprep.subr.mxu0 0.0
        %2190 = vmatpush1.msra.mxu0 0.0
        %2191 = vmatprep.subr.mxu0 0.0
        %2192 = vmatpush1.msra.mxu0 0.0
        %2193 = vmatprep.subr.mxu0 0.0
        %2194 = vmatpush1.msra.mxu0 0.0
        %2195 = vmatprep.subr.mxu0 0.0
        %2196 = vmatpush1.msra.mxu0 0.0
        %2197 = vmatprep.subr.mxu0 0.0
        %2198 = vmatpush1.msra.mxu0 0.0
        %2199 = vmatprep.subr.mxu0 0.0
        %2200 = vmatpush1.msra.mxu0 0.0
        %2201 = vmatprep.subr.mxu0 0.0
        %2202 = vmatpush1.msra.mxu0 0.0
        %2203 = vmatprep.subr.mxu0 0.0
        %2204 = vmatpush1.msra.mxu0 0.0
        %2205 = vmatprep.subr.mxu0 0.0
        %2206 = vmatpush1.msra.mxu0 0.0
        %2207 = vmatprep.subr.mxu0 0.0
        %2208 = vmatpush1.msra.mxu0 0.0
        %2209 = vmatprep.subr.mxu0 0.0
        %2210 = vmatpush1.msra.mxu0 0.0
        %2211 = vmatprep.subr.mxu0 0.0
        %2212 = vmatpush1.msra.mxu0 0.0
        %2213 = vmatprep.subr.mxu0 0.0
        %2214 = vmatpush1.msra.mxu0 0.0
        %2215 = vmatprep.subr.mxu0 0.0
        %2216 = vmatpush1.msra.mxu0 0.0
        %2217 = vmatprep.mubr.f32.mxu0 0.0
        %2218 = vmatmul.mubr.f32.gmra.mrb[0].mxu0 %v2151
        %v2219 = vpop.f32.mrb[0].mxu0
        %v2220 = vadd.f32 0.0, %v2219
        %v2221 = vpop.f32.mrb[0].mxu0
        %2222 = vdwg.mxu0
        %v2224 = vsel %vm1065, %v2144, 0
        %v2227 = vsel %vm1065, %v2220, 0
        %2229 = vmatprep.subr.mxu0 0.0
        %2230 = vmatpush1.msra.mxu0 %v1053
        %2231 = vmatprep.subr.mxu0 0.0
        %2232 = vmatpush1.msra.mxu0 0.0
        %2233 = vmatprep.subr.mxu0 0.0
        %2234 = vmatpush1.msra.mxu0 0.0
        %2235 = vmatprep.subr.mxu0 0.0
        %2236 = vmatpush1.msra.mxu0 0.0
        %2237 = vmatprep.subr.mxu0 0.0
        %2238 = vmatpush1.msra.mxu0 0.0
        %2239 = vmatprep.subr.mxu0 0.0
        %2240 = vmatpush1.msra.mxu0 0.0
        %2241 = vmatprep.subr.mxu0 0.0
        %2242 = vmatpush1.msra.mxu0 0.0
        %2243 = vmatprep.subr.mxu0 0.0
        %2244 = vmatpush1.msra.mxu0 0.0
        %2245 = vmatprep.subr.mxu0 0.0
        %2246 = vmatpush1.msra.mxu0 0.0
        %2247 = vmatprep.subr.mxu0 0.0
        %2248 = vmatpush1.msra.mxu0 0.0
        %2249 = vmatprep.subr.mxu0 0.0
        %2250 = vmatpush1.msra.mxu0 0.0
        %2251 = vmatprep.subr.mxu0 0.0
        %2252 = vmatpush1.msra.mxu0 0.0
        %2253 = vmatprep.subr.mxu0 0.0
        %2254 = vmatpush1.msra.mxu0 0.0
        %2255 = vmatprep.subr.mxu0 0.0
        %2256 = vmatpush1.msra.mxu0 0.0
        %2257 = vmatprep.subr.mxu0 0.0
        %2258 = vmatpush1.msra.mxu0 0.0
        %2259 = vmatprep.subr.mxu0 0.0
        %2260 = vmatpush1.msra.mxu0 0.0
        %2261 = vmatprep.subr.mxu0 0.0
        %2262 = vmatpush1.msra.mxu0 0.0
        %2263 = vmatprep.subr.mxu0 0.0
        %2264 = vmatpush1.msra.mxu0 0.0
        %2265 = vmatprep.subr.mxu0 0.0
        %2266 = vmatpush1.msra.mxu0 0.0
        %2267 = vmatprep.subr.mxu0 0.0
        %2268 = vmatpush1.msra.mxu0 0.0
        %2269 = vmatprep.subr.mxu0 0.0
        %2270 = vmatpush1.msra.mxu0 0.0
        %2271 = vmatprep.subr.mxu0 0.0
        %2272 = vmatpush1.msra.mxu0 0.0
        %2273 = vmatprep.subr.mxu0 0.0
        %2274 = vmatpush1.msra.mxu0 0.0
        %2275 = vmatprep.subr.mxu0 0.0
        %2276 = vmatpush1.msra.mxu0 0.0
        %2277 = vmatprep.subr.mxu0 0.0
        %2278 = vmatpush1.msra.mxu0 0.0
        %2279 = vmatprep.subr.mxu0 0.0
        %2280 = vmatpush1.msra.mxu0 0.0
        %2281 = vmatprep.subr.mxu0 0.0
        %2282 = vmatpush1.msra.mxu0 0.0
        %2283 = vmatprep.subr.mxu0 0.0
        %2284 = vmatpush1.msra.mxu0 0.0
        %2285 = vmatprep.subr.mxu0 0.0
        %2286 = vmatpush1.msra.mxu0 0.0
        %2287 = vmatprep.subr.mxu0 0.0
        %2288 = vmatpush1.msra.mxu0 0.0
        %2289 = vmatprep.subr.mxu0 0.0
        %2290 = vmatpush1.msra.mxu0 0.0
        %2291 = vmatprep.subr.mxu0 0.0
        %2292 = vmatpush1.msra.mxu0 0.0
        %2293 = vmatprep.mubr.f32.mxu0 0.0
        %2294 = vmatmul.mubr.f32.gmra.mrb[0].mxu0 %v2224
        %v2295 = vpop.f32.mrb[0].mxu0
        %v2296 = vadd.f32 0.0, %v2295
        %v2297 = vpop.f32.mrb[0].mxu0
        %2298 = vmatprep.mubr.f32.mxu0 0.0
        %2299 = vmatmul.mubr.f32.gmra.mrb[0].mxu0 %v2227
        %v2300 = vpop.f32.mrb[0].mxu0
        %v2301 = vadd.f32 0.0, %v2300
        %v2302 = vpop.f32.mrb[0].mxu0
        %2303 = vdwg.mxu0
        %v2304 = vadd.f32 %v1889, %v2296
        %v2305 = vadd.f32 %v1890, %v2301
        %2306 = vrot.lane.b32.xlu0 %v1043, 104
        %v2307 = vpop.permute.xlu0 %2306
        %2308 = vrot.lane.b32.xlu0 %v1043, 72
        %v2309 = vpop.permute.xlu0 %2308
        %v2310 = vsel %vm1065, %v2307, 0
        %v2312 = vsel %vm1065, %v2309, 0
        %2314 = vmatprep.subr.mxu0 0.0
        %2315 = vmatpush1.xpose.msra.mxu0 %v2312
        %2316 = vmatprep.subr.mxu0 0.0
        %2317 = vmatpush1.xpose.msra.mxu0 0.0
        %2318 = vmatprep.subr.mxu0 0.0
        %2319 = vmatpush1.xpose.msra.mxu0 0.0
        %2320 = vmatprep.subr.mxu0 0.0
        %2321 = vmatpush1.xpose.msra.mxu0 0.0
        %2322 = vmatprep.subr.mxu0 0.0
        %2323 = vmatpush1.xpose.msra.mxu0 0.0
        %2324 = vmatprep.subr.mxu0 0.0
        %2325 = vmatpush1.xpose.msra.mxu0 0.0
        %2326 = vmatprep.subr.mxu0 0.0
        %2327 = vmatpush1.xpose.msra.mxu0 0.0
        %2328 = vmatprep.subr.mxu0 0.0
        %2329 = vmatpush1.xpose.msra.mxu0 0.0
        %2330 = vmatprep.subr.mxu0 0.0
        %2331 = vmatpush1.xpose.msra.mxu0 0.0
        %2332 = vmatprep.subr.mxu0 0.0
        %2333 = vmatpush1.xpose.msra.mxu0 0.0
        %2334 = vmatprep.subr.mxu0 0.0
        %2335 = vmatpush1.xpose.msra.mxu0 0.0
        %2336 = vmatprep.subr.mxu0 0.0
        %2337 = vmatpush1.xpose.msra.mxu0 0.0
        %2338 = vmatprep.subr.mxu0 0.0
        %2339 = vmatpush1.xpose.msra.mxu0 0.0
        %2340 = vmatprep.subr.mxu0 0.0
        %2341 = vmatpush1.xpose.msra.mxu0 0.0
        %2342 = vmatprep.subr.mxu0 0.0
        %2343 = vmatpush1.xpose.msra.mxu0 0.0
        %2344 = vmatprep.subr.mxu0 0.0
        %2345 = vmatpush1.xpose.msra.mxu0 0.0
        %2346 = vmatprep.subr.mxu0 0.0
        %2347 = vmatpush1.xpose.msra.mxu0 0.0
        %2348 = vmatprep.subr.mxu0 0.0
        %2349 = vmatpush1.xpose.msra.mxu0 0.0
        %2350 = vmatprep.subr.mxu0 0.0
        %2351 = vmatpush1.xpose.msra.mxu0 0.0
        %2352 = vmatprep.subr.mxu0 0.0
        %2353 = vmatpush1.xpose.msra.mxu0 0.0
        %2354 = vmatprep.subr.mxu0 0.0
        %2355 = vmatpush1.xpose.msra.mxu0 0.0
        %2356 = vmatprep.subr.mxu0 0.0
        %2357 = vmatpush1.xpose.msra.mxu0 0.0
        %2358 = vmatprep.subr.mxu0 0.0
        %2359 = vmatpush1.xpose.msra.mxu0 0.0
        %2360 = vmatprep.subr.mxu0 0.0
        %2361 = vmatpush1.xpose.msra.mxu0 0.0
        %2362 = vmatprep.subr.mxu0 0.0
        %2363 = vmatpush1.xpose.msra.mxu0 0.0
        %2364 = vmatprep.subr.mxu0 0.0
        %2365 = vmatpush1.xpose.msra.mxu0 0.0
        %2366 = vmatprep.subr.mxu0 0.0
        %2367 = vmatpush1.xpose.msra.mxu0 0.0
        %2368 = vmatprep.subr.mxu0 0.0
        %2369 = vmatpush1.xpose.msra.mxu0 0.0
        %2370 = vmatprep.subr.mxu0 0.0
        %2371 = vmatpush1.xpose.msra.mxu0 0.0
        %2372 = vmatprep.subr.mxu0 0.0
        %2373 = vmatpush1.xpose.msra.mxu0 0.0
        %2374 = vmatprep.subr.mxu0 0.0
        %2375 = vmatpush1.xpose.msra.mxu0 0.0
        %2376 = vmatprep.subr.mxu0 0.0
        %2377 = vmatpush1.xpose.msra.mxu0 0.0
        %2378 = vmatprep.mubr.f32.mxu0 0.0
        %2379 = vmatmul.mubr.f32.gmra.mrb[0].mxu0 %v2310
        %v2380 = vpop.f32.mrb[0].mxu0
        %v2381 = vadd.f32 0.0, %v2380
        %v2382 = vpop.f32.mrb[0].mxu0
        %2383 = vdwg.mxu0
        %2384 = vrot.lane.b32.xlu0 %v1048, 104
        %v2385 = vpop.permute.xlu0 %2384
        %2386 = vrot.lane.b32.xlu0 %v1048, 72
        %v2387 = vpop.permute.xlu0 %2386
        %v2388 = vsel %vm1065, %v2385, 0
        %v2390 = vsel %vm1065, %v2387, 0
        %2392 = vmatprep.subr.mxu0 0.0
        %2393 = vmatpush1.xpose.msra.mxu0 %v2390
        %2394 = vmatprep.subr.mxu0 0.0
        %2395 = vmatpush1.xpose.msra.mxu0 0.0
        %2396 = vmatprep.subr.mxu0 0.0
        %2397 = vmatpush1.xpose.msra.mxu0 0.0
        %2398 = vmatprep.subr.mxu0 0.0
        %2399 = vmatpush1.xpose.msra.mxu0 0.0
        %2400 = vmatprep.subr.mxu0 0.0
        %2401 = vmatpush1.xpose.msra.mxu0 0.0
        %2402 = vmatprep.subr.mxu0 0.0
        %2403 = vmatpush1.xpose.msra.mxu0 0.0
        %2404 = vmatprep.subr.mxu0 0.0
        %2405 = vmatpush1.xpose.msra.mxu0 0.0
        %2406 = vmatprep.subr.mxu0 0.0
        %2407 = vmatpush1.xpose.msra.mxu0 0.0
        %2408 = vmatprep.subr.mxu0 0.0
        %2409 = vmatpush1.xpose.msra.mxu0 0.0
        %2410 = vmatprep.subr.mxu0 0.0
        %2411 = vmatpush1.xpose.msra.mxu0 0.0
        %2412 = vmatprep.subr.mxu0 0.0
        %2413 = vmatpush1.xpose.msra.mxu0 0.0
        %2414 = vmatprep.subr.mxu0 0.0
        %2415 = vmatpush1.xpose.msra.mxu0 0.0
        %2416 = vmatprep.subr.mxu0 0.0
        %2417 = vmatpush1.xpose.msra.mxu0 0.0
        %2418 = vmatprep.subr.mxu0 0.0
        %2419 = vmatpush1.xpose.msra.mxu0 0.0
        %2420 = vmatprep.subr.mxu0 0.0
        %2421 = vmatpush1.xpose.msra.mxu0 0.0
        %2422 = vmatprep.subr.mxu0 0.0
        %2423 = vmatpush1.xpose.msra.mxu0 0.0
        %2424 = vmatprep.subr.mxu0 0.0
        %2425 = vmatpush1.xpose.msra.mxu0 0.0
        %2426 = vmatprep.subr.mxu0 0.0
        %2427 = vmatpush1.xpose.msra.mxu0 0.0
        %2428 = vmatprep.subr.mxu0 0.0
        %2429 = vmatpush1.xpose.msra.mxu0 0.0
        %2430 = vmatprep.subr.mxu0 0.0
        %2431 = vmatpush1.xpose.msra.mxu0 0.0
        %2432 = vmatprep.subr.mxu0 0.0
        %2433 = vmatpush1.xpose.msra.mxu0 0.0
        %2434 = vmatprep.subr.mxu0 0.0
        %2435 = vmatpush1.xpose.msra.mxu0 0.0
        %2436 = vmatprep.subr.mxu0 0.0
        %2437 = vmatpush1.xpose.msra.mxu0 0.0
        %2438 = vmatprep.subr.mxu0 0.0
        %2439 = vmatpush1.xpose.msra.mxu0 0.0
        %2440 = vmatprep.subr.mxu0 0.0
        %2441 = vmatpush1.xpose.msra.mxu0 0.0
        %2442 = vmatprep.subr.mxu0 0.0
        %2443 = vmatpush1.xpose.msra.mxu0 0.0
        %2444 = vmatprep.subr.mxu0 0.0
        %2445 = vmatpush1.xpose.msra.mxu0 0.0
        %2446 = vmatprep.subr.mxu0 0.0
        %2447 = vmatpush1.xpose.msra.mxu0 0.0
        %2448 = vmatprep.subr.mxu0 0.0
        %2449 = vmatpush1.xpose.msra.mxu0 0.0
        %2450 = vmatprep.subr.mxu0 0.0
        %2451 = vmatpush1.xpose.msra.mxu0 0.0
        %2452 = vmatprep.subr.mxu0 0.0
        %2453 = vmatpush1.xpose.msra.mxu0 0.0
        %2454 = vmatprep.subr.mxu0 0.0
        %2455 = vmatpush1.xpose.msra.mxu0 0.0
        %2456 = vmatprep.mubr.f32.mxu0 0.0
        %2457 = vmatmul.mubr.f32.gmra.mrb[0].mxu0 %v2388
        %v2458 = vpop.f32.mrb[0].mxu0
        %v2459 = vadd.f32 0.0, %v2458
        %v2460 = vpop.f32.mrb[0].mxu0
        %2461 = vdwg.mxu0
        %v2462 = vmul.f32 %v2381, 0.35355338
        %v2463 = vmul.f32 %v2459, 0.35355338
        %v2464 = vsel %vm1065, %v2462, -inf
        %2465 = vmax.xlane.f32.xlu0 %v2464
        %v2466 = vpop.xlane.xlu0 %2465
        %v2467 = vsel %vm1065, %v2463, -inf
        %2468 = vmax.xlane.f32.xlu0 %v2467
        %v2469 = vpop.xlane.xlu0 %2468
        %v2470 = vsub.f32 %v2462, %v2466
        %v2471 = vsub.f32 %v2463, %v2469
        %v2472 = vmul.f32 %v2470, 1.442695
        %v2473 = vpow.pop %v2472
        %v2474 = vmul.f32 %v2471, 1.442695
        %v2475 = vpow.pop %v2474
        %v2476 = vsel %vm1065, %v2473, 0.0
        %2477 = vadd.xlane.f32.xlu0 %v2476
        %v2478 = vpop.xlane.xlu0 %2477
        %v2479 = vsel %vm1065, %v2475, 0.0
        %2480 = vadd.xlane.f32.xlu0 %v2479
        %v2481 = vpop.xlane.xlu0 %2480
        %v2482 = vrcp.pop %v2478
        %v2483 = vrcp.pop %v2481
        %v2484 = vmul.f32 %v2473, %v2482
        %v2485 = vmul.f32 %v2475, %v2483
        %2486 = vrot.lane.b32.xlu0 %v1043, 40
        %v2487 = vpop.permute.xlu0 %2486
        %v2490 = vsel %vm1065, %v2484, 0
        %2492 = vmatprep.subr.mxu0 0.0
        %2493 = vmatpush1.msra.mxu0 %v2487
        %2494 = vmatprep.subr.mxu0 0.0
        %2495 = vmatpush1.msra.mxu0 0.0
        %2496 = vmatprep.subr.mxu0 0.0
        %2497 = vmatpush1.msra.mxu0 0.0
        %2498 = vmatprep.subr.mxu0 0.0
        %2499 = vmatpush1.msra.mxu0 0.0
        %2500 = vmatprep.subr.mxu0 0.0
        %2501 = vmatpush1.msra.mxu0 0.0
        %2502 = vmatprep.subr.mxu0 0.0
        %2503 = vmatpush1.msra.mxu0 0.0
        %2504 = vmatprep.subr.mxu0 0.0
        %2505 = vmatpush1.msra.mxu0 0.0
        %2506 = vmatprep.subr.mxu0 0.0
        %2507 = vmatpush1.msra.mxu0 0.0
        %2508 = vmatprep.subr.mxu0 0.0
        %2509 = vmatpush1.msra.mxu0 0.0
        %2510 = vmatprep.subr.mxu0 0.0
        %2511 = vmatpush1.msra.mxu0 0.0
        %2512 = vmatprep.subr.mxu0 0.0
        %2513 = vmatpush1.msra.mxu0 0.0
        %2514 = vmatprep.subr.mxu0 0.0
        %2515 = vmatpush1.msra.mxu0 0.0
        %2516 = vmatprep.subr.mxu0 0.0
        %2517 = vmatpush1.msra.mxu0 0.0
        %2518 = vmatprep.subr.mxu0 0.0
        %2519 = vmatpush1.msra.mxu0 0.0
        %2520 = vmatprep.subr.mxu0 0.0
        %2521 = vmatpush1.msra.mxu0 0.0
        %2522 = vmatprep.subr.mxu0 0.0
        %2523 = vmatpush1.msra.mxu0 0.0
        %2524 = vmatprep.subr.mxu0 0.0
        %2525 = vmatpush1.msra.mxu0 0.0
        %2526 = vmatprep.subr.mxu0 0.0
        %2527 = vmatpush1.msra.mxu0 0.0
        %2528 = vmatprep.subr.mxu0 0.0
        %2529 = vmatpush1.msra.mxu0 0.0
        %2530 = vmatprep.subr.mxu0 0.0
        %2531 = vmatpush1.msra.mxu0 0.0
        %2532 = vmatprep.subr.mxu0 0.0
        %2533 = vmatpush1.msra.mxu0 0.0
        %2534 = vmatprep.subr.mxu0 0.0
        %2535 = vmatpush1.msra.mxu0 0.0
        %2536 = vmatprep.subr.mxu0 0.0
        %2537 = vmatpush1.msra.mxu0 0.0
        %2538 = vmatprep.subr.mxu0 0.0
        %2539 = vmatpush1.msra.mxu0 0.0
        %2540 = vmatprep.subr.mxu0 0.0
        %2541 = vmatpush1.msra.mxu0 0.0
        %2542 = vmatprep.subr.mxu0 0.0
        %2543 = vmatpush1.msra.mxu0 0.0
        %2544 = vmatprep.subr.mxu0 0.0
        %2545 = vmatpush1.msra.mxu0 0.0
        %2546 = vmatprep.subr.mxu0 0.0
        %2547 = vmatpush1.msra.mxu0 0.0
        %2548 = vmatprep.subr.mxu0 0.0
        %2549 = vmatpush1.msra.mxu0 0.0
        %2550 = vmatprep.subr.mxu0 0.0
        %2551 = vmatpush1.msra.mxu0 0.0
        %2552 = vmatprep.subr.mxu0 0.0
        %2553 = vmatpush1.msra.mxu0 0.0
        %2554 = vmatprep.subr.mxu0 0.0
        %2555 = vmatpush1.msra.mxu0 0.0
        %2556 = vmatprep.mubr.f32.mxu0 0.0
        %2557 = vmatmul.mubr.f32.gmra.mrb[0].mxu0 %v2490
        %v2558 = vpop.f32.mrb[0].mxu0
        %v2559 = vadd.f32 0.0, %v2558
        %v2560 = vpop.f32.mrb[0].mxu0
        %2561 = vdwg.mxu0
        %2562 = vrot.lane.b32.xlu0 %v1048, 40
        %v2563 = vpop.permute.xlu0 %2562
        %v2566 = vsel %vm1065, %v2485, 0
        %2568 = vmatprep.subr.mxu0 0.0
        %2569 = vmatpush1.msra.mxu0 %v2563
        %2570 = vmatprep.subr.mxu0 0.0
        %2571 = vmatpush1.msra.mxu0 0.0
        %2572 = vmatprep.subr.mxu0 0.0
        %2573 = vmatpush1.msra.mxu0 0.0
        %2574 = vmatprep.subr.mxu0 0.0
        %2575 = vmatpush1.msra.mxu0 0.0
        %2576 = vmatprep.subr.mxu0 0.0
        %2577 = vmatpush1.msra.mxu0 0.0
        %2578 = vmatprep.subr.mxu0 0.0
        %2579 = vmatpush1.msra.mxu0 0.0
        %2580 = vmatprep.subr.mxu0 0.0
        %2581 = vmatpush1.msra.mxu0 0.0
        %2582 = vmatprep.subr.mxu0 0.0
        %2583 = vmatpush1.msra.mxu0 0.0
        %2584 = vmatprep.subr.mxu0 0.0
        %2585 = vmatpush1.msra.mxu0 0.0
        %2586 = vmatprep.subr.mxu0 0.0
        %2587 = vmatpush1.msra.mxu0 0.0
        %2588 = vmatprep.subr.mxu0 0.0
        %2589 = vmatpush1.msra.mxu0 0.0
        %2590 = vmatprep.subr.mxu0 0.0
        %2591 = vmatpush1.msra.mxu0 0.0
        %2592 = vmatprep.subr.mxu0 0.0
        %2593 = vmatpush1.msra.mxu0 0.0
        %2594 = vmatprep.subr.mxu0 0.0
        %2595 = vmatpush1.msra.mxu0 0.0
        %2596 = vmatprep.subr.mxu0 0.0
        %2597 = vmatpush1.msra.mxu0 0.0
        %2598 = vmatprep.subr.mxu0 0.0
        %2599 = vmatpush1.msra.mxu0 0.0
        %2600 = vmatprep.subr.mxu0 0.0
        %2601 = vmatpush1.msra.mxu0 0.0
        %2602 = vmatprep.subr.mxu0 0.0
        %2603 = vmatpush1.msra.mxu0 0.0
        %2604 = vmatprep.subr.mxu0 0.0
        %2605 = vmatpush1.msra.mxu0 0.0
        %2606 = vmatprep.subr.mxu0 0.0
        %2607 = vmatpush1.msra.mxu0 0.0
        %2608 = vmatprep.subr.mxu0 0.0
        %2609 = vmatpush1.msra.mxu0 0.0
        %2610 = vmatprep.subr.mxu0 0.0
        %2611 = vmatpush1.msra.mxu0 0.0
        %2612 = vmatprep.subr.mxu0 0.0
        %2613 = vmatpush1.msra.mxu0 0.0
        %2614 = vmatprep.subr.mxu0 0.0
        %2615 = vmatpush1.msra.mxu0 0.0
        %2616 = vmatprep.subr.mxu0 0.0
        %2617 = vmatpush1.msra.mxu0 0.0
        %2618 = vmatprep.subr.mxu0 0.0
        %2619 = vmatpush1.msra.mxu0 0.0
        %2620 = vmatprep.subr.mxu0 0.0
        %2621 = vmatpush1.msra.mxu0 0.0
        %2622 = vmatprep.subr.mxu0 0.0
        %2623 = vmatpush1.msra.mxu0 0.0
        %2624 = vmatprep.subr.mxu0 0.0
        %2625 = vmatpush1.msra.mxu0 0.0
        %2626 = vmatprep.subr.mxu0 0.0
        %2627 = vmatpush1.msra.mxu0 0.0
        %2628 = vmatprep.subr.mxu0 0.0
        %2629 = vmatpush1.msra.mxu0 0.0
        %2630 = vmatprep.subr.mxu0 0.0
        %2631 = vmatpush1.msra.mxu0 0.0
        %2632 = vmatprep.mubr.f32.mxu0 0.0
        %2633 = vmatmul.mubr.f32.gmra.mrb[0].mxu0 %v2566
        %v2634 = vpop.f32.mrb[0].mxu0
        %v2635 = vadd.f32 0.0, %v2634
        %v2636 = vpop.f32.mrb[0].mxu0
        %2637 = vdwg.mxu0
        %v2639 = vsel %vm1065, %v2559, 0
        %v2642 = vsel %vm1065, %v2635, 0
        %2644 = vmatprep.subr.mxu0 0.0
        %2645 = vmatpush1.msra.mxu0 %v1054
        %2646 = vmatprep.subr.mxu0 0.0
        %2647 = vmatpush1.msra.mxu0 0.0
        %2648 = vmatprep.subr.mxu0 0.0
        %2649 = vmatpush1.msra.mxu0 0.0
        %2650 = vmatprep.subr.mxu0 0.0
        %2651 = vmatpush1.msra.mxu0 0.0
        %2652 = vmatprep.subr.mxu0 0.0
        %2653 = vmatpush1.msra.mxu0 0.0
        %2654 = vmatprep.subr.mxu0 0.0
        %2655 = vmatpush1.msra.mxu0 0.0
        %2656 = vmatprep.subr.mxu0 0.0
        %2657 = vmatpush1.msra.mxu0 0.0
        %2658 = vmatprep.subr.mxu0 0.0
        %2659 = vmatpush1.msra.mxu0 0.0
        %2660 = vmatprep.subr.mxu0 0.0
        %2661 = vmatpush1.msra.mxu0 0.0
        %2662 = vmatprep.subr.mxu0 0.0
        %2663 = vmatpush1.msra.mxu0 0.0
        %2664 = vmatprep.subr.mxu0 0.0
        %2665 = vmatpush1.msra.mxu0 0.0
        %2666 = vmatprep.subr.mxu0 0.0
        %2667 = vmatpush1.msra.mxu0 0.0
        %2668 = vmatprep.subr.mxu0 0.0
        %2669 = vmatpush1.msra.mxu0 0.0
        %2670 = vmatprep.subr.mxu0 0.0
        %2671 = vmatpush1.msra.mxu0 0.0
        %2672 = vmatprep.subr.mxu0 0.0
        %2673 = vmatpush1.msra.mxu0 0.0
        %2674 = vmatprep.subr.mxu0 0.0
        %2675 = vmatpush1.msra.mxu0 0.0
        %2676 = vmatprep.subr.mxu0 0.0
        %2677 = vmatpush1.msra.mxu0 0.0
        %2678 = vmatprep.subr.mxu0 0.0
        %2679 = vmatpush1.msra.mxu0 0.0
        %2680 = vmatprep.subr.mxu0 0.0
        %2681 = vmatpush1.msra.mxu0 0.0
        %2682 = vmatprep.subr.mxu0 0.0
        %2683 = vmatpush1.msra.mxu0 0.0
        %2684 = vmatprep.subr.mxu0 0.0
        %2685 = vmatpush1.msra.mxu0 0.0
        %2686 = vmatprep.subr.mxu0 0.0
        %2687 = vmatpush1.msra.mxu0 0.0
        %2688 = vmatprep.subr.mxu0 0.0
        %2689 = vmatpush1.msra.mxu0 0.0
        %2690 = vmatprep.subr.mxu0 0.0
        %2691 = vmatpush1.msra.mxu0 0.0
        %2692 = vmatprep.subr.mxu0 0.0
        %2693 = vmatpush1.msra.mxu0 0.0
        %2694 = vmatprep.subr.mxu0 0.0
        %2695 = vmatpush1.msra.mxu0 0.0
        %2696 = vmatprep.subr.mxu0 0.0
        %2697 = vmatpush1.msra.mxu0 0.0
        %2698 = vmatprep.subr.mxu0 0.0
        %2699 = vmatpush1.msra.mxu0 0.0
        %2700 = vmatprep.subr.mxu0 0.0
        %2701 = vmatpush1.msra.mxu0 0.0
        %2702 = vmatprep.subr.mxu0 0.0
        %2703 = vmatpush1.msra.mxu0 0.0
        %2704 = vmatprep.subr.mxu0 0.0
        %2705 = vmatpush1.msra.mxu0 0.0
        %2706 = vmatprep.subr.mxu0 0.0
        %2707 = vmatpush1.msra.mxu0 0.0
        %2708 = vmatprep.mubr.f32.mxu0 0.0
        %2709 = vmatmul.mubr.f32.gmra.mrb[0].mxu0 %v2639
        %v2710 = vpop.f32.mrb[0].mxu0
        %v2711 = vadd.f32 0.0, %v2710
        %v2712 = vpop.f32.mrb[0].mxu0
        %2713 = vmatprep.mubr.f32.mxu0 0.0
        %2714 = vmatmul.mubr.f32.gmra.mrb[0].mxu0 %v2642
        %v2715 = vpop.f32.mrb[0].mxu0
        %v2716 = vadd.f32 0.0, %v2715
        %v2717 = vpop.f32.mrb[0].mxu0
        %2718 = vdwg.mxu0
        %v2719 = vadd.f32 %v2304, %v2711
        %v2720 = vadd.f32 %v2305, %v2716
        %v2721 = vadd.f32 %v954, %v2719
        %v2722 = vadd.f32 %v955, %v2720
        %v2723 = vld [vmem:[%s930] sm:$0x1]
        %v2724 = vld [vmem:[%s933] sm:$0x1]
        %v2725 = vsel %vm969, %v2721, 0.0
        %2726 = vadd.xlane.f32.xlu0 %v2725
        %v2727 = vpop.xlane.xlu0 %2726
        %v2728 = vsel %vm969, %v2722, 0.0
        %2729 = vadd.xlane.f32.xlu0 %v2728
        %v2730 = vpop.xlane.xlu0 %2729
        %v2731 = vrcp.pop 32.0
        %v2732 = vmul.f32 %v2727, %v2731
        %v2733 = vmul.f32 %v2730, %v2731
        %v2734 = vsub.f32 %v2721, %v2732
        %v2735 = vsub.f32 %v2722, %v2733
        %v2736 = vmul.f32 %v2734, %v2734
        %v2737 = vmul.f32 %v2735, %v2735
        %v2738 = vsel %vm969, %v2736, 0.0
        %2739 = vadd.xlane.f32.xlu0 %v2738
        %v2740 = vpop.xlane.xlu0 %2739
        %v2741 = vsel %vm969, %v2737, 0.0
        %2742 = vadd.xlane.f32.xlu0 %v2741
        %v2743 = vpop.xlane.xlu0 %2742
        %v2744 = vmul.f32 %v2740, %v2731
        %v2745 = vmul.f32 %v2743, %v2731
        %v2746 = vadd.f32 %v2744, 1e-06
        %v2747 = vadd.f32 %v2745, 1e-06
        %v2748 = vrsqrt.pop %v2746
        %v2749 = vrsqrt.pop %v2747
        %v2750 = vmul.f32 %v2734, %v2748
        %v2751 = vmul.f32 %v2735, %v2749
        %v2753 = vlaneseq
        %v2754 = vshrl.u32 %v2753, 7
        %v2755 = vsub.s32 0, %v2754
        %v2756 = vrot.slane %v2723, %v2755
        %v2758 = vmul.f32 %v2750, %v2756
        %v2759 = vmul.f32 %v2751, %v2756
        %v2761 = vlaneseq
        %v2762 = vshrl.u32 %v2761, 7
        %v2763 = vsub.s32 0, %v2762
        %v2764 = vrot.slane %v2724, %v2763
        %v2766 = vadd.f32 %v2758, %v2764
        %v2767 = vadd.f32 %v2759, %v2764
        %v2768 = vld [vmem:[%s910] sm:$0xff]
        %v2769 = vld [vmem:[%s910 + $0x8] sm:$0xff]
        %v2770 = vld [vmem:[%s910 + $0x10] sm:$0xff]
        %v2771 = vld [vmem:[%s910 + $0x18] sm:$0xff]
        %v2772 = vld [vmem:[%s913] sm:$0x1]
        %v2774 = vlaneseq
        %v2775 = vshrl.u32 %v2774, 7
        %v2776 = vsub.s32 0, %v2775
        %v2777 = vrot.slane %v2772, %v2776
        %v2780 = vsel %vm969, %v2766, 0
        %v2783 = vsel %vm969, %v2767, 0
        %2785 = vmatprep.subr.mxu0 0.0
        %2786 = vmatpush1.msra.mxu0 %v2768
        %2787 = vmatprep.subr.mxu0 0.0
        %2788 = vmatpush1.msra.mxu0 %v2769
        %2789 = vmatprep.subr.mxu0 0.0
        %2790 = vmatpush1.msra.mxu0 %v2770
        %2791 = vmatprep.subr.mxu0 0.0
        %2792 = vmatpush1.msra.mxu0 %v2771
        %2793 = vmatprep.subr.mxu0 0.0
        %2794 = vmatpush1.msra.mxu0 0.0
        %2795 = vmatprep.subr.mxu0 0.0
        %2796 = vmatpush1.msra.mxu0 0.0
        %2797 = vmatprep.subr.mxu0 0.0
        %2798 = vmatpush1.msra.mxu0 0.0
        %2799 = vmatprep.subr.mxu0 0.0
        %2800 = vmatpush1.msra.mxu0 0.0
        %2801 = vmatprep.subr.mxu0 0.0
        %2802 = vmatpush1.msra.mxu0 0.0
        %2803 = vmatprep.subr.mxu0 0.0
        %2804 = vmatpush1.msra.mxu0 0.0
        %2805 = vmatprep.subr.mxu0 0.0
        %2806 = vmatpush1.msra.mxu0 0.0
        %2807 = vmatprep.subr.mxu0 0.0
        %2808 = vmatpush1.msra.mxu0 0.0
        %2809 = vmatprep.subr.mxu0 0.0
        %2810 = vmatpush1.msra.mxu0 0.0
        %2811 = vmatprep.subr.mxu0 0.0
        %2812 = vmatpush1.msra.mxu0 0.0
        %2813 = vmatprep.subr.mxu0 0.0
        %2814 = vmatpush1.msra.mxu0 0.0
        %2815 = vmatprep.subr.mxu0 0.0
        %2816 = vmatpush1.msra.mxu0 0.0
        %2817 = vmatprep.subr.mxu0 0.0
        %2818 = vmatpush1.msra.mxu0 0.0
        %2819 = vmatprep.subr.mxu0 0.0
        %2820 = vmatpush1.msra.mxu0 0.0
        %2821 = vmatprep.subr.mxu0 0.0
        %2822 = vmatpush1.msra.mxu0 0.0
        %2823 = vmatprep.subr.mxu0 0.0
        %2824 = vmatpush1.msra.mxu0 0.0
        %2825 = vmatprep.subr.mxu0 0.0
        %2826 = vmatpush1.msra.mxu0 0.0
        %2827 = vmatprep.subr.mxu0 0.0
        %2828 = vmatpush1.msra.mxu0 0.0
        %2829 = vmatprep.subr.mxu0 0.0
        %2830 = vmatpush1.msra.mxu0 0.0
        %2831 = vmatprep.subr.mxu0 0.0
        %2832 = vmatpush1.msra.mxu0 0.0
        %2833 = vmatprep.subr.mxu0 0.0
        %2834 = vmatpush1.msra.mxu0 0.0
        %2835 = vmatprep.subr.mxu0 0.0
        %2836 = vmatpush1.msra.mxu0 0.0
        %2837 = vmatprep.subr.mxu0 0.0
        %2838 = vmatpush1.msra.mxu0 0.0
        %2839 = vmatprep.subr.mxu0 0.0
        %2840 = vmatpush1.msra.mxu0 0.0
        %2841 = vmatprep.subr.mxu0 0.0
        %2842 = vmatpush1.msra.mxu0 0.0
        %2843 = vmatprep.subr.mxu0 0.0
        %2844 = vmatpush1.msra.mxu0 0.0
        %2845 = vmatprep.subr.mxu0 0.0
        %2846 = vmatpush1.msra.mxu0 0.0
        %2847 = vmatprep.subr.mxu0 0.0
        %2848 = vmatpush1.msra.mxu0 0.0
        %2849 = vmatprep.mubr.f32.mxu0 0.0
        %2850 = vmatmul.mubr.f32.gmra.mrb[0].mxu0 %v2780
        %v2851 = vpop.f32.mrb[0].mxu0
        %v2852 = vadd.f32 %v2777, %v2851
        %v2853 = vpop.f32.mrb[0].mxu0
        %2854 = vmatprep.mubr.f32.mxu0 0.0
        %2855 = vmatmul.mubr.f32.gmra.mrb[0].mxu0 %v2783
        %v2856 = vpop.f32.mrb[0].mxu0
        %v2857 = vadd.f32 %v2777, %v2856
        %v2858 = vpop.f32.mrb[0].mxu0
        %2859 = vdwg.mxu0
        %2864 = vrot.lane.b32.xlu0 %v2768, 96
        %v2865 = vpop.permute.xlu0 %2864
        %2866 = vrot.lane.b32.xlu0 %v2769, 96
        %v2867 = vpop.permute.xlu0 %2866
        %2868 = vrot.lane.b32.xlu0 %v2770, 96
        %v2869 = vpop.permute.xlu0 %2868
        %2870 = vrot.lane.b32.xlu0 %v2771, 96
        %v2871 = vpop.permute.xlu0 %2870
        %2876 = vrot.lane.b32.xlu0 %v2777, 96
        %v2877 = vpop.permute.xlu0 %2876
        %v2880 = vsel %vm969, %v956, 0
        %v2883 = vsel %vm969, %v957, 0
        %2885 = vmatprep.subr.mxu0 0.0
        %2886 = vmatpush1.msra.mxu0 %v2865
        %2887 = vmatprep.subr.mxu0 0.0
        %2888 = vmatpush1.msra.mxu0 %v2867
        %2889 = vmatprep.subr.mxu0 0.0
        %2890 = vmatpush1.msra.mxu0 %v2869
        %2891 = vmatprep.subr.mxu0 0.0
        %2892 = vmatpush1.msra.mxu0 %v2871
        %2893 = vmatprep.subr.mxu0 0.0
        %2894 = vmatpush1.msra.mxu0 0.0
        %2895 = vmatprep.subr.mxu0 0.0
        %2896 = vmatpush1.msra.mxu0 0.0
        %2897 = vmatprep.subr.mxu0 0.0
        %2898 = vmatpush1.msra.mxu0 0.0
        %2899 = vmatprep.subr.mxu0 0.0
        %2900 = vmatpush1.msra.mxu0 0.0
        %2901 = vmatprep.subr.mxu0 0.0
        %2902 = vmatpush1.msra.mxu0 0.0
        %2903 = vmatprep.subr.mxu0 0.0
        %2904 = vmatpush1.msra.mxu0 0.0
        %2905 = vmatprep.subr.mxu0 0.0
        %2906 = vmatpush1.msra.mxu0 0.0
        %2907 = vmatprep.subr.mxu0 0.0
        %2908 = vmatpush1.msra.mxu0 0.0
        %2909 = vmatprep.subr.mxu0 0.0
        %2910 = vmatpush1.msra.mxu0 0.0
        %2911 = vmatprep.subr.mxu0 0.0
        %2912 = vmatpush1.msra.mxu0 0.0
        %2913 = vmatprep.subr.mxu0 0.0
        %2914 = vmatpush1.msra.mxu0 0.0
        %2915 = vmatprep.subr.mxu0 0.0
        %2916 = vmatpush1.msra.mxu0 0.0
        %2917 = vmatprep.subr.mxu0 0.0
        %2918 = vmatpush1.msra.mxu0 0.0
        %2919 = vmatprep.subr.mxu0 0.0
        %2920 = vmatpush1.msra.mxu0 0.0
        %2921 = vmatprep.subr.mxu0 0.0
        %2922 = vmatpush1.msra.mxu0 0.0
        %2923 = vmatprep.subr.mxu0 0.0
        %2924 = vmatpush1.msra.mxu0 0.0
        %2925 = vmatprep.subr.mxu0 0.0
        %2926 = vmatpush1.msra.mxu0 0.0
        %2927 = vmatprep.subr.mxu0 0.0
        %2928 = vmatpush1.msra.mxu0 0.0
        %2929 = vmatprep.subr.mxu0 0.0
        %2930 = vmatpush1.msra.mxu0 0.0
        %2931 = vmatprep.subr.mxu0 0.0
        %2932 = vmatpush1.msra.mxu0 0.0
        %2933 = vmatprep.subr.mxu0 0.0
        %2934 = vmatpush1.msra.mxu0 0.0
        %2935 = vmatprep.subr.mxu0 0.0
        %2936 = vmatpush1.msra.mxu0 0.0
        %2937 = vmatprep.subr.mxu0 0.0
        %2938 = vmatpush1.msra.mxu0 0.0
        %2939 = vmatprep.subr.mxu0 0.0
        %2940 = vmatpush1.msra.mxu0 0.0
        %2941 = vmatprep.subr.mxu0 0.0
        %2942 = vmatpush1.msra.mxu0 0.0
        %2943 = vmatprep.subr.mxu0 0.0
        %2944 = vmatpush1.msra.mxu0 0.0
        %2945 = vmatprep.subr.mxu0 0.0
        %2946 = vmatpush1.msra.mxu0 0.0
        %2947 = vmatprep.subr.mxu0 0.0
        %2948 = vmatpush1.msra.mxu0 0.0
        %2949 = vmatprep.mubr.f32.mxu0 0.0
        %2950 = vmatmul.mubr.f32.gmra.mrb[0].mxu0 %v2880
        %v2951 = vpop.f32.mrb[0].mxu0
        %v2952 = vadd.f32 %v2877, %v2951
        %v2953 = vpop.f32.mrb[0].mxu0
        %2954 = vmatprep.mubr.f32.mxu0 0.0
        %2955 = vmatmul.mubr.f32.gmra.mrb[0].mxu0 %v2883
        %v2956 = vpop.f32.mrb[0].mxu0
        %v2957 = vadd.f32 %v2877, %v2956
        %v2958 = vpop.f32.mrb[0].mxu0
        %2959 = vdwg.mxu0
        %v2960 = vld [vmem:[%s768] sm:$0xff]
        %v2961 = vld [vmem:[%s768 + $0x8] sm:$0xff]
        %v2962 = vld [vmem:[%s768 + $0x10] sm:$0xff]
        %v2963 = vld [vmem:[%s768 + $0x18] sm:$0xff]
        %v2964 = vld [vmem:[%s916] sm:$0x1]
        %v2966 = vlaneseq
        %v2967 = vshrl.u32 %v2966, 7
        %v2968 = vsub.s32 0, %v2967
        %v2969 = vrot.slane %v2964, %v2968
        %v2972 = vsel %vm1065, %v2852, 0
        %v2975 = vsel %vm1065, %v2952, 0
        %2977 = vmatprep.subr.mxu0 0.0
        %2978 = vmatpush1.xpose.msra.mxu0 %v2975
        %2979 = vmatprep.subr.mxu0 0.0
        %2980 = vmatpush1.xpose.msra.mxu0 0.0
        %2981 = vmatprep.subr.mxu0 0.0
        %2982 = vmatpush1.xpose.msra.mxu0 0.0
        %2983 = vmatprep.subr.mxu0 0.0
        %2984 = vmatpush1.xpose.msra.mxu0 0.0
        %2985 = vmatprep.subr.mxu0 0.0
        %2986 = vmatpush1.xpose.msra.mxu0 0.0
        %2987 = vmatprep.subr.mxu0 0.0
        %2988 = vmatpush1.xpose.msra.mxu0 0.0
        %2989 = vmatprep.subr.mxu0 0.0
        %2990 = vmatpush1.xpose.msra.mxu0 0.0
        %2991 = vmatprep.subr.mxu0 0.0
        %2992 = vmatpush1.xpose.msra.mxu0 0.0
        %2993 = vmatprep.subr.mxu0 0.0
        %2994 = vmatpush1.xpose.msra.mxu0 0.0
        %2995 = vmatprep.subr.mxu0 0.0
        %2996 = vmatpush1.xpose.msra.mxu0 0.0
        %2997 = vmatprep.subr.mxu0 0.0
        %2998 = vmatpush1.xpose.msra.mxu0 0.0
        %2999 = vmatprep.subr.mxu0 0.0
        %3000 = vmatpush1.xpose.msra.mxu0 0.0
        %3001 = vmatprep.subr.mxu0 0.0
        %3002 = vmatpush1.xpose.msra.mxu0 0.0
        %3003 = vmatprep.subr.mxu0 0.0
        %3004 = vmatpush1.xpose.msra.mxu0 0.0
        %3005 = vmatprep.subr.mxu0 0.0
        %3006 = vmatpush1.xpose.msra.mxu0 0.0
        %3007 = vmatprep.subr.mxu0 0.0
        %3008 = vmatpush1.xpose.msra.mxu0 0.0
        %3009 = vmatprep.subr.mxu0 0.0
        %3010 = vmatpush1.xpose.msra.mxu0 0.0
        %3011 = vmatprep.subr.mxu0 0.0
        %3012 = vmatpush1.xpose.msra.mxu0 0.0
        %3013 = vmatprep.subr.mxu0 0.0
        %3014 = vmatpush1.xpose.msra.mxu0 0.0
        %3015 = vmatprep.subr.mxu0 0.0
        %3016 = vmatpush1.xpose.msra.mxu0 0.0
        %3017 = vmatprep.subr.mxu0 0.0
        %3018 = vmatpush1.xpose.msra.mxu0 0.0
        %3019 = vmatprep.subr.mxu0 0.0
        %3020 = vmatpush1.xpose.msra.mxu0 0.0
        %3021 = vmatprep.subr.mxu0 0.0
        %3022 = vmatpush1.xpose.msra.mxu0 0.0
        %3023 = vmatprep.subr.mxu0 0.0
        %3024 = vmatpush1.xpose.msra.mxu0 0.0
        %3025 = vmatprep.subr.mxu0 0.0
        %3026 = vmatpush1.xpose.msra.mxu0 0.0
        %3027 = vmatprep.subr.mxu0 0.0
        %3028 = vmatpush1.xpose.msra.mxu0 0.0
        %3029 = vmatprep.subr.mxu0 0.0
        %3030 = vmatpush1.xpose.msra.mxu0 0.0
        %3031 = vmatprep.subr.mxu0 0.0
        %3032 = vmatpush1.xpose.msra.mxu0 0.0
        %3033 = vmatprep.subr.mxu0 0.0
        %3034 = vmatpush1.xpose.msra.mxu0 0.0
        %3035 = vmatprep.subr.mxu0 0.0
        %3036 = vmatpush1.xpose.msra.mxu0 0.0
        %3037 = vmatprep.subr.mxu0 0.0
        %3038 = vmatpush1.xpose.msra.mxu0 0.0
        %3039 = vmatprep.subr.mxu0 0.0
        %3040 = vmatpush1.xpose.msra.mxu0 0.0
        %3041 = vmatprep.mubr.f32.mxu0 0.0
        %3042 = vmatmul.mubr.f32.gmra.mrb[0].mxu0 %v2972
        %v3043 = vpop.f32.mrb[0].mxu0
        %v3044 = vadd.f32 0.0, %v3043
        %v3045 = vpop.f32.mrb[0].mxu0
        %3046 = vdwg.mxu0
        %v3048 = vsel %vm1065, %v2857, 0
        %v3051 = vsel %vm1065, %v2957, 0
        %3053 = vmatprep.subr.mxu0 0.0
        %3054 = vmatpush1.xpose.msra.mxu0 %v3051
        %3055 = vmatprep.subr.mxu0 0.0
        %3056 = vmatpush1.xpose.msra.mxu0 0.0
        %3057 = vmatprep.subr.mxu0 0.0
        %3058 = vmatpush1.xpose.msra.mxu0 0.0
        %3059 = vmatprep.subr.mxu0 0.0
        %3060 = vmatpush1.xpose.msra.mxu0 0.0
        %3061 = vmatprep.subr.mxu0 0.0
        %3062 = vmatpush1.xpose.msra.mxu0 0.0
        %3063 = vmatprep.subr.mxu0 0.0
        %3064 = vmatpush1.xpose.msra.mxu0 0.0
        %3065 = vmatprep.subr.mxu0 0.0
        %3066 = vmatpush1.xpose.msra.mxu0 0.0
        %3067 = vmatprep.subr.mxu0 0.0
        %3068 = vmatpush1.xpose.msra.mxu0 0.0
        %3069 = vmatprep.subr.mxu0 0.0
        %3070 = vmatpush1.xpose.msra.mxu0 0.0
        %3071 = vmatprep.subr.mxu0 0.0
        %3072 = vmatpush1.xpose.msra.mxu0 0.0
        %3073 = vmatprep.subr.mxu0 0.0
        %3074 = vmatpush1.xpose.msra.mxu0 0.0
        %3075 = vmatprep.subr.mxu0 0.0
        %3076 = vmatpush1.xpose.msra.mxu0 0.0
        %3077 = vmatprep.subr.mxu0 0.0
        %3078 = vmatpush1.xpose.msra.mxu0 0.0
        %3079 = vmatprep.subr.mxu0 0.0
        %3080 = vmatpush1.xpose.msra.mxu0 0.0
        %3081 = vmatprep.subr.mxu0 0.0
        %3082 = vmatpush1.xpose.msra.mxu0 0.0
        %3083 = vmatprep.subr.mxu0 0.0
        %3084 = vmatpush1.xpose.msra.mxu0 0.0
        %3085 = vmatprep.subr.mxu0 0.0
        %3086 = vmatpush1.xpose.msra.mxu0 0.0
        %3087 = vmatprep.subr.mxu0 0.0
        %3088 = vmatpush1.xpose.msra.mxu0 0.0
        %3089 = vmatprep.subr.mxu0 0.0
        %3090 = vmatpush1.xpose.msra.mxu0 0.0
        %3091 = vmatprep.subr.mxu0 0.0
        %3092 = vmatpush1.xpose.msra.mxu0 0.0
        %3093 = vmatprep.subr.mxu0 0.0
        %3094 = vmatpush1.xpose.msra.mxu0 0.0
        %3095 = vmatprep.subr.mxu0 0.0
        %3096 = vmatpush1.xpose.msra.mxu0 0.0
        %3097 = vmatprep.subr.mxu0 0.0
        %3098 = vmatpush1.xpose.msra.mxu0 0.0
        %3099 = vmatprep.subr.mxu0 0.0
        %3100 = vmatpush1.xpose.msra.mxu0 0.0
        %3101 = vmatprep.subr.mxu0 0.0
        %3102 = vmatpush1.xpose.msra.mxu0 0.0
        %3103 = vmatprep.subr.mxu0 0.0
        %3104 = vmatpush1.xpose.msra.mxu0 0.0
        %3105 = vmatprep.subr.mxu0 0.0
        %3106 = vmatpush1.xpose.msra.mxu0 0.0
        %3107 = vmatprep.subr.mxu0 0.0
        %3108 = vmatpush1.xpose.msra.mxu0 0.0
        %3109 = vmatprep.subr.mxu0 0.0
        %3110 = vmatpush1.xpose.msra.mxu0 0.0
        %3111 = vmatprep.subr.mxu0 0.0
        %3112 = vmatpush1.xpose.msra.mxu0 0.0
        %3113 = vmatprep.subr.mxu0 0.0
        %3114 = vmatpush1.xpose.msra.mxu0 0.0
        %3115 = vmatprep.subr.mxu0 0.0
        %3116 = vmatpush1.xpose.msra.mxu0 0.0
        %3117 = vmatprep.mubr.f32.mxu0 0.0
        %3118 = vmatmul.mubr.f32.gmra.mrb[0].mxu0 %v3048
        %v3119 = vpop.f32.mrb[0].mxu0
        %v3120 = vadd.f32 0.0, %v3119
        %v3121 = vpop.f32.mrb[0].mxu0
        %3122 = vdwg.mxu0
        %v3123 = vmul.f32 %v3044, 0.35355338
        %v3124 = vmul.f32 %v3120, 0.35355338
        %v3125 = vsel %vm1065, %v3123, -inf
        %3126 = vmax.xlane.f32.xlu0 %v3125
        %v3127 = vpop.xlane.xlu0 %3126
        %v3128 = vsel %vm1065, %v3124, -inf
        %3129 = vmax.xlane.f32.xlu0 %v3128
        %v3130 = vpop.xlane.xlu0 %3129
        %v3131 = vsub.f32 %v3123, %v3127
        %v3132 = vsub.f32 %v3124, %v3130
        %v3133 = vmul.f32 %v3131, 1.442695
        %v3134 = vpow.pop %v3133
        %v3135 = vmul.f32 %v3132, 1.442695
        %v3136 = vpow.pop %v3135
        %v3137 = vsel %vm1065, %v3134, 0.0
        %3138 = vadd.xlane.f32.xlu0 %v3137
        %v3139 = vpop.xlane.xlu0 %3138
        %v3140 = vsel %vm1065, %v3136, 0.0
        %3141 = vadd.xlane.f32.xlu0 %v3140
        %v3142 = vpop.xlane.xlu0 %3141
        %v3143 = vrcp.pop %v3139
        %v3144 = vrcp.pop %v3142
        %v3145 = vmul.f32 %v3134, %v3143
        %v3146 = vmul.f32 %v3136, %v3144
        %3147 = vrot.lane.b32.xlu0 %v2952, 96
        %v3148 = vpop.permute.xlu0 %3147
        %v3151 = vsel %vm1065, %v3145, 0
        %3153 = vmatprep.subr.mxu0 0.0
        %3154 = vmatpush1.msra.mxu0 %v3148
        %3155 = vmatprep.subr.mxu0 0.0
        %3156 = vmatpush1.msra.mxu0 0.0
        %3157 = vmatprep.subr.mxu0 0.0
        %3158 = vmatpush1.msra.mxu0 0.0
        %3159 = vmatprep.subr.mxu0 0.0
        %3160 = vmatpush1.msra.mxu0 0.0
        %3161 = vmatprep.subr.mxu0 0.0
        %3162 = vmatpush1.msra.mxu0 0.0
        %3163 = vmatprep.subr.mxu0 0.0
        %3164 = vmatpush1.msra.mxu0 0.0
        %3165 = vmatprep.subr.mxu0 0.0
        %3166 = vmatpush1.msra.mxu0 0.0
        %3167 = vmatprep.subr.mxu0 0.0
        %3168 = vmatpush1.msra.mxu0 0.0
        %3169 = vmatprep.subr.mxu0 0.0
        %3170 = vmatpush1.msra.mxu0 0.0
        %3171 = vmatprep.subr.mxu0 0.0
        %3172 = vmatpush1.msra.mxu0 0.0
        %3173 = vmatprep.subr.mxu0 0.0
        %3174 = vmatpush1.msra.mxu0 0.0
        %3175 = vmatprep.subr.mxu0 0.0
        %3176 = vmatpush1.msra.mxu0 0.0
        %3177 = vmatprep.subr.mxu0 0.0
        %3178 = vmatpush1.msra.mxu0 0.0
        %3179 = vmatprep.subr.mxu0 0.0
        %3180 = vmatpush1.msra.mxu0 0.0
        %3181 = vmatprep.subr.mxu0 0.0
        %3182 = vmatpush1.msra.mxu0 0.0
        %3183 = vmatprep.subr.mxu0 0.0
        %3184 = vmatpush1.msra.mxu0 0.0
        %3185 = vmatprep.subr.mxu0 0.0
        %3186 = vmatpush1.msra.mxu0 0.0
        %3187 = vmatprep.subr.mxu0 0.0
        %3188 = vmatpush1.msra.mxu0 0.0
        %3189 = vmatprep.subr.mxu0 0.0
        %3190 = vmatpush1.msra.mxu0 0.0
        %3191 = vmatprep.subr.mxu0 0.0
        %3192 = vmatpush1.msra.mxu0 0.0
        %3193 = vmatprep.subr.mxu0 0.0
        %3194 = vmatpush1.msra.mxu0 0.0
        %3195 = vmatprep.subr.mxu0 0.0
        %3196 = vmatpush1.msra.mxu0 0.0
        %3197 = vmatprep.subr.mxu0 0.0
        %3198 = vmatpush1.msra.mxu0 0.0
        %3199 = vmatprep.subr.mxu0 0.0
        %3200 = vmatpush1.msra.mxu0 0.0
        %3201 = vmatprep.subr.mxu0 0.0
        %3202 = vmatpush1.msra.mxu0 0.0
        %3203 = vmatprep.subr.mxu0 0.0
        %3204 = vmatpush1.msra.mxu0 0.0
        %3205 = vmatprep.subr.mxu0 0.0
        %3206 = vmatpush1.msra.mxu0 0.0
        %3207 = vmatprep.subr.mxu0 0.0
        %3208 = vmatpush1.msra.mxu0 0.0
        %3209 = vmatprep.subr.mxu0 0.0
        %3210 = vmatpush1.msra.mxu0 0.0
        %3211 = vmatprep.subr.mxu0 0.0
        %3212 = vmatpush1.msra.mxu0 0.0
        %3213 = vmatprep.subr.mxu0 0.0
        %3214 = vmatpush1.msra.mxu0 0.0
        %3215 = vmatprep.subr.mxu0 0.0
        %3216 = vmatpush1.msra.mxu0 0.0
        %3217 = vmatprep.mubr.f32.mxu0 0.0
        %3218 = vmatmul.mubr.f32.gmra.mrb[0].mxu0 %v3151
        %v3219 = vpop.f32.mrb[0].mxu0
        %v3220 = vadd.f32 0.0, %v3219
        %v3221 = vpop.f32.mrb[0].mxu0
        %3222 = vdwg.mxu0
        %3223 = vrot.lane.b32.xlu0 %v2957, 96
        %v3224 = vpop.permute.xlu0 %3223
        %v3227 = vsel %vm1065, %v3146, 0
        %3229 = vmatprep.subr.mxu0 0.0
        %3230 = vmatpush1.msra.mxu0 %v3224
        %3231 = vmatprep.subr.mxu0 0.0
        %3232 = vmatpush1.msra.mxu0 0.0
        %3233 = vmatprep.subr.mxu0 0.0
        %3234 = vmatpush1.msra.mxu0 0.0
        %3235 = vmatprep.subr.mxu0 0.0
        %3236 = vmatpush1.msra.mxu0 0.0
        %3237 = vmatprep.subr.mxu0 0.0
        %3238 = vmatpush1.msra.mxu0 0.0
        %3239 = vmatprep.subr.mxu0 0.0
        %3240 = vmatpush1.msra.mxu0 0.0
        %3241 = vmatprep.subr.mxu0 0.0
        %3242 = vmatpush1.msra.mxu0 0.0
        %3243 = vmatprep.subr.mxu0 0.0
        %3244 = vmatpush1.msra.mxu0 0.0
        %3245 = vmatprep.subr.mxu0 0.0
        %3246 = vmatpush1.msra.mxu0 0.0
        %3247 = vmatprep.subr.mxu0 0.0
        %3248 = vmatpush1.msra.mxu0 0.0
        %3249 = vmatprep.subr.mxu0 0.0
        %3250 = vmatpush1.msra.mxu0 0.0
        %3251 = vmatprep.subr.mxu0 0.0
        %3252 = vmatpush1.msra.mxu0 0.0
        %3253 = vmatprep.subr.mxu0 0.0
        %3254 = vmatpush1.msra.mxu0 0.0
        %3255 = vmatprep.subr.mxu0 0.0
        %3256 = vmatpush1.msra.mxu0 0.0
        %3257 = vmatprep.subr.mxu0 0.0
        %3258 = vmatpush1.msra.mxu0 0.0
        %3259 = vmatprep.subr.mxu0 0.0
        %3260 = vmatpush1.msra.mxu0 0.0
        %3261 = vmatprep.subr.mxu0 0.0
        %3262 = vmatpush1.msra.mxu0 0.0
        %3263 = vmatprep.subr.mxu0 0.0
        %3264 = vmatpush1.msra.mxu0 0.0
        %3265 = vmatprep.subr.mxu0 0.0
        %3266 = vmatpush1.msra.mxu0 0.0
        %3267 = vmatprep.subr.mxu0 0.0
        %3268 = vmatpush1.msra.mxu0 0.0
        %3269 = vmatprep.subr.mxu0 0.0
        %3270 = vmatpush1.msra.mxu0 0.0
        %3271 = vmatprep.subr.mxu0 0.0
        %3272 = vmatpush1.msra.mxu0 0.0
        %3273 = vmatprep.subr.mxu0 0.0
        %3274 = vmatpush1.msra.mxu0 0.0
        %3275 = vmatprep.subr.mxu0 0.0
        %3276 = vmatpush1.msra.mxu0 0.0
        %3277 = vmatprep.subr.mxu0 0.0
        %3278 = vmatpush1.msra.mxu0 0.0
        %3279 = vmatprep.subr.mxu0 0.0
        %3280 = vmatpush1.msra.mxu0 0.0
        %3281 = vmatprep.subr.mxu0 0.0
        %3282 = vmatpush1.msra.mxu0 0.0
        %3283 = vmatprep.subr.mxu0 0.0
        %3284 = vmatpush1.msra.mxu0 0.0
        %3285 = vmatprep.subr.mxu0 0.0
        %3286 = vmatpush1.msra.mxu0 0.0
        %3287 = vmatprep.subr.mxu0 0.0
        %3288 = vmatpush1.msra.mxu0 0.0
        %3289 = vmatprep.subr.mxu0 0.0
        %3290 = vmatpush1.msra.mxu0 0.0
        %3291 = vmatprep.subr.mxu0 0.0
        %3292 = vmatpush1.msra.mxu0 0.0
        %3293 = vmatprep.mubr.f32.mxu0 0.0
        %3294 = vmatmul.mubr.f32.gmra.mrb[0].mxu0 %v3227
        %v3295 = vpop.f32.mrb[0].mxu0
        %v3296 = vadd.f32 0.0, %v3295
        %v3297 = vpop.f32.mrb[0].mxu0
        %3298 = vdwg.mxu0
        %v3300 = vsel %vm1065, %v3220, 0
        %v3303 = vsel %vm1065, %v3296, 0
        %3305 = vmatprep.subr.mxu0 0.0
        %3306 = vmatpush1.msra.mxu0 %v2960
        %3307 = vmatprep.subr.mxu0 0.0
        %3308 = vmatpush1.msra.mxu0 0.0
        %3309 = vmatprep.subr.mxu0 0.0
        %3310 = vmatpush1.msra.mxu0 0.0
        %3311 = vmatprep.subr.mxu0 0.0
        %3312 = vmatpush1.msra.mxu0 0.0
        %3313 = vmatprep.subr.mxu0 0.0
        %3314 = vmatpush1.msra.mxu0 0.0
        %3315 = vmatprep.subr.mxu0 0.0
        %3316 = vmatpush1.msra.mxu0 0.0
        %3317 = vmatprep.subr.mxu0 0.0
        %3318 = vmatpush1.msra.mxu0 0.0
        %3319 = vmatprep.subr.mxu0 0.0
        %3320 = vmatpush1.msra.mxu0 0.0
        %3321 = vmatprep.subr.mxu0 0.0
        %3322 = vmatpush1.msra.mxu0 0.0
        %3323 = vmatprep.subr.mxu0 0.0
        %3324 = vmatpush1.msra.mxu0 0.0
        %3325 = vmatprep.subr.mxu0 0.0
        %3326 = vmatpush1.msra.mxu0 0.0
        %3327 = vmatprep.subr.mxu0 0.0
        %3328 = vmatpush1.msra.mxu0 0.0
        %3329 = vmatprep.subr.mxu0 0.0
        %3330 = vmatpush1.msra.mxu0 0.0
        %3331 = vmatprep.subr.mxu0 0.0
        %3332 = vmatpush1.msra.mxu0 0.0
        %3333 = vmatprep.subr.mxu0 0.0
        %3334 = vmatpush1.msra.mxu0 0.0
        %3335 = vmatprep.subr.mxu0 0.0
        %3336 = vmatpush1.msra.mxu0 0.0
        %3337 = vmatprep.subr.mxu0 0.0
        %3338 = vmatpush1.msra.mxu0 0.0
        %3339 = vmatprep.subr.mxu0 0.0
        %3340 = vmatpush1.msra.mxu0 0.0
        %3341 = vmatprep.subr.mxu0 0.0
        %3342 = vmatpush1.msra.mxu0 0.0
        %3343 = vmatprep.subr.mxu0 0.0
        %3344 = vmatpush1.msra.mxu0 0.0
        %3345 = vmatprep.subr.mxu0 0.0
        %3346 = vmatpush1.msra.mxu0 0.0
        %3347 = vmatprep.subr.mxu0 0.0
        %3348 = vmatpush1.msra.mxu0 0.0
        %3349 = vmatprep.subr.mxu0 0.0
        %3350 = vmatpush1.msra.mxu0 0.0
        %3351 = vmatprep.subr.mxu0 0.0
        %3352 = vmatpush1.msra.mxu0 0.0
        %3353 = vmatprep.subr.mxu0 0.0
        %3354 = vmatpush1.msra.mxu0 0.0
        %3355 = vmatprep.subr.mxu0 0.0
        %3356 = vmatpush1.msra.mxu0 0.0
        %3357 = vmatprep.subr.mxu0 0.0
        %3358 = vmatpush1.msra.mxu0 0.0
        %3359 = vmatprep.subr.mxu0 0.0
        %3360 = vmatpush1.msra.mxu0 0.0
        %3361 = vmatprep.subr.mxu0 0.0
        %3362 = vmatpush1.msra.mxu0 0.0
        %3363 = vmatprep.subr.mxu0 0.0
        %3364 = vmatpush1.msra.mxu0 0.0
        %3365 = vmatprep.subr.mxu0 0.0
        %3366 = vmatpush1.msra.mxu0 0.0
        %3367 = vmatprep.subr.mxu0 0.0
        %3368 = vmatpush1.msra.mxu0 0.0
        %3369 = vmatprep.mubr.f32.mxu0 0.0
        %3370 = vmatmul.mubr.f32.gmra.mrb[0].mxu0 %v3300
        %v3371 = vpop.f32.mrb[0].mxu0
        %v3372 = vadd.f32 0.0, %v3371
        %v3373 = vpop.f32.mrb[0].mxu0
        %3374 = vmatprep.mubr.f32.mxu0 0.0
        %3375 = vmatmul.mubr.f32.gmra.mrb[0].mxu0 %v3303
        %v3376 = vpop.f32.mrb[0].mxu0
        %v3377 = vadd.f32 0.0, %v3376
        %v3378 = vpop.f32.mrb[0].mxu0
        %3379 = vdwg.mxu0
        %v3380 = vadd.f32 %v2969, %v3372
        %v3381 = vadd.f32 %v2969, %v3377
        %3382 = vrot.lane.b32.xlu0 %v2852, 120
        %v3383 = vpop.permute.xlu0 %3382
        %3384 = vrot.lane.b32.xlu0 %v2952, 120
        %v3385 = vpop.permute.xlu0 %3384
        %v3386 = vsel %vm1065, %v3383, 0
        %v3388 = vsel %vm1065, %v3385, 0
        %3390 = vmatprep.subr.mxu0 0.0
        %3391 = vmatpush1.xpose.msra.mxu0 %v3388
        %3392 = vmatprep.subr.mxu0 0.0
        %3393 = vmatpush1.xpose.msra.mxu0 0.0
        %3394 = vmatprep.subr.mxu0 0.0
        %3395 = vmatpush1.xpose.msra.mxu0 0.0
        %3396 = vmatprep.subr.mxu0 0.0
        %3397 = vmatpush1.xpose.msra.mxu0 0.0
        %3398 = vmatprep.subr.mxu0 0.0
        %3399 = vmatpush1.xpose.msra.mxu0 0.0
        %3400 = vmatprep.subr.mxu0 0.0
        %3401 = vmatpush1.xpose.msra.mxu0 0.0
        %3402 = vmatprep.subr.mxu0 0.0
        %3403 = vmatpush1.xpose.msra.mxu0 0.0
        %3404 = vmatprep.subr.mxu0 0.0
        %3405 = vmatpush1.xpose.msra.mxu0 0.0
        %3406 = vmatprep.subr.mxu0 0.0
        %3407 = vmatpush1.xpose.msra.mxu0 0.0
        %3408 = vmatprep.subr.mxu0 0.0
        %3409 = vmatpush1.xpose.msra.mxu0 0.0
        %3410 = vmatprep.subr.mxu0 0.0
        %3411 = vmatpush1.xpose.msra.mxu0 0.0
        %3412 = vmatprep.subr.mxu0 0.0
        %3413 = vmatpush1.xpose.msra.mxu0 0.0
        %3414 = vmatprep.subr.mxu0 0.0
        %3415 = vmatpush1.xpose.msra.mxu0 0.0
        %3416 = vmatprep.subr.mxu0 0.0
        %3417 = vmatpush1.xpose.msra.mxu0 0.0
        %3418 = vmatprep.subr.mxu0 0.0
        %3419 = vmatpush1.xpose.msra.mxu0 0.0
        %3420 = vmatprep.subr.mxu0 0.0
        %3421 = vmatpush1.xpose.msra.mxu0 0.0
        %3422 = vmatprep.subr.mxu0 0.0
        %3423 = vmatpush1.xpose.msra.mxu0 0.0
        %3424 = vmatprep.subr.mxu0 0.0
        %3425 = vmatpush1.xpose.msra.mxu0 0.0
        %3426 = vmatprep.subr.mxu0 0.0
        %3427 = vmatpush1.xpose.msra.mxu0 0.0
        %3428 = vmatprep.subr.mxu0 0.0
        %3429 = vmatpush1.xpose.msra.mxu0 0.0
        %3430 = vmatprep.subr.mxu0 0.0
        %3431 = vmatpush1.xpose.msra.mxu0 0.0
        %3432 = vmatprep.subr.mxu0 0.0
        %3433 = vmatpush1.xpose.msra.mxu0 0.0
        %3434 = vmatprep.subr.mxu0 0.0
        %3435 = vmatpush1.xpose.msra.mxu0 0.0
        %3436 = vmatprep.subr.mxu0 0.0
        %3437 = vmatpush1.xpose.msra.mxu0 0.0
        %3438 = vmatprep.subr.mxu0 0.0
        %3439 = vmatpush1.xpose.msra.mxu0 0.0
        %3440 = vmatprep.subr.mxu0 0.0
        %3441 = vmatpush1.xpose.msra.mxu0 0.0
        %3442 = vmatprep.subr.mxu0 0.0
        %3443 = vmatpush1.xpose.msra.mxu0 0.0
        %3444 = vmatprep.subr.mxu0 0.0
        %3445 = vmatpush1.xpose.msra.mxu0 0.0
        %3446 = vmatprep.subr.mxu0 0.0
        %3447 = vmatpush1.xpose.msra.mxu0 0.0
        %3448 = vmatprep.subr.mxu0 0.0
        %3449 = vmatpush1.xpose.msra.mxu0 0.0
        %3450 = vmatprep.subr.mxu0 0.0
        %3451 = vmatpush1.xpose.msra.mxu0 0.0
        %3452 = vmatprep.subr.mxu0 0.0
        %3453 = vmatpush1.xpose.msra.mxu0 0.0
        %3454 = vmatprep.mubr.f32.mxu0 0.0
        %3455 = vmatmul.mubr.f32.gmra.mrb[0].mxu0 %v3386
        %v3456 = vpop.f32.mrb[0].mxu0
        %v3457 = vadd.f32 0.0, %v3456
        %v3458 = vpop.f32.mrb[0].mxu0
        %3459 = vdwg.mxu0
        %3460 = vrot.lane.b32.xlu0 %v2857, 120
        %v3461 = vpop.permute.xlu0 %3460
        %3462 = vrot.lane.b32.xlu0 %v2957, 120
        %v3463 = vpop.permute.xlu0 %3462
        %v3464 = vsel %vm1065, %v3461, 0
        %v3466 = vsel %vm1065, %v3463, 0
        %3468 = vmatprep.subr.mxu0 0.0
        %3469 = vmatpush1.xpose.msra.mxu0 %v3466
        %3470 = vmatprep.subr.mxu0 0.0
        %3471 = vmatpush1.xpose.msra.mxu0 0.0
        %3472 = vmatprep.subr.mxu0 0.0
        %3473 = vmatpush1.xpose.msra.mxu0 0.0
        %3474 = vmatprep.subr.mxu0 0.0
        %3475 = vmatpush1.xpose.msra.mxu0 0.0
        %3476 = vmatprep.subr.mxu0 0.0
        %3477 = vmatpush1.xpose.msra.mxu0 0.0
        %3478 = vmatprep.subr.mxu0 0.0
        %3479 = vmatpush1.xpose.msra.mxu0 0.0
        %3480 = vmatprep.subr.mxu0 0.0
        %3481 = vmatpush1.xpose.msra.mxu0 0.0
        %3482 = vmatprep.subr.mxu0 0.0
        %3483 = vmatpush1.xpose.msra.mxu0 0.0
        %3484 = vmatprep.subr.mxu0 0.0
        %3485 = vmatpush1.xpose.msra.mxu0 0.0
        %3486 = vmatprep.subr.mxu0 0.0
        %3487 = vmatpush1.xpose.msra.mxu0 0.0
        %3488 = vmatprep.subr.mxu0 0.0
        %3489 = vmatpush1.xpose.msra.mxu0 0.0
        %3490 = vmatprep.subr.mxu0 0.0
        %3491 = vmatpush1.xpose.msra.mxu0 0.0
        %3492 = vmatprep.subr.mxu0 0.0
        %3493 = vmatpush1.xpose.msra.mxu0 0.0
        %3494 = vmatprep.subr.mxu0 0.0
        %3495 = vmatpush1.xpose.msra.mxu0 0.0
        %3496 = vmatprep.subr.mxu0 0.0
        %3497 = vmatpush1.xpose.msra.mxu0 0.0
        %3498 = vmatprep.subr.mxu0 0.0
        %3499 = vmatpush1.xpose.msra.mxu0 0.0
        %3500 = vmatprep.subr.mxu0 0.0
        %3501 = vmatpush1.xpose.msra.mxu0 0.0
        %3502 = vmatprep.subr.mxu0 0.0
        %3503 = vmatpush1.xpose.msra.mxu0 0.0
        %3504 = vmatprep.subr.mxu0 0.0
        %3505 = vmatpush1.xpose.msra.mxu0 0.0
        %3506 = vmatprep.subr.mxu0 0.0
        %3507 = vmatpush1.xpose.msra.mxu0 0.0
        %3508 = vmatprep.subr.mxu0 0.0
        %3509 = vmatpush1.xpose.msra.mxu0 0.0
        %3510 = vmatprep.subr.mxu0 0.0
        %3511 = vmatpush1.xpose.msra.mxu0 0.0
        %3512 = vmatprep.subr.mxu0 0.0
        %3513 = vmatpush1.xpose.msra.mxu0 0.0
        %3514 = vmatprep.subr.mxu0 0.0
        %3515 = vmatpush1.xpose.msra.mxu0 0.0
        %3516 = vmatprep.subr.mxu0 0.0
        %3517 = vmatpush1.xpose.msra.mxu0 0.0
        %3518 = vmatprep.subr.mxu0 0.0
        %3519 = vmatpush1.xpose.msra.mxu0 0.0
        %3520 = vmatprep.subr.mxu0 0.0
        %3521 = vmatpush1.xpose.msra.mxu0 0.0
        %3522 = vmatprep.subr.mxu0 0.0
        %3523 = vmatpush1.xpose.msra.mxu0 0.0
        %3524 = vmatprep.subr.mxu0 0.0
        %3525 = vmatpush1.xpose.msra.mxu0 0.0
        %3526 = vmatprep.subr.mxu0 0.0
        %3527 = vmatpush1.xpose.msra.mxu0 0.0
        %3528 = vmatprep.subr.mxu0 0.0
        %3529 = vmatpush1.xpose.msra.mxu0 0.0
        %3530 = vmatprep.subr.mxu0 0.0
        %3531 = vmatpush1.xpose.msra.mxu0 0.0
        %3532 = vmatprep.mubr.f32.mxu0 0.0
        %3533 = vmatmul.mubr.f32.gmra.mrb[0].mxu0 %v3464
        %v3534 = vpop.f32.mrb[0].mxu0
        %v3535 = vadd.f32 0.0, %v3534
        %v3536 = vpop.f32.mrb[0].mxu0
        %3537 = vdwg.mxu0
        %v3538 = vmul.f32 %v3457, 0.35355338
        %v3539 = vmul.f32 %v3535, 0.35355338
        %v3540 = vsel %vm1065, %v3538, -inf
        %3541 = vmax.xlane.f32.xlu0 %v3540
        %v3542 = vpop.xlane.xlu0 %3541
        %v3543 = vsel %vm1065, %v3539, -inf
        %3544 = vmax.xlane.f32.xlu0 %v3543
        %v3545 = vpop.xlane.xlu0 %3544
        %v3546 = vsub.f32 %v3538, %v3542
        %v3547 = vsub.f32 %v3539, %v3545
        %v3548 = vmul.f32 %v3546, 1.442695
        %v3549 = vpow.pop %v3548
        %v3550 = vmul.f32 %v3547, 1.442695
        %v3551 = vpow.pop %v3550
        %v3552 = vsel %vm1065, %v3549, 0.0
        %3553 = vadd.xlane.f32.xlu0 %v3552
        %v3554 = vpop.xlane.xlu0 %3553
        %v3555 = vsel %vm1065, %v3551, 0.0
        %3556 = vadd.xlane.f32.xlu0 %v3555
        %v3557 = vpop.xlane.xlu0 %3556
        %v3558 = vrcp.pop %v3554
        %v3559 = vrcp.pop %v3557
        %v3560 = vmul.f32 %v3549, %v3558
        %v3561 = vmul.f32 %v3551, %v3559
        %3562 = vrot.lane.b32.xlu0 %v2952, 88
        %v3563 = vpop.permute.xlu0 %3562
        %v3566 = vsel %vm1065, %v3560, 0
        %3568 = vmatprep.subr.mxu0 0.0
        %3569 = vmatpush1.msra.mxu0 %v3563
        %3570 = vmatprep.subr.mxu0 0.0
        %3571 = vmatpush1.msra.mxu0 0.0
        %3572 = vmatprep.subr.mxu0 0.0
        %3573 = vmatpush1.msra.mxu0 0.0
        %3574 = vmatprep.subr.mxu0 0.0
        %3575 = vmatpush1.msra.mxu0 0.0
        %3576 = vmatprep.subr.mxu0 0.0
        %3577 = vmatpush1.msra.mxu0 0.0
        %3578 = vmatprep.subr.mxu0 0.0
        %3579 = vmatpush1.msra.mxu0 0.0
        %3580 = vmatprep.subr.mxu0 0.0
        %3581 = vmatpush1.msra.mxu0 0.0
        %3582 = vmatprep.subr.mxu0 0.0
        %3583 = vmatpush1.msra.mxu0 0.0
        %3584 = vmatprep.subr.mxu0 0.0
        %3585 = vmatpush1.msra.mxu0 0.0
        %3586 = vmatprep.subr.mxu0 0.0
        %3587 = vmatpush1.msra.mxu0 0.0
        %3588 = vmatprep.subr.mxu0 0.0
        %3589 = vmatpush1.msra.mxu0 0.0
        %3590 = vmatprep.subr.mxu0 0.0
        %3591 = vmatpush1.msra.mxu0 0.0
        %3592 = vmatprep.subr.mxu0 0.0
        %3593 = vmatpush1.msra.mxu0 0.0
        %3594 = vmatprep.subr.mxu0 0.0
        %3595 = vmatpush1.msra.mxu0 0.0
        %3596 = vmatprep.subr.mxu0 0.0
        %3597 = vmatpush1.msra.mxu0 0.0
        %3598 = vmatprep.subr.mxu0 0.0
        %3599 = vmatpush1.msra.mxu0 0.0
        %3600 = vmatprep.subr.mxu0 0.0
        %3601 = vmatpush1.msra.mxu0 0.0
        %3602 = vmatprep.subr.mxu0 0.0
        %3603 = vmatpush1.msra.mxu0 0.0
        %3604 = vmatprep.subr.mxu0 0.0
        %3605 = vmatpush1.msra.mxu0 0.0
        %3606 = vmatprep.subr.mxu0 0.0
        %3607 = vmatpush1.msra.mxu0 0.0
        %3608 = vmatprep.subr.mxu0 0.0
        %3609 = vmatpush1.msra.mxu0 0.0
        %3610 = vmatprep.subr.mxu0 0.0
        %3611 = vmatpush1.msra.mxu0 0.0
        %3612 = vmatprep.subr.mxu0 0.0
        %3613 = vmatpush1.msra.mxu0 0.0
        %3614 = vmatprep.subr.mxu0 0.0
        %3615 = vmatpush1.msra.mxu0 0.0
        %3616 = vmatprep.subr.mxu0 0.0
        %3617 = vmatpush1.msra.mxu0 0.0
        %3618 = vmatprep.subr.mxu0 0.0
        %3619 = vmatpush1.msra.mxu0 0.0
        %3620 = vmatprep.subr.mxu0 0.0
        %3621 = vmatpush1.msra.mxu0 0.0
        %3622 = vmatprep.subr.mxu0 0.0
        %3623 = vmatpush1.msra.mxu0 0.0
        %3624 = vmatprep.subr.mxu0 0.0
        %3625 = vmatpush1.msra.mxu0 0.0
        %3626 = vmatprep.subr.mxu0 0.0
        %3627 = vmatpush1.msra.mxu0 0.0
        %3628 = vmatprep.subr.mxu0 0.0
        %3629 = vmatpush1.msra.mxu0 0.0
        %3630 = vmatprep.subr.mxu0 0.0
        %3631 = vmatpush1.msra.mxu0 0.0
        %3632 = vmatprep.mubr.f32.mxu0 0.0
        %3633 = vmatmul.mubr.f32.gmra.mrb[0].mxu0 %v3566
        %v3634 = vpop.f32.mrb[0].mxu0
        %v3635 = vadd.f32 0.0, %v3634
        %v3636 = vpop.f32.mrb[0].mxu0
        %3637 = vdwg.mxu0
        %3638 = vrot.lane.b32.xlu0 %v2957, 88
        %v3639 = vpop.permute.xlu0 %3638
        %v3642 = vsel %vm1065, %v3561, 0
        %3644 = vmatprep.subr.mxu0 0.0
        %3645 = vmatpush1.msra.mxu0 %v3639
        %3646 = vmatprep.subr.mxu0 0.0
        %3647 = vmatpush1.msra.mxu0 0.0
        %3648 = vmatprep.subr.mxu0 0.0
        %3649 = vmatpush1.msra.mxu0 0.0
        %3650 = vmatprep.subr.mxu0 0.0
        %3651 = vmatpush1.msra.mxu0 0.0
        %3652 = vmatprep.subr.mxu0 0.0
        %3653 = vmatpush1.msra.mxu0 0.0
        %3654 = vmatprep.subr.mxu0 0.0
        %3655 = vmatpush1.msra.mxu0 0.0
        %3656 = vmatprep.subr.mxu0 0.0
        %3657 = vmatpush1.msra.mxu0 0.0
        %3658 = vmatprep.subr.mxu0 0.0
        %3659 = vmatpush1.msra.mxu0 0.0
        %3660 = vmatprep.subr.mxu0 0.0
        %3661 = vmatpush1.msra.mxu0 0.0
        %3662 = vmatprep.subr.mxu0 0.0
        %3663 = vmatpush1.msra.mxu0 0.0
        %3664 = vmatprep.subr.mxu0 0.0
        %3665 = vmatpush1.msra.mxu0 0.0
        %3666 = vmatprep.subr.mxu0 0.0
        %3667 = vmatpush1.msra.mxu0 0.0
        %3668 = vmatprep.subr.mxu0 0.0
        %3669 = vmatpush1.msra.mxu0 0.0
        %3670 = vmatprep.subr.mxu0 0.0
        %3671 = vmatpush1.msra.mxu0 0.0
        %3672 = vmatprep.subr.mxu0 0.0
        %3673 = vmatpush1.msra.mxu0 0.0
        %3674 = vmatprep.subr.mxu0 0.0
        %3675 = vmatpush1.msra.mxu0 0.0
        %3676 = vmatprep.subr.mxu0 0.0
        %3677 = vmatpush1.msra.mxu0 0.0
        %3678 = vmatprep.subr.mxu0 0.0
        %3679 = vmatpush1.msra.mxu0 0.0
        %3680 = vmatprep.subr.mxu0 0.0
        %3681 = vmatpush1.msra.mxu0 0.0
        %3682 = vmatprep.subr.mxu0 0.0
        %3683 = vmatpush1.msra.mxu0 0.0
        %3684 = vmatprep.subr.mxu0 0.0
        %3685 = vmatpush1.msra.mxu0 0.0
        %3686 = vmatprep.subr.mxu0 0.0
        %3687 = vmatpush1.msra.mxu0 0.0
        %3688 = vmatprep.subr.mxu0 0.0
        %3689 = vmatpush1.msra.mxu0 0.0
        %3690 = vmatprep.subr.mxu0 0.0
        %3691 = vmatpush1.msra.mxu0 0.0
        %3692 = vmatprep.subr.mxu0 0.0
        %3693 = vmatpush1.msra.mxu0 0.0
        %3694 = vmatprep.subr.mxu0 0.0
        %3695 = vmatpush1.msra.mxu0 0.0
        %3696 = vmatprep.subr.mxu0 0.0
        %3697 = vmatpush1.msra.mxu0 0.0
        %3698 = vmatprep.subr.mxu0 0.0
        %3699 = vmatpush1.msra.mxu0 0.0
        %3700 = vmatprep.subr.mxu0 0.0
        %3701 = vmatpush1.msra.mxu0 0.0
        %3702 = vmatprep.subr.mxu0 0.0
        %3703 = vmatpush1.msra.mxu0 0.0
        %3704 = vmatprep.subr.mxu0 0.0
        %3705 = vmatpush1.msra.mxu0 0.0
        %3706 = vmatprep.subr.mxu0 0.0
        %3707 = vmatpush1.msra.mxu0 0.0
        %3708 = vmatprep.mubr.f32.mxu0 0.0
        %3709 = vmatmul.mubr.f32.gmra.mrb[0].mxu0 %v3642
        %v3710 = vpop.f32.mrb[0].mxu0
        %v3711 = vadd.f32 0.0, %v3710
        %v3712 = vpop.f32.mrb[0].mxu0
        %3713 = vdwg.mxu0
        %v3715 = vsel %vm1065, %v3635, 0
        %v3718 = vsel %vm1065, %v3711, 0
        %3720 = vmatprep.subr.mxu0 0.0
        %3721 = vmatpush1.msra.mxu0 %v2961
        %3722 = vmatprep.subr.mxu0 0.0
        %3723 = vmatpush1.msra.mxu0 0.0
        %3724 = vmatprep.subr.mxu0 0.0
        %3725 = vmatpush1.msra.mxu0 0.0
        %3726 = vmatprep.subr.mxu0 0.0
        %3727 = vmatpush1.msra.mxu0 0.0
        %3728 = vmatprep.subr.mxu0 0.0
        %3729 = vmatpush1.msra.mxu0 0.0
        %3730 = vmatprep.subr.mxu0 0.0
        %3731 = vmatpush1.msra.mxu0 0.0
        %3732 = vmatprep.subr.mxu0 0.0
        %3733 = vmatpush1.msra.mxu0 0.0
        %3734 = vmatprep.subr.mxu0 0.0
        %3735 = vmatpush1.msra.mxu0 0.0
        %3736 = vmatprep.subr.mxu0 0.0
        %3737 = vmatpush1.msra.mxu0 0.0
        %3738 = vmatprep.subr.mxu0 0.0
        %3739 = vmatpush1.msra.mxu0 0.0
        %3740 = vmatprep.subr.mxu0 0.0
        %3741 = vmatpush1.msra.mxu0 0.0
        %3742 = vmatprep.subr.mxu0 0.0
        %3743 = vmatpush1.msra.mxu0 0.0
        %3744 = vmatprep.subr.mxu0 0.0
        %3745 = vmatpush1.msra.mxu0 0.0
        %3746 = vmatprep.subr.mxu0 0.0
        %3747 = vmatpush1.msra.mxu0 0.0
        %3748 = vmatprep.subr.mxu0 0.0
        %3749 = vmatpush1.msra.mxu0 0.0
        %3750 = vmatprep.subr.mxu0 0.0
        %3751 = vmatpush1.msra.mxu0 0.0
        %3752 = vmatprep.subr.mxu0 0.0
        %3753 = vmatpush1.msra.mxu0 0.0
        %3754 = vmatprep.subr.mxu0 0.0
        %3755 = vmatpush1.msra.mxu0 0.0
        %3756 = vmatprep.subr.mxu0 0.0
        %3757 = vmatpush1.msra.mxu0 0.0
        %3758 = vmatprep.subr.mxu0 0.0
        %3759 = vmatpush1.msra.mxu0 0.0
        %3760 = vmatprep.subr.mxu0 0.0
        %3761 = vmatpush1.msra.mxu0 0.0
        %3762 = vmatprep.subr.mxu0 0.0
        %3763 = vmatpush1.msra.mxu0 0.0
        %3764 = vmatprep.subr.mxu0 0.0
        %3765 = vmatpush1.msra.mxu0 0.0
        %3766 = vmatprep.subr.mxu0 0.0
        %3767 = vmatpush1.msra.mxu0 0.0
        %3768 = vmatprep.subr.mxu0 0.0
        %3769 = vmatpush1.msra.mxu0 0.0
        %3770 = vmatprep.subr.mxu0 0.0
        %3771 = vmatpush1.msra.mxu0 0.0
        %3772 = vmatprep.subr.mxu0 0.0
        %3773 = vmatpush1.msra.mxu0 0.0
        %3774 = vmatprep.subr.mxu0 0.0
        %3775 = vmatpush1.msra.mxu0 0.0
        %3776 = vmatprep.subr.mxu0 0.0
        %3777 = vmatpush1.msra.mxu0 0.0
        %3778 = vmatprep.subr.mxu0 0.0
        %3779 = vmatpush1.msra.mxu0 0.0
        %3780 = vmatprep.subr.mxu0 0.0
        %3781 = vmatpush1.msra.mxu0 0.0
        %3782 = vmatprep.subr.mxu0 0.0
        %3783 = vmatpush1.msra.mxu0 0.0
        %3784 = vmatprep.mubr.f32.mxu0 0.0
        %3785 = vmatmul.mubr.f32.gmra.mrb[0].mxu0 %v3715
        %v3786 = vpop.f32.mrb[0].mxu0
        %v3787 = vadd.f32 0.0, %v3786
        %v3788 = vpop.f32.mrb[0].mxu0
        %3789 = vmatprep.mubr.f32.mxu0 0.0
        %3790 = vmatmul.mubr.f32.gmra.mrb[0].mxu0 %v3718
        %v3791 = vpop.f32.mrb[0].mxu0
        %v3792 = vadd.f32 0.0, %v3791
        %v3793 = vpop.f32.mrb[0].mxu0
        %3794 = vdwg.mxu0
        %v3795 = vadd.f32 %v3380, %v3787
        %v3796 = vadd.f32 %v3381, %v3792
        %3797 = vrot.lane.b32.xlu0 %v2852, 112
        %v3798 = vpop.permute.xlu0 %3797
        %3799 = vrot.lane.b32.xlu0 %v2952, 112
        %v3800 = vpop.permute.xlu0 %3799
        %v3801 = vsel %vm1065, %v3798, 0
        %v3803 = vsel %vm1065, %v3800, 0
        %3805 = vmatprep.subr.mxu0 0.0
        %3806 = vmatpush1.xpose.msra.mxu0 %v3803
        %3807 = vmatprep.subr.mxu0 0.0
        %3808 = vmatpush1.xpose.msra.mxu0 0.0
        %3809 = vmatprep.subr.mxu0 0.0
        %3810 = vmatpush1.xpose.msra.mxu0 0.0
        %3811 = vmatprep.subr.mxu0 0.0
        %3812 = vmatpush1.xpose.msra.mxu0 0.0
        %3813 = vmatprep.subr.mxu0 0.0
        %3814 = vmatpush1.xpose.msra.mxu0 0.0
        %3815 = vmatprep.subr.mxu0 0.0
        %3816 = vmatpush1.xpose.msra.mxu0 0.0
        %3817 = vmatprep.subr.mxu0 0.0
        %3818 = vmatpush1.xpose.msra.mxu0 0.0
        %3819 = vmatprep.subr.mxu0 0.0
        %3820 = vmatpush1.xpose.msra.mxu0 0.0
        %3821 = vmatprep.subr.mxu0 0.0
        %3822 = vmatpush1.xpose.msra.mxu0 0.0
        %3823 = vmatprep.subr.mxu0 0.0
        %3824 = vmatpush1.xpose.msra.mxu0 0.0
        %3825 = vmatprep.subr.mxu0 0.0
        %3826 = vmatpush1.xpose.msra.mxu0 0.0
        %3827 = vmatprep.subr.mxu0 0.0
        %3828 = vmatpush1.xpose.msra.mxu0 0.0
        %3829 = vmatprep.subr.mxu0 0.0
        %3830 = vmatpush1.xpose.msra.mxu0 0.0
        %3831 = vmatprep.subr.mxu0 0.0
        %3832 = vmatpush1.xpose.msra.mxu0 0.0
        %3833 = vmatprep.subr.mxu0 0.0
        %3834 = vmatpush1.xpose.msra.mxu0 0.0
        %3835 = vmatprep.subr.mxu0 0.0
        %3836 = vmatpush1.xpose.msra.mxu0 0.0
        %3837 = vmatprep.subr.mxu0 0.0
        %3838 = vmatpush1.xpose.msra.mxu0 0.0
        %3839 = vmatprep.subr.mxu0 0.0
        %3840 = vmatpush1.xpose.msra.mxu0 0.0
        %3841 = vmatprep.subr.mxu0 0.0
        %3842 = vmatpush1.xpose.msra.mxu0 0.0
        %3843 = vmatprep.subr.mxu0 0.0
        %3844 = vmatpush1.xpose.msra.mxu0 0.0
        %3845 = vmatprep.subr.mxu0 0.0
        %3846 = vmatpush1.xpose.msra.mxu0 0.0
        %3847 = vmatprep.subr.mxu0 0.0
        %3848 = vmatpush1.xpose.msra.mxu0 0.0
        %3849 = vmatprep.subr.mxu0 0.0
        %3850 = vmatpush1.xpose.msra.mxu0 0.0
        %3851 = vmatprep.subr.mxu0 0.0
        %3852 = vmatpush1.xpose.msra.mxu0 0.0
        %3853 = vmatprep.subr.mxu0 0.0
        %3854 = vmatpush1.xpose.msra.mxu0 0.0
        %3855 = vmatprep.subr.mxu0 0.0
        %3856 = vmatpush1.xpose.msra.mxu0 0.0
        %3857 = vmatprep.subr.mxu0 0.0
        %3858 = vmatpush1.xpose.msra.mxu0 0.0
        %3859 = vmatprep.subr.mxu0 0.0
        %3860 = vmatpush1.xpose.msra.mxu0 0.0
        %3861 = vmatprep.subr.mxu0 0.0
        %3862 = vmatpush1.xpose.msra.mxu0 0.0
        %3863 = vmatprep.subr.mxu0 0.0
        %3864 = vmatpush1.xpose.msra.mxu0 0.0
        %3865 = vmatprep.subr.mxu0 0.0
        %3866 = vmatpush1.xpose.msra.mxu0 0.0
        %3867 = vmatprep.subr.mxu0 0.0
        %3868 = vmatpush1.xpose.msra.mxu0 0.0
        %3869 = vmatprep.mubr.f32.mxu0 0.0
        %3870 = vmatmul.mubr.f32.gmra.mrb[0].mxu0 %v3801
        %v3871 = vpop.f32.mrb[0].mxu0
        %v3872 = vadd.f32 0.0, %v3871
        %v3873 = vpop.f32.mrb[0].mxu0
        %3874 = vdwg.mxu0
        %3875 = vrot.lane.b32.xlu0 %v2857, 112
        %v3876 = vpop.permute.xlu0 %3875
        %3877 = vrot.lane.b32.xlu0 %v2957, 112
        %v3878 = vpop.permute.xlu0 %3877
        %v3879 = vsel %vm1065, %v3876, 0
        %v3881 = vsel %vm1065, %v3878, 0
        %3883 = vmatprep.subr.mxu0 0.0
        %3884 = vmatpush1.xpose.msra.mxu0 %v3881
        %3885 = vmatprep.subr.mxu0 0.0
        %3886 = vmatpush1.xpose.msra.mxu0 0.0
        %3887 = vmatprep.subr.mxu0 0.0
        %3888 = vmatpush1.xpose.msra.mxu0 0.0
        %3889 = vmatprep.subr.mxu0 0.0
        %3890 = vmatpush1.xpose.msra.mxu0 0.0
        %3891 = vmatprep.subr.mxu0 0.0
        %3892 = vmatpush1.xpose.msra.mxu0 0.0
        %3893 = vmatprep.subr.mxu0 0.0
        %3894 = vmatpush1.xpose.msra.mxu0 0.0
        %3895 = vmatprep.subr.mxu0 0.0
        %3896 = vmatpush1.xpose.msra.mxu0 0.0
        %3897 = vmatprep.subr.mxu0 0.0
        %3898 = vmatpush1.xpose.msra.mxu0 0.0
        %3899 = vmatprep.subr.mxu0 0.0
        %3900 = vmatpush1.xpose.msra.mxu0 0.0
        %3901 = vmatprep.subr.mxu0 0.0
        %3902 = vmatpush1.xpose.msra.mxu0 0.0
        %3903 = vmatprep.subr.mxu0 0.0
        %3904 = vmatpush1.xpose.msra.mxu0 0.0
        %3905 = vmatprep.subr.mxu0 0.0
        %3906 = vmatpush1.xpose.msra.mxu0 0.0
        %3907 = vmatprep.subr.mxu0 0.0
        %3908 = vmatpush1.xpose.msra.mxu0 0.0
        %3909 = vmatprep.subr.mxu0 0.0
        %3910 = vmatpush1.xpose.msra.mxu0 0.0
        %3911 = vmatprep.subr.mxu0 0.0
        %3912 = vmatpush1.xpose.msra.mxu0 0.0
        %3913 = vmatprep.subr.mxu0 0.0
        %3914 = vmatpush1.xpose.msra.mxu0 0.0
        %3915 = vmatprep.subr.mxu0 0.0
        %3916 = vmatpush1.xpose.msra.mxu0 0.0
        %3917 = vmatprep.subr.mxu0 0.0
        %3918 = vmatpush1.xpose.msra.mxu0 0.0
        %3919 = vmatprep.subr.mxu0 0.0
        %3920 = vmatpush1.xpose.msra.mxu0 0.0
        %3921 = vmatprep.subr.mxu0 0.0
        %3922 = vmatpush1.xpose.msra.mxu0 0.0
        %3923 = vmatprep.subr.mxu0 0.0
        %3924 = vmatpush1.xpose.msra.mxu0 0.0
        %3925 = vmatprep.subr.mxu0 0.0
        %3926 = vmatpush1.xpose.msra.mxu0 0.0
        %3927 = vmatprep.subr.mxu0 0.0
        %3928 = vmatpush1.xpose.msra.mxu0 0.0
        %3929 = vmatprep.subr.mxu0 0.0
        %3930 = vmatpush1.xpose.msra.mxu0 0.0
        %3931 = vmatprep.subr.mxu0 0.0
        %3932 = vmatpush1.xpose.msra.mxu0 0.0
        %3933 = vmatprep.subr.mxu0 0.0
        %3934 = vmatpush1.xpose.msra.mxu0 0.0
        %3935 = vmatprep.subr.mxu0 0.0
        %3936 = vmatpush1.xpose.msra.mxu0 0.0
        %3937 = vmatprep.subr.mxu0 0.0
        %3938 = vmatpush1.xpose.msra.mxu0 0.0
        %3939 = vmatprep.subr.mxu0 0.0
        %3940 = vmatpush1.xpose.msra.mxu0 0.0
        %3941 = vmatprep.subr.mxu0 0.0
        %3942 = vmatpush1.xpose.msra.mxu0 0.0
        %3943 = vmatprep.subr.mxu0 0.0
        %3944 = vmatpush1.xpose.msra.mxu0 0.0
        %3945 = vmatprep.subr.mxu0 0.0
        %3946 = vmatpush1.xpose.msra.mxu0 0.0
        %3947 = vmatprep.mubr.f32.mxu0 0.0
        %3948 = vmatmul.mubr.f32.gmra.mrb[0].mxu0 %v3879
        %v3949 = vpop.f32.mrb[0].mxu0
        %v3950 = vadd.f32 0.0, %v3949
        %v3951 = vpop.f32.mrb[0].mxu0
        %3952 = vdwg.mxu0
        %v3953 = vmul.f32 %v3872, 0.35355338
        %v3954 = vmul.f32 %v3950, 0.35355338
        %v3955 = vsel %vm1065, %v3953, -inf
        %3956 = vmax.xlane.f32.xlu0 %v3955
        %v3957 = vpop.xlane.xlu0 %3956
        %v3958 = vsel %vm1065, %v3954, -inf
        %3959 = vmax.xlane.f32.xlu0 %v3958
        %v3960 = vpop.xlane.xlu0 %3959
        %v3961 = vsub.f32 %v3953, %v3957
        %v3962 = vsub.f32 %v3954, %v3960
        %v3963 = vmul.f32 %v3961, 1.442695
        %v3964 = vpow.pop %v3963
        %v3965 = vmul.f32 %v3962, 1.442695
        %v3966 = vpow.pop %v3965
        %v3967 = vsel %vm1065, %v3964, 0.0
        %3968 = vadd.xlane.f32.xlu0 %v3967
        %v3969 = vpop.xlane.xlu0 %3968
        %v3970 = vsel %vm1065, %v3966, 0.0
        %3971 = vadd.xlane.f32.xlu0 %v3970
        %v3972 = vpop.xlane.xlu0 %3971
        %v3973 = vrcp.pop %v3969
        %v3974 = vrcp.pop %v3972
        %v3975 = vmul.f32 %v3964, %v3973
        %v3976 = vmul.f32 %v3966, %v3974
        %3977 = vrot.lane.b32.xlu0 %v2952, 80
        %v3978 = vpop.permute.xlu0 %3977
        %v3981 = vsel %vm1065, %v3975, 0
        %3983 = vmatprep.subr.mxu0 0.0
        %3984 = vmatpush1.msra.mxu0 %v3978
        %3985 = vmatprep.subr.mxu0 0.0
        %3986 = vmatpush1.msra.mxu0 0.0
        %3987 = vmatprep.subr.mxu0 0.0
        %3988 = vmatpush1.msra.mxu0 0.0
        %3989 = vmatprep.subr.mxu0 0.0
        %3990 = vmatpush1.msra.mxu0 0.0
        %3991 = vmatprep.subr.mxu0 0.0
        %3992 = vmatpush1.msra.mxu0 0.0
        %3993 = vmatprep.subr.mxu0 0.0
        %3994 = vmatpush1.msra.mxu0 0.0
        %3995 = vmatprep.subr.mxu0 0.0
        %3996 = vmatpush1.msra.mxu0 0.0
        %3997 = vmatprep.subr.mxu0 0.0
        %3998 = vmatpush1.msra.mxu0 0.0
        %3999 = vmatprep.subr.mxu0 0.0
        %4000 = vmatpush1.msra.mxu0 0.0
        %4001 = vmatprep.subr.mxu0 0.0
        %4002 = vmatpush1.msra.mxu0 0.0
        %4003 = vmatprep.subr.mxu0 0.0
        %4004 = vmatpush1.msra.mxu0 0.0
        %4005 = vmatprep.subr.mxu0 0.0
        %4006 = vmatpush1.msra.mxu0 0.0
        %4007 = vmatprep.subr.mxu0 0.0
        %4008 = vmatpush1.msra.mxu0 0.0
        %4009 = vmatprep.subr.mxu0 0.0
        %4010 = vmatpush1.msra.mxu0 0.0
        %4011 = vmatprep.subr.mxu0 0.0
        %4012 = vmatpush1.msra.mxu0 0.0
        %4013 = vmatprep.subr.mxu0 0.0
        %4014 = vmatpush1.msra.mxu0 0.0
        %4015 = vmatprep.subr.mxu0 0.0
        %4016 = vmatpush1.msra.mxu0 0.0
        %4017 = vmatprep.subr.mxu0 0.0
        %4018 = vmatpush1.msra.mxu0 0.0
        %4019 = vmatprep.subr.mxu0 0.0
        %4020 = vmatpush1.msra.mxu0 0.0
        %4021 = vmatprep.subr.mxu0 0.0
        %4022 = vmatpush1.msra.mxu0 0.0
        %4023 = vmatprep.subr.mxu0 0.0
        %4024 = vmatpush1.msra.mxu0 0.0
        %4025 = vmatprep.subr.mxu0 0.0
        %4026 = vmatpush1.msra.mxu0 0.0
        %4027 = vmatprep.subr.mxu0 0.0
        %4028 = vmatpush1.msra.mxu0 0.0
        %4029 = vmatprep.subr.mxu0 0.0
        %4030 = vmatpush1.msra.mxu0 0.0
        %4031 = vmatprep.subr.mxu0 0.0
        %4032 = vmatpush1.msra.mxu0 0.0
        %4033 = vmatprep.subr.mxu0 0.0
        %4034 = vmatpush1.msra.mxu0 0.0
        %4035 = vmatprep.subr.mxu0 0.0
        %4036 = vmatpush1.msra.mxu0 0.0
        %4037 = vmatprep.subr.mxu0 0.0
        %4038 = vmatpush1.msra.mxu0 0.0
        %4039 = vmatprep.subr.mxu0 0.0
        %4040 = vmatpush1.msra.mxu0 0.0
        %4041 = vmatprep.subr.mxu0 0.0
        %4042 = vmatpush1.msra.mxu0 0.0
        %4043 = vmatprep.subr.mxu0 0.0
        %4044 = vmatpush1.msra.mxu0 0.0
        %4045 = vmatprep.subr.mxu0 0.0
        %4046 = vmatpush1.msra.mxu0 0.0
        %4047 = vmatprep.mubr.f32.mxu0 0.0
        %4048 = vmatmul.mubr.f32.gmra.mrb[0].mxu0 %v3981
        %v4049 = vpop.f32.mrb[0].mxu0
        %v4050 = vadd.f32 0.0, %v4049
        %v4051 = vpop.f32.mrb[0].mxu0
        %4052 = vdwg.mxu0
        %4053 = vrot.lane.b32.xlu0 %v2957, 80
        %v4054 = vpop.permute.xlu0 %4053
        %v4057 = vsel %vm1065, %v3976, 0
        %4059 = vmatprep.subr.mxu0 0.0
        %4060 = vmatpush1.msra.mxu0 %v4054
        %4061 = vmatprep.subr.mxu0 0.0
        %4062 = vmatpush1.msra.mxu0 0.0
        %4063 = vmatprep.subr.mxu0 0.0
        %4064 = vmatpush1.msra.mxu0 0.0
        %4065 = vmatprep.subr.mxu0 0.0
        %4066 = vmatpush1.msra.mxu0 0.0
        %4067 = vmatprep.subr.mxu0 0.0
        %4068 = vmatpush1.msra.mxu0 0.0
        %4069 = vmatprep.subr.mxu0 0.0
        %4070 = vmatpush1.msra.mxu0 0.0
        %4071 = vmatprep.subr.mxu0 0.0
        %4072 = vmatpush1.msra.mxu0 0.0
        %4073 = vmatprep.subr.mxu0 0.0
        %4074 = vmatpush1.msra.mxu0 0.0
        %4075 = vmatprep.subr.mxu0 0.0
        %4076 = vmatpush1.msra.mxu0 0.0
        %4077 = vmatprep.subr.mxu0 0.0
        %4078 = vmatpush1.msra.mxu0 0.0
        %4079 = vmatprep.subr.mxu0 0.0
        %4080 = vmatpush1.msra.mxu0 0.0
        %4081 = vmatprep.subr.mxu0 0.0
        %4082 = vmatpush1.msra.mxu0 0.0
        %4083 = vmatprep.subr.mxu0 0.0
        %4084 = vmatpush1.msra.mxu0 0.0
        %4085 = vmatprep.subr.mxu0 0.0
        %4086 = vmatpush1.msra.mxu0 0.0
        %4087 = vmatprep.subr.mxu0 0.0
        %4088 = vmatpush1.msra.mxu0 0.0
        %4089 = vmatprep.subr.mxu0 0.0
        %4090 = vmatpush1.msra.mxu0 0.0
        %4091 = vmatprep.subr.mxu0 0.0
        %4092 = vmatpush1.msra.mxu0 0.0
        %4093 = vmatprep.subr.mxu0 0.0
        %4094 = vmatpush1.msra.mxu0 0.0
        %4095 = vmatprep.subr.mxu0 0.0
        %4096 = vmatpush1.msra.mxu0 0.0
        %4097 = vmatprep.subr.mxu0 0.0
        %4098 = vmatpush1.msra.mxu0 0.0
        %4099 = vmatprep.subr.mxu0 0.0
        %4100 = vmatpush1.msra.mxu0 0.0
        %4101 = vmatprep.subr.mxu0 0.0
        %4102 = vmatpush1.msra.mxu0 0.0
        %4103 = vmatprep.subr.mxu0 0.0
        %4104 = vmatpush1.msra.mxu0 0.0
        %4105 = vmatprep.subr.mxu0 0.0
        %4106 = vmatpush1.msra.mxu0 0.0
        %4107 = vmatprep.subr.mxu0 0.0
        %4108 = vmatpush1.msra.mxu0 0.0
        %4109 = vmatprep.subr.mxu0 0.0
        %4110 = vmatpush1.msra.mxu0 0.0
        %4111 = vmatprep.subr.mxu0 0.0
        %4112 = vmatpush1.msra.mxu0 0.0
        %4113 = vmatprep.subr.mxu0 0.0
        %4114 = vmatpush1.msra.mxu0 0.0
        %4115 = vmatprep.subr.mxu0 0.0
        %4116 = vmatpush1.msra.mxu0 0.0
        %4117 = vmatprep.subr.mxu0 0.0
        %4118 = vmatpush1.msra.mxu0 0.0
        %4119 = vmatprep.subr.mxu0 0.0
        %4120 = vmatpush1.msra.mxu0 0.0
        %4121 = vmatprep.subr.mxu0 0.0
        %4122 = vmatpush1.msra.mxu0 0.0
        %4123 = vmatprep.mubr.f32.mxu0 0.0
        %4124 = vmatmul.mubr.f32.gmra.mrb[0].mxu0 %v4057
        %v4125 = vpop.f32.mrb[0].mxu0
        %v4126 = vadd.f32 0.0, %v4125
        %v4127 = vpop.f32.mrb[0].mxu0
        %4128 = vdwg.mxu0
        %v4130 = vsel %vm1065, %v4050, 0
        %v4133 = vsel %vm1065, %v4126, 0
        %4135 = vmatprep.subr.mxu0 0.0
        %4136 = vmatpush1.msra.mxu0 %v2962
        %4137 = vmatprep.subr.mxu0 0.0
        %4138 = vmatpush1.msra.mxu0 0.0
        %4139 = vmatprep.subr.mxu0 0.0
        %4140 = vmatpush1.msra.mxu0 0.0
        %4141 = vmatprep.subr.mxu0 0.0
        %4142 = vmatpush1.msra.mxu0 0.0
        %4143 = vmatprep.subr.mxu0 0.0
        %4144 = vmatpush1.msra.mxu0 0.0
        %4145 = vmatprep.subr.mxu0 0.0
        %4146 = vmatpush1.msra.mxu0 0.0
        %4147 = vmatprep.subr.mxu0 0.0
        %4148 = vmatpush1.msra.mxu0 0.0
        %4149 = vmatprep.subr.mxu0 0.0
        %4150 = vmatpush1.msra.mxu0 0.0
        %4151 = vmatprep.subr.mxu0 0.0
        %4152 = vmatpush1.msra.mxu0 0.0
        %4153 = vmatprep.subr.mxu0 0.0
        %4154 = vmatpush1.msra.mxu0 0.0
        %4155 = vmatprep.subr.mxu0 0.0
        %4156 = vmatpush1.msra.mxu0 0.0
        %4157 = vmatprep.subr.mxu0 0.0
        %4158 = vmatpush1.msra.mxu0 0.0
        %4159 = vmatprep.subr.mxu0 0.0
        %4160 = vmatpush1.msra.mxu0 0.0
        %4161 = vmatprep.subr.mxu0 0.0
        %4162 = vmatpush1.msra.mxu0 0.0
        %4163 = vmatprep.subr.mxu0 0.0
        %4164 = vmatpush1.msra.mxu0 0.0
        %4165 = vmatprep.subr.mxu0 0.0
        %4166 = vmatpush1.msra.mxu0 0.0
        %4167 = vmatprep.subr.mxu0 0.0
        %4168 = vmatpush1.msra.mxu0 0.0
        %4169 = vmatprep.subr.mxu0 0.0
        %4170 = vmatpush1.msra.mxu0 0.0
        %4171 = vmatprep.subr.mxu0 0.0
        %4172 = vmatpush1.msra.mxu0 0.0
        %4173 = vmatprep.subr.mxu0 0.0
        %4174 = vmatpush1.msra.mxu0 0.0
        %4175 = vmatprep.subr.mxu0 0.0
        %4176 = vmatpush1.msra.mxu0 0.0
        %4177 = vmatprep.subr.mxu0 0.0
        %4178 = vmatpush1.msra.mxu0 0.0
        %4179 = vmatprep.subr.mxu0 0.0
        %4180 = vmatpush1.msra.mxu0 0.0
        %4181 = vmatprep.subr.mxu0 0.0
        %4182 = vmatpush1.msra.mxu0 0.0
        %4183 = vmatprep.subr.mxu0 0.0
        %4184 = vmatpush1.msra.mxu0 0.0
        %4185 = vmatprep.subr.mxu0 0.0
        %4186 = vmatpush1.msra.mxu0 0.0
        %4187 = vmatprep.subr.mxu0 0.0
        %4188 = vmatpush1.msra.mxu0 0.0
        %4189 = vmatprep.subr.mxu0 0.0
        %4190 = vmatpush1.msra.mxu0 0.0
        %4191 = vmatprep.subr.mxu0 0.0
        %4192 = vmatpush1.msra.mxu0 0.0
        %4193 = vmatprep.subr.mxu0 0.0
        %4194 = vmatpush1.msra.mxu0 0.0
        %4195 = vmatprep.subr.mxu0 0.0
        %4196 = vmatpush1.msra.mxu0 0.0
        %4197 = vmatprep.subr.mxu0 0.0
        %4198 = vmatpush1.msra.mxu0 0.0
        %4199 = vmatprep.mubr.f32.mxu0 0.0
        %4200 = vmatmul.mubr.f32.gmra.mrb[0].mxu0 %v4130
        %v4201 = vpop.f32.mrb[0].mxu0
        %v4202 = vadd.f32 0.0, %v4201
        %v4203 = vpop.f32.mrb[0].mxu0
        %4204 = vmatprep.mubr.f32.mxu0 0.0
        %4205 = vmatmul.mubr.f32.gmra.mrb[0].mxu0 %v4133
        %v4206 = vpop.f32.mrb[0].mxu0
        %v4207 = vadd.f32 0.0, %v4206
        %v4208 = vpop.f32.mrb[0].mxu0
        %4209 = vdwg.mxu0
        %v4210 = vadd.f32 %v3795, %v4202
        %v4211 = vadd.f32 %v3796, %v4207
        %4212 = vrot.lane.b32.xlu0 %v2852, 104
        %v4213 = vpop.permute.xlu0 %4212
        %4214 = vrot.lane.b32.xlu0 %v2952, 104
        %v4215 = vpop.permute.xlu0 %4214
        %v4216 = vsel %vm1065, %v4213, 0
        %v4218 = vsel %vm1065, %v4215, 0
        %4220 = vmatprep.subr.mxu0 0.0
        %4221 = vmatpush1.xpose.msra.mxu0 %v4218
        %4222 = vmatprep.subr.mxu0 0.0
        %4223 = vmatpush1.xpose.msra.mxu0 0.0
        %4224 = vmatprep.subr.mxu0 0.0
        %4225 = vmatpush1.xpose.msra.mxu0 0.0
        %4226 = vmatprep.subr.mxu0 0.0
        %4227 = vmatpush1.xpose.msra.mxu0 0.0
        %4228 = vmatprep.subr.mxu0 0.0
        %4229 = vmatpush1.xpose.msra.mxu0 0.0
        %4230 = vmatprep.subr.mxu0 0.0
        %4231 = vmatpush1.xpose.msra.mxu0 0.0
        %4232 = vmatprep.subr.mxu0 0.0
        %4233 = vmatpush1.xpose.msra.mxu0 0.0
        %4234 = vmatprep.subr.mxu0 0.0
        %4235 = vmatpush1.xpose.msra.mxu0 0.0
        %4236 = vmatprep.subr.mxu0 0.0
        %4237 = vmatpush1.xpose.msra.mxu0 0.0
        %4238 = vmatprep.subr.mxu0 0.0
        %4239 = vmatpush1.xpose.msra.mxu0 0.0
        %4240 = vmatprep.subr.mxu0 0.0
        %4241 = vmatpush1.xpose.msra.mxu0 0.0
        %4242 = vmatprep.subr.mxu0 0.0
        %4243 = vmatpush1.xpose.msra.mxu0 0.0
        %4244 = vmatprep.subr.mxu0 0.0
        %4245 = vmatpush1.xpose.msra.mxu0 0.0
        %4246 = vmatprep.subr.mxu0 0.0
        %4247 = vmatpush1.xpose.msra.mxu0 0.0
        %4248 = vmatprep.subr.mxu0 0.0
        %4249 = vmatpush1.xpose.msra.mxu0 0.0
        %4250 = vmatprep.subr.mxu0 0.0
        %4251 = vmatpush1.xpose.msra.mxu0 0.0
        %4252 = vmatprep.subr.mxu0 0.0
        %4253 = vmatpush1.xpose.msra.mxu0 0.0
        %4254 = vmatprep.subr.mxu0 0.0
        %4255 = vmatpush1.xpose.msra.mxu0 0.0
        %4256 = vmatprep.subr.mxu0 0.0
        %4257 = vmatpush1.xpose.msra.mxu0 0.0
        %4258 = vmatprep.subr.mxu0 0.0
        %4259 = vmatpush1.xpose.msra.mxu0 0.0
        %4260 = vmatprep.subr.mxu0 0.0
        %4261 = vmatpush1.xpose.msra.mxu0 0.0
        %4262 = vmatprep.subr.mxu0 0.0
        %4263 = vmatpush1.xpose.msra.mxu0 0.0
        %4264 = vmatprep.subr.mxu0 0.0
        %4265 = vmatpush1.xpose.msra.mxu0 0.0
        %4266 = vmatprep.subr.mxu0 0.0
        %4267 = vmatpush1.xpose.msra.mxu0 0.0
        %4268 = vmatprep.subr.mxu0 0.0
        %4269 = vmatpush1.xpose.msra.mxu0 0.0
        %4270 = vmatprep.subr.mxu0 0.0
        %4271 = vmatpush1.xpose.msra.mxu0 0.0
        %4272 = vmatprep.subr.mxu0 0.0
        %4273 = vmatpush1.xpose.msra.mxu0 0.0
        %4274 = vmatprep.subr.mxu0 0.0
        %4275 = vmatpush1.xpose.msra.mxu0 0.0
        %4276 = vmatprep.subr.mxu0 0.0
        %4277 = vmatpush1.xpose.msra.mxu0 0.0
        %4278 = vmatprep.subr.mxu0 0.0
        %4279 = vmatpush1.xpose.msra.mxu0 0.0
        %4280 = vmatprep.subr.mxu0 0.0
        %4281 = vmatpush1.xpose.msra.mxu0 0.0
        %4282 = vmatprep.subr.mxu0 0.0
        %4283 = vmatpush1.xpose.msra.mxu0 0.0
        %4284 = vmatprep.mubr.f32.mxu0 0.0
        %4285 = vmatmul.mubr.f32.gmra.mrb[0].mxu0 %v4216
        %v4286 = vpop.f32.mrb[0].mxu0
        %v4287 = vadd.f32 0.0, %v4286
        %v4288 = vpop.f32.mrb[0].mxu0
        %4289 = vdwg.mxu0
        %4290 = vrot.lane.b32.xlu0 %v2857, 104
        %v4291 = vpop.permute.xlu0 %4290
        %4292 = vrot.lane.b32.xlu0 %v2957, 104
        %v4293 = vpop.permute.xlu0 %4292
        %v4294 = vsel %vm1065, %v4291, 0
        %v4296 = vsel %vm1065, %v4293, 0
        %4298 = vmatprep.subr.mxu0 0.0
        %4299 = vmatpush1.xpose.msra.mxu0 %v4296
        %4300 = vmatprep.subr.mxu0 0.0
        %4301 = vmatpush1.xpose.msra.mxu0 0.0
        %4302 = vmatprep.subr.mxu0 0.0
        %4303 = vmatpush1.xpose.msra.mxu0 0.0
        %4304 = vmatprep.subr.mxu0 0.0
        %4305 = vmatpush1.xpose.msra.mxu0 0.0
        %4306 = vmatprep.subr.mxu0 0.0
        %4307 = vmatpush1.xpose.msra.mxu0 0.0
        %4308 = vmatprep.subr.mxu0 0.0
        %4309 = vmatpush1.xpose.msra.mxu0 0.0
        %4310 = vmatprep.subr.mxu0 0.0
        %4311 = vmatpush1.xpose.msra.mxu0 0.0
        %4312 = vmatprep.subr.mxu0 0.0
        %4313 = vmatpush1.xpose.msra.mxu0 0.0
        %4314 = vmatprep.subr.mxu0 0.0
        %4315 = vmatpush1.xpose.msra.mxu0 0.0
        %4316 = vmatprep.subr.mxu0 0.0
        %4317 = vmatpush1.xpose.msra.mxu0 0.0
        %4318 = vmatprep.subr.mxu0 0.0
        %4319 = vmatpush1.xpose.msra.mxu0 0.0
        %4320 = vmatprep.subr.mxu0 0.0
        %4321 = vmatpush1.xpose.msra.mxu0 0.0
        %4322 = vmatprep.subr.mxu0 0.0
        %4323 = vmatpush1.xpose.msra.mxu0 0.0
        %4324 = vmatprep.subr.mxu0 0.0
        %4325 = vmatpush1.xpose.msra.mxu0 0.0
        %4326 = vmatprep.subr.mxu0 0.0
        %4327 = vmatpush1.xpose.msra.mxu0 0.0
        %4328 = vmatprep.subr.mxu0 0.0
        %4329 = vmatpush1.xpose.msra.mxu0 0.0
        %4330 = vmatprep.subr.mxu0 0.0
        %4331 = vmatpush1.xpose.msra.mxu0 0.0
        %4332 = vmatprep.subr.mxu0 0.0
        %4333 = vmatpush1.xpose.msra.mxu0 0.0
        %4334 = vmatprep.subr.mxu0 0.0
        %4335 = vmatpush1.xpose.msra.mxu0 0.0
        %4336 = vmatprep.subr.mxu0 0.0
        %4337 = vmatpush1.xpose.msra.mxu0 0.0
        %4338 = vmatprep.subr.mxu0 0.0
        %4339 = vmatpush1.xpose.msra.mxu0 0.0
        %4340 = vmatprep.subr.mxu0 0.0
        %4341 = vmatpush1.xpose.msra.mxu0 0.0
        %4342 = vmatprep.subr.mxu0 0.0
        %4343 = vmatpush1.xpose.msra.mxu0 0.0
        %4344 = vmatprep.subr.mxu0 0.0
        %4345 = vmatpush1.xpose.msra.mxu0 0.0
        %4346 = vmatprep.subr.mxu0 0.0
        %4347 = vmatpush1.xpose.msra.mxu0 0.0
        %4348 = vmatprep.subr.mxu0 0.0
        %4349 = vmatpush1.xpose.msra.mxu0 0.0
        %4350 = vmatprep.subr.mxu0 0.0
        %4351 = vmatpush1.xpose.msra.mxu0 0.0
        %4352 = vmatprep.subr.mxu0 0.0
        %4353 = vmatpush1.xpose.msra.mxu0 0.0
        %4354 = vmatprep.subr.mxu0 0.0
        %4355 = vmatpush1.xpose.msra.mxu0 0.0
        %4356 = vmatprep.subr.mxu0 0.0
        %4357 = vmatpush1.xpose.msra.mxu0 0.0
        %4358 = vmatprep.subr.mxu0 0.0
        %4359 = vmatpush1.xpose.msra.mxu0 0.0
        %4360 = vmatprep.subr.mxu0 0.0
        %4361 = vmatpush1.xpose.msra.mxu0 0.0
        %4362 = vmatprep.mubr.f32.mxu0 0.0
        %4363 = vmatmul.mubr.f32.gmra.mrb[0].mxu0 %v4294
        %v4364 = vpop.f32.mrb[0].mxu0
        %v4365 = vadd.f32 0.0, %v4364
        %v4366 = vpop.f32.mrb[0].mxu0
        %4367 = vdwg.mxu0
        %v4368 = vmul.f32 %v4287, 0.35355338
        %v4369 = vmul.f32 %v4365, 0.35355338
        %v4370 = vsel %vm1065, %v4368, -inf
        %4371 = vmax.xlane.f32.xlu0 %v4370
        %v4372 = vpop.xlane.xlu0 %4371
        %v4373 = vsel %vm1065, %v4369, -inf
        %4374 = vmax.xlane.f32.xlu0 %v4373
        %v4375 = vpop.xlane.xlu0 %4374
        %v4376 = vsub.f32 %v4368, %v4372
        %v4377 = vsub.f32 %v4369, %v4375
        %v4378 = vmul.f32 %v4376, 1.442695
        %v4379 = vpow.pop %v4378
        %v4380 = vmul.f32 %v4377, 1.442695
        %v4381 = vpow.pop %v4380
        %v4382 = vsel %vm1065, %v4379, 0.0
        %4383 = vadd.xlane.f32.xlu0 %v4382
        %v4384 = vpop.xlane.xlu0 %4383
        %v4385 = vsel %vm1065, %v4381, 0.0
        %4386 = vadd.xlane.f32.xlu0 %v4385
        %v4387 = vpop.xlane.xlu0 %4386
        %v4388 = vrcp.pop %v4384
        %v4389 = vrcp.pop %v4387
        %v4390 = vmul.f32 %v4379, %v4388
        %v4391 = vmul.f32 %v4381, %v4389
        %4392 = vrot.lane.b32.xlu0 %v2952, 72
        %v4393 = vpop.permute.xlu0 %4392
        %v4396 = vsel %vm1065, %v4390, 0
        %4398 = vmatprep.subr.mxu0 0.0
        %4399 = vmatpush1.msra.mxu0 %v4393
        %4400 = vmatprep.subr.mxu0 0.0
        %4401 = vmatpush1.msra.mxu0 0.0
        %4402 = vmatprep.subr.mxu0 0.0
        %4403 = vmatpush1.msra.mxu0 0.0
        %4404 = vmatprep.subr.mxu0 0.0
        %4405 = vmatpush1.msra.mxu0 0.0
        %4406 = vmatprep.subr.mxu0 0.0
        %4407 = vmatpush1.msra.mxu0 0.0
        %4408 = vmatprep.subr.mxu0 0.0
        %4409 = vmatpush1.msra.mxu0 0.0
        %4410 = vmatprep.subr.mxu0 0.0
        %4411 = vmatpush1.msra.mxu0 0.0
        %4412 = vmatprep.subr.mxu0 0.0
        %4413 = vmatpush1.msra.mxu0 0.0
        %4414 = vmatprep.subr.mxu0 0.0
        %4415 = vmatpush1.msra.mxu0 0.0
        %4416 = vmatprep.subr.mxu0 0.0
        %4417 = vmatpush1.msra.mxu0 0.0
        %4418 = vmatprep.subr.mxu0 0.0
        %4419 = vmatpush1.msra.mxu0 0.0
        %4420 = vmatprep.subr.mxu0 0.0
        %4421 = vmatpush1.msra.mxu0 0.0
        %4422 = vmatprep.subr.mxu0 0.0
        %4423 = vmatpush1.msra.mxu0 0.0
        %4424 = vmatprep.subr.mxu0 0.0
        %4425 = vmatpush1.msra.mxu0 0.0
        %4426 = vmatprep.subr.mxu0 0.0
        %4427 = vmatpush1.msra.mxu0 0.0
        %4428 = vmatprep.subr.mxu0 0.0
        %4429 = vmatpush1.msra.mxu0 0.0
        %4430 = vmatprep.subr.mxu0 0.0
        %4431 = vmatpush1.msra.mxu0 0.0
        %4432 = vmatprep.subr.mxu0 0.0
        %4433 = vmatpush1.msra.mxu0 0.0
        %4434 = vmatprep.subr.mxu0 0.0
        %4435 = vmatpush1.msra.mxu0 0.0
        %4436 = vmatprep.subr.mxu0 0.0
        %4437 = vmatpush1.msra.mxu0 0.0
        %4438 = vmatprep.subr.mxu0 0.0
        %4439 = vmatpush1.msra.mxu0 0.0
        %4440 = vmatprep.subr.mxu0 0.0
        %4441 = vmatpush1.msra.mxu0 0.0
        %4442 = vmatprep.subr.mxu0 0.0
        %4443 = vmatpush1.msra.mxu0 0.0
        %4444 = vmatprep.subr.mxu0 0.0
        %4445 = vmatpush1.msra.mxu0 0.0
        %4446 = vmatprep.subr.mxu0 0.0
        %4447 = vmatpush1.msra.mxu0 0.0
        %4448 = vmatprep.subr.mxu0 0.0
        %4449 = vmatpush1.msra.mxu0 0.0
        %4450 = vmatprep.subr.mxu0 0.0
        %4451 = vmatpush1.msra.mxu0 0.0
        %4452 = vmatprep.subr.mxu0 0.0
        %4453 = vmatpush1.msra.mxu0 0.0
        %4454 = vmatprep.subr.mxu0 0.0
        %4455 = vmatpush1.msra.mxu0 0.0
        %4456 = vmatprep.subr.mxu0 0.0
        %4457 = vmatpush1.msra.mxu0 0.0
        %4458 = vmatprep.subr.mxu0 0.0
        %4459 = vmatpush1.msra.mxu0 0.0
        %4460 = vmatprep.subr.mxu0 0.0
        %4461 = vmatpush1.msra.mxu0 0.0
        %4462 = vmatprep.mubr.f32.mxu0 0.0
        %4463 = vmatmul.mubr.f32.gmra.mrb[0].mxu0 %v4396
        %v4464 = vpop.f32.mrb[0].mxu0
        %v4465 = vadd.f32 0.0, %v4464
        %v4466 = vpop.f32.mrb[0].mxu0
        %4467 = vdwg.mxu0
        %4468 = vrot.lane.b32.xlu0 %v2957, 72
        %v4469 = vpop.permute.xlu0 %4468
        %v4472 = vsel %vm1065, %v4391, 0
        %4474 = vmatprep.subr.mxu0 0.0
        %4475 = vmatpush1.msra.mxu0 %v4469
        %4476 = vmatprep.subr.mxu0 0.0
        %4477 = vmatpush1.msra.mxu0 0.0
        %4478 = vmatprep.subr.mxu0 0.0
        %4479 = vmatpush1.msra.mxu0 0.0
        %4480 = vmatprep.subr.mxu0 0.0
        %4481 = vmatpush1.msra.mxu0 0.0
        %4482 = vmatprep.subr.mxu0 0.0
        %4483 = vmatpush1.msra.mxu0 0.0
        %4484 = vmatprep.subr.mxu0 0.0
        %4485 = vmatpush1.msra.mxu0 0.0
        %4486 = vmatprep.subr.mxu0 0.0
        %4487 = vmatpush1.msra.mxu0 0.0
        %4488 = vmatprep.subr.mxu0 0.0
        %4489 = vmatpush1.msra.mxu0 0.0
        %4490 = vmatprep.subr.mxu0 0.0
        %4491 = vmatpush1.msra.mxu0 0.0
        %4492 = vmatprep.subr.mxu0 0.0
        %4493 = vmatpush1.msra.mxu0 0.0
        %4494 = vmatprep.subr.mxu0 0.0
        %4495 = vmatpush1.msra.mxu0 0.0
        %4496 = vmatprep.subr.mxu0 0.0
        %4497 = vmatpush1.msra.mxu0 0.0
        %4498 = vmatprep.subr.mxu0 0.0
        %4499 = vmatpush1.msra.mxu0 0.0
        %4500 = vmatprep.subr.mxu0 0.0
        %4501 = vmatpush1.msra.mxu0 0.0
        %4502 = vmatprep.subr.mxu0 0.0
        %4503 = vmatpush1.msra.mxu0 0.0
        %4504 = vmatprep.subr.mxu0 0.0
        %4505 = vmatpush1.msra.mxu0 0.0
        %4506 = vmatprep.subr.mxu0 0.0
        %4507 = vmatpush1.msra.mxu0 0.0
        %4508 = vmatprep.subr.mxu0 0.0
        %4509 = vmatpush1.msra.mxu0 0.0
        %4510 = vmatprep.subr.mxu0 0.0
        %4511 = vmatpush1.msra.mxu0 0.0
        %4512 = vmatprep.subr.mxu0 0.0
        %4513 = vmatpush1.msra.mxu0 0.0
        %4514 = vmatprep.subr.mxu0 0.0
        %4515 = vmatpush1.msra.mxu0 0.0
        %4516 = vmatprep.subr.mxu0 0.0
        %4517 = vmatpush1.msra.mxu0 0.0
        %4518 = vmatprep.subr.mxu0 0.0
        %4519 = vmatpush1.msra.mxu0 0.0
        %4520 = vmatprep.subr.mxu0 0.0
        %4521 = vmatpush1.msra.mxu0 0.0
        %4522 = vmatprep.subr.mxu0 0.0
        %4523 = vmatpush1.msra.mxu0 0.0
        %4524 = vmatprep.subr.mxu0 0.0
        %4525 = vmatpush1.msra.mxu0 0.0
        %4526 = vmatprep.subr.mxu0 0.0
        %4527 = vmatpush1.msra.mxu0 0.0
        %4528 = vmatprep.subr.mxu0 0.0
        %4529 = vmatpush1.msra.mxu0 0.0
        %4530 = vmatprep.subr.mxu0 0.0
        %4531 = vmatpush1.msra.mxu0 0.0
        %4532 = vmatprep.subr.mxu0 0.0
        %4533 = vmatpush1.msra.mxu0 0.0
        %4534 = vmatprep.subr.mxu0 0.0
        %4535 = vmatpush1.msra.mxu0 0.0
        %4536 = vmatprep.subr.mxu0 0.0
        %4537 = vmatpush1.msra.mxu0 0.0
        %4538 = vmatprep.mubr.f32.mxu0 0.0
        %4539 = vmatmul.mubr.f32.gmra.mrb[0].mxu0 %v4472
        %v4540 = vpop.f32.mrb[0].mxu0
        %v4541 = vadd.f32 0.0, %v4540
        %v4542 = vpop.f32.mrb[0].mxu0
        %4543 = vdwg.mxu0
        %v4545 = vsel %vm1065, %v4465, 0
        %v4548 = vsel %vm1065, %v4541, 0
        %4550 = vmatprep.subr.mxu0 0.0
        %4551 = vmatpush1.msra.mxu0 %v2963
        %4552 = vmatprep.subr.mxu0 0.0
        %4553 = vmatpush1.msra.mxu0 0.0
        %4554 = vmatprep.subr.mxu0 0.0
        %4555 = vmatpush1.msra.mxu0 0.0
        %4556 = vmatprep.subr.mxu0 0.0
        %4557 = vmatpush1.msra.mxu0 0.0
        %4558 = vmatprep.subr.mxu0 0.0
        %4559 = vmatpush1.msra.mxu0 0.0
        %4560 = vmatprep.subr.mxu0 0.0
        %4561 = vmatpush1.msra.mxu0 0.0
        %4562 = vmatprep.subr.mxu0 0.0
        %4563 = vmatpush1.msra.mxu0 0.0
        %4564 = vmatprep.subr.mxu0 0.0
        %4565 = vmatpush1.msra.mxu0 0.0
        %4566 = vmatprep.subr.mxu0 0.0
        %4567 = vmatpush1.msra.mxu0 0.0
        %4568 = vmatprep.subr.mxu0 0.0
        %4569 = vmatpush1.msra.mxu0 0.0
        %4570 = vmatprep.subr.mxu0 0.0
        %4571 = vmatpush1.msra.mxu0 0.0
        %4572 = vmatprep.subr.mxu0 0.0
        %4573 = vmatpush1.msra.mxu0 0.0
        %4574 = vmatprep.subr.mxu0 0.0
        %4575 = vmatpush1.msra.mxu0 0.0
        %4576 = vmatprep.subr.mxu0 0.0
        %4577 = vmatpush1.msra.mxu0 0.0
        %4578 = vmatprep.subr.mxu0 0.0
        %4579 = vmatpush1.msra.mxu0 0.0
        %4580 = vmatprep.subr.mxu0 0.0
        %4581 = vmatpush1.msra.mxu0 0.0
        %4582 = vmatprep.subr.mxu0 0.0
        %4583 = vmatpush1.msra.mxu0 0.0
        %4584 = vmatprep.subr.mxu0 0.0
        %4585 = vmatpush1.msra.mxu0 0.0
        %4586 = vmatprep.subr.mxu0 0.0
        %4587 = vmatpush1.msra.mxu0 0.0
        %4588 = vmatprep.subr.mxu0 0.0
        %4589 = vmatpush1.msra.mxu0 0.0
        %4590 = vmatprep.subr.mxu0 0.0
        %4591 = vmatpush1.msra.mxu0 0.0
        %4592 = vmatprep.subr.mxu0 0.0
        %4593 = vmatpush1.msra.mxu0 0.0
        %4594 = vmatprep.subr.mxu0 0.0
        %4595 = vmatpush1.msra.mxu0 0.0
        %4596 = vmatprep.subr.mxu0 0.0
        %4597 = vmatpush1.msra.mxu0 0.0
        %4598 = vmatprep.subr.mxu0 0.0
        %4599 = vmatpush1.msra.mxu0 0.0
        %4600 = vmatprep.subr.mxu0 0.0
        %4601 = vmatpush1.msra.mxu0 0.0
        %4602 = vmatprep.subr.mxu0 0.0
        %4603 = vmatpush1.msra.mxu0 0.0
        %4604 = vmatprep.subr.mxu0 0.0
        %4605 = vmatpush1.msra.mxu0 0.0
        %4606 = vmatprep.subr.mxu0 0.0
        %4607 = vmatpush1.msra.mxu0 0.0
        %4608 = vmatprep.subr.mxu0 0.0
        %4609 = vmatpush1.msra.mxu0 0.0
        %4610 = vmatprep.subr.mxu0 0.0
        %4611 = vmatpush1.msra.mxu0 0.0
        %4612 = vmatprep.subr.mxu0 0.0
        %4613 = vmatpush1.msra.mxu0 0.0
        %4614 = vmatprep.mubr.f32.mxu0 0.0
        %4615 = vmatmul.mubr.f32.gmra.mrb[0].mxu0 %v4545
        %v4616 = vpop.f32.mrb[0].mxu0
        %v4617 = vadd.f32 0.0, %v4616
        %v4618 = vpop.f32.mrb[0].mxu0
        %4619 = vmatprep.mubr.f32.mxu0 0.0
        %4620 = vmatmul.mubr.f32.gmra.mrb[0].mxu0 %v4548
        %v4621 = vpop.f32.mrb[0].mxu0
        %v4622 = vadd.f32 0.0, %v4621
        %v4623 = vpop.f32.mrb[0].mxu0
        %4624 = vdwg.mxu0
        %v4625 = vadd.f32 %v4210, %v4617
        %v4626 = vadd.f32 %v4211, %v4622
        %v4627 = vadd.f32 %v2766, %v4625
        %v4628 = vadd.f32 %v2767, %v4626
        %v4629 = vld [vmem:[%s936] sm:$0x1]
        %v4630 = vld [vmem:[%s939] sm:$0x1]
        %v4631 = vsel %vm969, %v4627, 0.0
        %4632 = vadd.xlane.f32.xlu0 %v4631
        %v4633 = vpop.xlane.xlu0 %4632
        %v4634 = vsel %vm969, %v4628, 0.0
        %4635 = vadd.xlane.f32.xlu0 %v4634
        %v4636 = vpop.xlane.xlu0 %4635
        %v4637 = vmul.f32 %v4633, %v2731
        %v4638 = vmul.f32 %v4636, %v2731
        %v4639 = vsub.f32 %v4627, %v4637
        %v4640 = vsub.f32 %v4628, %v4638
        %v4641 = vmul.f32 %v4639, %v4639
        %v4642 = vmul.f32 %v4640, %v4640
        %v4643 = vsel %vm969, %v4641, 0.0
        %4644 = vadd.xlane.f32.xlu0 %v4643
        %v4645 = vpop.xlane.xlu0 %4644
        %v4646 = vsel %vm969, %v4642, 0.0
        %4647 = vadd.xlane.f32.xlu0 %v4646
        %v4648 = vpop.xlane.xlu0 %4647
        %v4649 = vmul.f32 %v4645, %v2731
        %v4650 = vmul.f32 %v4648, %v2731
        %v4651 = vadd.f32 %v4649, 1e-06
        %v4652 = vadd.f32 %v4650, 1e-06
        %v4653 = vrsqrt.pop %v4651
        %v4654 = vrsqrt.pop %v4652
        %v4655 = vmul.f32 %v4639, %v4653
        %v4656 = vmul.f32 %v4640, %v4654
        %v4658 = vlaneseq
        %v4659 = vshrl.u32 %v4658, 7
        %v4660 = vsub.s32 0, %v4659
        %v4661 = vrot.slane %v4629, %v4660
        %v4663 = vmul.f32 %v4655, %v4661
        %v4664 = vmul.f32 %v4656, %v4661
        %v4666 = vlaneseq
        %v4667 = vshrl.u32 %v4666, 7
        %v4668 = vsub.s32 0, %v4667
        %v4669 = vrot.slane %v4630, %v4668
        %v4671 = vadd.f32 %v4663, %v4669
        %v4672 = vadd.f32 %v4664, %v4669
        %v4673 = vld [vmem:[%s777] sm:$0xff]
        %v4674 = vld [vmem:[%s777 + $0x8] sm:$0xff]
        %v4675 = vld [vmem:[%s777 + $0x10] sm:$0xff]
        %v4676 = vld [vmem:[%s777 + $0x18] sm:$0xff]
        %v4677 = vld [vmem:[%s919] sm:$0x1]
        %v4679 = vlaneseq
        %v4680 = vshrl.u32 %v4679, 7
        %v4681 = vsub.s32 0, %v4680
        %v4682 = vrot.slane %v4677, %v4681
        %v4685 = vsel %vm969, %v4671, 0
        %v4688 = vsel %vm969, %v4672, 0
        %4690 = vmatprep.subr.mxu0 0.0
        %4691 = vmatpush1.msra.mxu0 %v4673
        %4692 = vmatprep.subr.mxu0 0.0
        %4693 = vmatpush1.msra.mxu0 %v4674
        %4694 = vmatprep.subr.mxu0 0.0
        %4695 = vmatpush1.msra.mxu0 %v4675
        %4696 = vmatprep.subr.mxu0 0.0
        %4697 = vmatpush1.msra.mxu0 %v4676
        %4698 = vmatprep.subr.mxu0 0.0
        %4699 = vmatpush1.msra.mxu0 0.0
        %4700 = vmatprep.subr.mxu0 0.0
        %4701 = vmatpush1.msra.mxu0 0.0
        %4702 = vmatprep.subr.mxu0 0.0
        %4703 = vmatpush1.msra.mxu0 0.0
        %4704 = vmatprep.subr.mxu0 0.0
        %4705 = vmatpush1.msra.mxu0 0.0
        %4706 = vmatprep.subr.mxu0 0.0
        %4707 = vmatpush1.msra.mxu0 0.0
        %4708 = vmatprep.subr.mxu0 0.0
        %4709 = vmatpush1.msra.mxu0 0.0
        %4710 = vmatprep.subr.mxu0 0.0
        %4711 = vmatpush1.msra.mxu0 0.0
        %4712 = vmatprep.subr.mxu0 0.0
        %4713 = vmatpush1.msra.mxu0 0.0
        %4714 = vmatprep.subr.mxu0 0.0
        %4715 = vmatpush1.msra.mxu0 0.0
        %4716 = vmatprep.subr.mxu0 0.0
        %4717 = vmatpush1.msra.mxu0 0.0
        %4718 = vmatprep.subr.mxu0 0.0
        %4719 = vmatpush1.msra.mxu0 0.0
        %4720 = vmatprep.subr.mxu0 0.0
        %4721 = vmatpush1.msra.mxu0 0.0
        %4722 = vmatprep.subr.mxu0 0.0
        %4723 = vmatpush1.msra.mxu0 0.0
        %4724 = vmatprep.subr.mxu0 0.0
        %4725 = vmatpush1.msra.mxu0 0.0
        %4726 = vmatprep.subr.mxu0 0.0
        %4727 = vmatpush1.msra.mxu0 0.0
        %4728 = vmatprep.subr.mxu0 0.0
        %4729 = vmatpush1.msra.mxu0 0.0
        %4730 = vmatprep.subr.mxu0 0.0
        %4731 = vmatpush1.msra.mxu0 0.0
        %4732 = vmatprep.subr.mxu0 0.0
        %4733 = vmatpush1.msra.mxu0 0.0
        %4734 = vmatprep.subr.mxu0 0.0
        %4735 = vmatpush1.msra.mxu0 0.0
        %4736 = vmatprep.subr.mxu0 0.0
        %4737 = vmatpush1.msra.mxu0 0.0
        %4738 = vmatprep.subr.mxu0 0.0
        %4739 = vmatpush1.msra.mxu0 0.0
        %4740 = vmatprep.subr.mxu0 0.0
        %4741 = vmatpush1.msra.mxu0 0.0
        %4742 = vmatprep.subr.mxu0 0.0
        %4743 = vmatpush1.msra.mxu0 0.0
        %4744 = vmatprep.subr.mxu0 0.0
        %4745 = vmatpush1.msra.mxu0 0.0
        %4746 = vmatprep.subr.mxu0 0.0
        %4747 = vmatpush1.msra.mxu0 0.0
        %4748 = vmatprep.subr.mxu0 0.0
        %4749 = vmatpush1.msra.mxu0 0.0
        %4750 = vmatprep.subr.mxu0 0.0
        %4751 = vmatpush1.msra.mxu0 0.0
        %4752 = vmatprep.subr.mxu0 0.0
        %4753 = vmatpush1.msra.mxu0 0.0
        %4754 = vmatprep.mubr.f32.mxu0 0.0
        %4755 = vmatmul.mubr.f32.gmra.mrb[0].mxu0 %v4685
        %v4756 = vpop.f32.mrb[0].mxu0
        %v4757 = vadd.f32 %v4682, %v4756
        %v4758 = vpop.f32.mrb[0].mxu0
        %4759 = vmatprep.mubr.f32.mxu0 0.0
        %4760 = vmatmul.mubr.f32.gmra.mrb[0].mxu0 %v4688
        %v4761 = vpop.f32.mrb[0].mxu0
        %v4762 = vadd.f32 %v4682, %v4761
        %v4763 = vpop.f32.mrb[0].mxu0
        %4764 = vdwg.mxu0
        %v4765 = vmax.f32 %v4757, 0.0
        %v4766 = vmax.f32 %v4762, 0.0
        %v4767 = vld [vmem:[%s924] sm:$0xff]
        %v4768 = vld [vmem:[%s924 + $0x8] sm:$0xff]
        %v4769 = vld [vmem:[%s924 + $0x10] sm:$0xff]
        %v4770 = vld [vmem:[%s924 + $0x18] sm:$0xff]
        %v4771 = vld [vmem:[%s924 + $0x20] sm:$0xff]
        %v4772 = vld [vmem:[%s924 + $0x28] sm:$0xff]
        %v4773 = vld [vmem:[%s924 + $0x30] sm:$0xff]
        %v4774 = vld [vmem:[%s924 + $0x38] sm:$0xff]
        %v4775 = vld [vmem:[%s927] sm:$0x1]
        %v4777 = vlaneseq
        %v4778 = vshrl.u32 %v4777, 7
        %v4779 = vsub.s32 0, %v4778
        %v4780 = vrot.slane %v4775, %v4779
        %vm4782 = vcmask 523264
        %v4784 = vsel %vm4782, %v4765, 0
        %v4787 = vsel %vm4782, %v4766, 0
        %4789 = vmatprep.subr.mxu0 0.0
        %4790 = vmatpush1.msra.mxu0 %v4767
        %4791 = vmatprep.subr.mxu0 0.0
        %4792 = vmatpush1.msra.mxu0 %v4768
        %4793 = vmatprep.subr.mxu0 0.0
        %4794 = vmatpush1.msra.mxu0 %v4769
        %4795 = vmatprep.subr.mxu0 0.0
        %4796 = vmatpush1.msra.mxu0 %v4770
        %4797 = vmatprep.subr.mxu0 0.0
        %4798 = vmatpush1.msra.mxu0 %v4771
        %4799 = vmatprep.subr.mxu0 0.0
        %4800 = vmatpush1.msra.mxu0 %v4772
        %4801 = vmatprep.subr.mxu0 0.0
        %4802 = vmatpush1.msra.mxu0 %v4773
        %4803 = vmatprep.subr.mxu0 0.0
        %4804 = vmatpush1.msra.mxu0 %v4774
        %4805 = vmatprep.subr.mxu0 0.0
        %4806 = vmatpush1.msra.mxu0 0.0
        %4807 = vmatprep.subr.mxu0 0.0
        %4808 = vmatpush1.msra.mxu0 0.0
        %4809 = vmatprep.subr.mxu0 0.0
        %4810 = vmatpush1.msra.mxu0 0.0
        %4811 = vmatprep.subr.mxu0 0.0
        %4812 = vmatpush1.msra.mxu0 0.0
        %4813 = vmatprep.subr.mxu0 0.0
        %4814 = vmatpush1.msra.mxu0 0.0
        %4815 = vmatprep.subr.mxu0 0.0
        %4816 = vmatpush1.msra.mxu0 0.0
        %4817 = vmatprep.subr.mxu0 0.0
        %4818 = vmatpush1.msra.mxu0 0.0
        %4819 = vmatprep.subr.mxu0 0.0
        %4820 = vmatpush1.msra.mxu0 0.0
        %4821 = vmatprep.subr.mxu0 0.0
        %4822 = vmatpush1.msra.mxu0 0.0
        %4823 = vmatprep.subr.mxu0 0.0
        %4824 = vmatpush1.msra.mxu0 0.0
        %4825 = vmatprep.subr.mxu0 0.0
        %4826 = vmatpush1.msra.mxu0 0.0
        %4827 = vmatprep.subr.mxu0 0.0
        %4828 = vmatpush1.msra.mxu0 0.0
        %4829 = vmatprep.subr.mxu0 0.0
        %4830 = vmatpush1.msra.mxu0 0.0
        %4831 = vmatprep.subr.mxu0 0.0
        %4832 = vmatpush1.msra.mxu0 0.0
        %4833 = vmatprep.subr.mxu0 0.0
        %4834 = vmatpush1.msra.mxu0 0.0
        %4835 = vmatprep.subr.mxu0 0.0
        %4836 = vmatpush1.msra.mxu0 0.0
        %4837 = vmatprep.subr.mxu0 0.0
        %4838 = vmatpush1.msra.mxu0 0.0
        %4839 = vmatprep.subr.mxu0 0.0
        %4840 = vmatpush1.msra.mxu0 0.0
        %4841 = vmatprep.subr.mxu0 0.0
        %4842 = vmatpush1.msra.mxu0 0.0
        %4843 = vmatprep.subr.mxu0 0.0
        %4844 = vmatpush1.msra.mxu0 0.0
        %4845 = vmatprep.subr.mxu0 0.0
        %4846 = vmatpush1.msra.mxu0 0.0
        %4847 = vmatprep.subr.mxu0 0.0
        %4848 = vmatpush1.msra.mxu0 0.0
        %4849 = vmatprep.subr.mxu0 0.0
        %4850 = vmatpush1.msra.mxu0 0.0
        %4851 = vmatprep.subr.mxu0 0.0
        %4852 = vmatpush1.msra.mxu0 0.0
        %4853 = vmatprep.mubr.f32.mxu0 0.0
        %4854 = vmatmul.mubr.f32.gmra.mrb[0].mxu0 %v4784
        %v4855 = vpop.f32.mrb[0].mxu0
        %v4856 = vadd.f32 %v4780, %v4855
        %v4857 = vpop.f32.mrb[0].mxu0
        %4858 = vmatprep.mubr.f32.mxu0 0.0
        %4859 = vmatmul.mubr.f32.gmra.mrb[0].mxu0 %v4787
        %v4860 = vpop.f32.mrb[0].mxu0
        %v4861 = vadd.f32 %v4780, %v4860
        %v4862 = vpop.f32.mrb[0].mxu0
        %4863 = vdwg.mxu0
        %v4864 = vadd.f32 %v4671, %v4856
        %v4865 = vadd.f32 %v4672, %v4861
        %v4866 = vld [vmem:[%s942] sm:$0x1]
        %v4867 = vld [vmem:[%s945] sm:$0x1]
        %v4868 = vsel %vm969, %v4864, 0.0
        %4869 = vadd.xlane.f32.xlu0 %v4868
        %v4870 = vpop.xlane.xlu0 %4869
        %v4871 = vsel %vm969, %v4865, 0.0
        %4872 = vadd.xlane.f32.xlu0 %v4871
        %v4873 = vpop.xlane.xlu0 %4872
        %v4874 = vmul.f32 %v4870, %v2731
        %v4875 = vmul.f32 %v4873, %v2731
        %v4876 = vsub.f32 %v4864, %v4874
        %v4877 = vsub.f32 %v4865, %v4875
        %v4878 = vmul.f32 %v4876, %v4876
        %v4879 = vmul.f32 %v4877, %v4877
        %v4880 = vsel %vm969, %v4878, 0.0
        %4881 = vadd.xlane.f32.xlu0 %v4880
        %v4882 = vpop.xlane.xlu0 %4881
        %v4883 = vsel %vm969, %v4879, 0.0
        %4884 = vadd.xlane.f32.xlu0 %v4883
        %v4885 = vpop.xlane.xlu0 %4884
        %v4886 = vmul.f32 %v4882, %v2731
        %v4887 = vmul.f32 %v4885, %v2731
        %v4888 = vadd.f32 %v4886, 1e-06
        %v4889 = vadd.f32 %v4887, 1e-06
        %v4890 = vrsqrt.pop %v4888
        %v4891 = vrsqrt.pop %v4889
        %v4892 = vmul.f32 %v4876, %v4890
        %v4893 = vmul.f32 %v4877, %v4891
        %v4895 = vlaneseq
        %v4896 = vshrl.u32 %v4895, 7
        %v4897 = vsub.s32 0, %v4896
        %v4898 = vrot.slane %v4866, %v4897
        %v4900 = vmul.f32 %v4892, %v4898
        %v4901 = vmul.f32 %v4893, %v4898
        %v4903 = vlaneseq
        %v4904 = vshrl.u32 %v4903, 7
        %v4905 = vsub.s32 0, %v4904
        %v4906 = vrot.slane %v4867, %v4905
        %v4908 = vadd.f32 %v4900, %v4906
        %v4909 = vadd.f32 %v4901, %v4906
        %4910 = vst.msk [vmem:[#allocation2] sm:$0xff] %vm969, %v4908
        %4911 = vst.msk [vmem:[#allocation2 + $0x8] sm:$0xff] %vm969, %v4909
        %p4912 = scmp.eq.s32.totalorder %s34, 1
        // Predicated region
        $region121: #{tpu_custom_call.1} parent=99 // pred_check
          %p4913 = pneg %p4912
        $region122: #{tpu_custom_call.1} parent=99 // pred_check_branch
          %4915 = sbr.rel (%p4913) target = $region124
        $region123: #{tpu_custom_call.1} parent=99 // pred_region
          %4916 = vst.msk [vmem:[#allocation10] sm:$0xff] %vm969, %v4908
          %4917 = vst.msk [vmem:[#allocation10 + $0x8] sm:$0xff] %vm969, %v4909
        $region124: #{tpu_custom_call.1} parent=99 // pred_fallthru
          _
        // Predicated region
        $region125: #{tpu_custom_call.1} parent=99 // pred_check
          %p4918 = pneg %p557
        $region126: #{tpu_custom_call.1} parent=99 // pred_check_branch
          %4920 = sbr.rel (%p4918) target = $region128
        $region127: #{tpu_custom_call.1} parent=99 // pred_region
          %s4922 = ssub.s32 256, 256
          %4923 = vsyncadd [#allocation5], %s4922
          %s4924 = sshll.u32 [#allocation10], 4
          %s4925 = int_to_ptr.vmem [resolvable:$true] %s4924
          %4930 = dma.vmem_to_hbm [thread:$0]  %s4925, 256, %s20, [#allocation5], 128, 128, 8
        $region128: #{tpu_custom_call.1} parent=99 // pred_fallthru
          _
        // Predicated region
        $region129: #{tpu_custom_call.1} parent=99 // pred_check
          %p4931 = pneg %p557
        $region130: #{tpu_custom_call.1} parent=99 // pred_check_branch
          %4933 = sbr.rel (%p4931) target = $region132
        $region131: #{tpu_custom_call.1} parent=99 // pred_region
          %4934 = dma.done [#allocation5], 256
        $region132: #{tpu_custom_call.1} parent=99 // pred_fallthru
          _
      $region100: #{tpu_custom_call.1} parent=5 // pred_fallthru
        _
      %p4935 = scmp.le.s32.totalorder 2, %s29
      // Predicated region
      $region133: #{tpu_custom_call.1} parent=5 // pred_check
        %p4936 = pneg %p4935
      $region134: #{tpu_custom_call.1} parent=5 // pred_check_branch
        %4938 = sbr.rel (%p4936) target = $region136
      $region135: #{tpu_custom_call.1} parent=5 // pred_region
        %s4939 = ssub.s32 %s29, 2
      $region136: #{tpu_custom_call.1} parent=5 // pred_fallthru
        _
    $region6: #{tpu_custom_call.1} parent=1 // loop_footer
      %s33 = sadd.s32 1, %s29
    $region7: #{tpu_custom_call.1} parent=1 // loop_footer_branch
      %28 = sbr.rel target = $region3
    $region8: #{tpu_custom_call.1} parent=1 // loop_exit
      _
    %4940 = vsyncpa [#allocation4], 1
    %s4941 = scalar_lea.sflag [#allocation4], 1
    %4942 = vsyncpa %s4941, 1
    %4943 = vsyncpa [#allocation7], 1
    %4944 = vsyncpa [#allocation5], 1
    %s4945 = scalar_lea.sflag [#allocation5], 1
    %4946 = vsyncpa %s4945, 1

</llo_original>
